<compile_context>
chip_gen: v7x
topology: tpu7x:2x2x1
jax: 0.10.0
libtpu: 0.0.40
codegen_flags: <defaults>
</compile_context>

<pallas_src>
import math
import functools

import jax
import jax.numpy as jnp
import numpy as np
from jax import lax
from jax.experimental import pallas as pl
from jax.experimental.pallas import tpu as pltpu


# ----------------------------- shared helpers -----------------------------
def _round_up(n, m):
    return ((n + m - 1) // m) * m


def _gelu_tanh(x):
    # tanh-form GELU (rides the EUP); |err| vs exact erf GELU ~1e-3.
    c = math.sqrt(2.0 / math.pi)
    return 0.5 * x * (1.0 + jnp.tanh(c * (x + 0.044715 * x * x * x)))


def _layer_norm_padded(x, g, b, d_true, eps=1e-5):
    # Feature lanes >= d_true are exact zeros (weights/biases/gamma/beta were
    # zero-padded), so sums over the padded width equal sums over the true
    # width; divide by d_true.  gamma/beta padding sends padded lanes back
    # to exactly 0 on the output.
    inv_d = 1.0 / float(d_true)
    mu = jnp.sum(x, axis=-1, keepdims=True) * inv_d
    ex2 = jnp.sum(x * x, axis=-1, keepdims=True) * inv_d
    var = ex2 - mu * mu
    return (x - mu) * lax.rsqrt(var + eps) * g + b


# ----------------------------------- kernel ------------------------------------
def tsti_encoder_kernel(n_layers, n_heads, d_model, tb, L,
                        x_ref, pos_ref, wp_w_ref, wp_b_ref,
                        wq_ref, bq_ref, wk_ref, bk_ref, wv_ref, bv_ref,
                        wo_ref, bo_ref, ln1_g_ref, ln1_b_ref,
                        ff1_w_ref, ff1_b_ref, ff2_w_ref, ff2_b_ref,
                        ln2_g_ref, ln2_b_ref, o_ref, prev_ref):
    Dp = o_ref.shape[-1]
    H = n_heads
    dk = d_model // H
    scale = float(dk) ** -0.5                    # (d_model // n_heads) ** -0.5
    M = tb * L
    lyr = pl.program_id(1)                       # layer index (innermost grid axis)

    # Layer 0: patch embedding + positional encoding written into the resident
    # output block (which doubles as the cross-layer hidden-state carry), and
    # an explicit reset of the cumulative attention-score carry.
    @pl.when(lyr == 0)
    def _():
        xb = x_ref[...].astype(jnp.bfloat16)
        h0 = jnp.dot(xb, wp_w_ref[...], preferred_element_type=jnp.float32)
        o_ref[...] = h0 + wp_b_ref[...] + pos_ref[...]
        prev_ref[...] = jnp.zeros_like(prev_ref)   # invariant: zero before layer 0 reads

    h = o_ref[...]                                # (M, Dp) f32 hidden-state carry
    hb = h.astype(jnp.bfloat16)

    # ---------------- multi-head attention (head-pre-split weights) ----------------
    out_acc = jnp.zeros((M, Dp), jnp.float32)
    for hh in range(H):                           # static unroll over heads
        qh = (jnp.dot(hb, wq_ref[hh], preferred_element_type=jnp.float32)
              + bq_ref[hh]).reshape(tb, L, dk)
        kh = (jnp.dot(hb, wk_ref[hh], preferred_element_type=jnp.float32)
              + bk_ref[hh]).reshape(tb, L, dk)
        vh = (jnp.dot(hb, wv_ref[hh], preferred_element_type=jnp.float32)
              + bv_ref[hh]).reshape(tb, L, dk)

        s = jnp.einsum('bld,bmd->blm',
                       qh.astype(jnp.bfloat16), kh.astype(jnp.bfloat16),
                       preferred_element_type=jnp.float32) * scale     # (tb, L, L)
        s = s + prev_ref[hh]                      # cumulative carry (zeros at layer 0)

        @pl.when(lyr + 1 < n_layers)              # last layer's carry is never read
        def _():
            prev_ref[hh] = s

        m = jnp.max(s, axis=-1, keepdims=True)
        e = jnp.exp(s - m)
        a = e * pl.reciprocal(jnp.sum(e, axis=-1, keepdims=True), approx=True)

        oh = jnp.einsum('blm,bmd->bld',
                        a.astype(jnp.bfloat16), vh.astype(jnp.bfloat16),
                        preferred_element_type=jnp.float32)            # (tb, L, dk)
        # Fold the head directly into the output projection (no lane concat).
        out_acc = out_acc + jnp.dot(oh.reshape(M, dk).astype(jnp.bfloat16),
                                    wo_ref[hh], preferred_element_type=jnp.float32)

    out = out_acc + bo_ref[...]
    # NOTE: the reference module has NO residual after attention.
    h1 = _layer_norm_padded(out, ln1_g_ref[...], ln1_b_ref[...], d_model)

    # --------------------------------- feed-forward ---------------------------------
    ff = jnp.dot(h1.astype(jnp.bfloat16), ff1_w_ref[...],
                 preferred_element_type=jnp.float32) + ff1_b_ref[...]
    ff = _gelu_tanh(ff)
    ff = jnp.dot(ff.astype(jnp.bfloat16), ff2_w_ref[...],
                 preferred_element_type=jnp.float32) + ff2_b_ref[...]
    o_ref[...] = _layer_norm_padded(h1 + ff, ln2_g_ref[...], ln2_b_ref[...], d_model)


# ----------------------------------- wrapper ------------------------------------
def tsti_encoder(x, params, n_heads, batch_tile=32):
    bs, n_vars, L, P = x.shape
    D = params['wp_w'].shape[1]
    F = params['ff1_w'].shape[-1]
    n_layers = params['wq'].shape[0]
    H = n_heads
    dk = D // H
    Bp = bs * n_vars

    # lane-dense (128-multiple) feature dims
    Dp = _round_up(D, 128)
    Fp = _round_up(F, 128)
    Pp = _round_up(P, 128)

    # Batch tile: >= 2 grid steps whenever possible (v7x megacore), keep
    # M = tb*L >= 256 when the problem is large enough (v6e MXU rows), and
    # keep tb*L sublane(8)-aligned.
    tb = max(1, min(batch_tile, -(-Bp // 2)))
    min_tb_256 = -(-256 // L)
    if Bp >= 2 * min_tb_256:
        tb = max(tb, min_tb_256)
    while (tb * L) % 8:
        tb += 1
    nsteps = -(-Bp // tb)
    Bp_pad = nsteps * tb
    M = tb * L

    # ------------------------------ input prep ------------------------------
    xf = x.astype(jnp.float32).reshape(Bp, L, P)
    xf = jnp.pad(xf, ((0, Bp_pad - Bp), (0, 0), (0, Pp - P)))
    x2d = xf.reshape(Bp_pad * L, Pp)              # flat 2-D row slab

    def pad2(a, r, c):                            # zero-pad last two dims to (r, c)
        pads = [(0, 0)] * (a.ndim - 2) + [(0, r - a.shape[-2]), (0, c - a.shape[-1])]
        return jnp.pad(a, pads)

    # positional encoding pre-tiled across the batch tile -> plain add in-kernel
    pos_t = jnp.tile(pad2(params['pos'], L, Dp), (tb, 1))            # (M, Dp) f32

    bf16 = jnp.bfloat16
    wp_w = pad2(params['wp_w'], Pp, Dp).astype(bf16)
    wp_b = pad2(params['wp_b'], 1, Dp)

    def split_qkv_w(w):   # (nl, D, D) -> (nl, H, Dp, dk) bf16 (head-major columns)
        w = w.reshape(n_layers, D, H, dk).transpose(0, 2, 1, 3)
        return pad2(w, Dp, dk).astype(bf16)

    def split_qkv_b(b):   # (nl, 1, D) -> (nl, H, 1, dk) f32
        return b.reshape(n_layers, 1, H, dk).transpose(0, 2, 1, 3)

    wq_s, bq_s = split_qkv_w(params['wq']), split_qkv_b(params['bq'])
    wk_s, bk_s = split_qkv_w(params['wk']), split_qkv_b(params['bk'])
    wv_s, bv_s = split_qkv_w(params['wv']), split_qkv_b(params['bv'])

    # to_out: (nl, H*dk, D) -> per-head (nl, H, dk, Dp) bf16
    wo_s = pad2(params['wo'].reshape(n_layers, H, dk, D), dk, Dp).astype(bf16)
    bo_p = pad2(params['bo'], 1, Dp)

    ln1_g = pad2(params['ln1_g'], 1, Dp)
    ln1_b = pad2(params['ln1_b'], 1, Dp)
    ff1_w = pad2(params['ff1_w'], Dp, Fp).astype(bf16)
    ff1_b = pad2(params['ff1_b'], 1, Fp)
    ff2_w = pad2(params['ff2_w'], Fp, Dp).astype(bf16)
    ff2_b = pad2(params['ff2_b'], 1, Dp)
    ln2_g = pad2(params['ln2_g'], 1, Dp)
    ln2_b = pad2(params['ln2_b'], 1, Dp)

    # ------------------------------ BlockSpecs ------------------------------
    def const_spec(shape):
        z = (0,) * len(shape)
        return pl.BlockSpec(shape, lambda b, l, z=z: z)

    def layer_spec(full_shape):                   # stream one layer's block per step
        tail = tuple(full_shape[1:])
        z = (0,) * len(tail)
        return pl.BlockSpec((None,) + tail, lambda b, l, z=z: (l,) + z)

    in_specs = [
        pl.BlockSpec((M, Pp), lambda b, l: (b, 0)),     # x rows for this batch tile
        const_spec((M, Dp)),                            # tiled positional encoding
        const_spec((Pp, Dp)), const_spec((1, Dp)),      # W_P
        layer_spec(wq_s.shape), layer_spec(bq_s.shape),
        layer_spec(wk_s.shape), layer_spec(bk_s.shape),
        layer_spec(wv_s.shape), layer_spec(bv_s.shape),
        layer_spec(wo_s.shape), layer_spec(bo_p.shape),
        layer_spec(ln1_g.shape), layer_spec(ln1_b.shape),
        layer_spec(ff1_w.shape), layer_spec(ff1_b.shape),
        layer_spec(ff2_w.shape), layer_spec(ff2_b.shape),
        layer_spec(ln2_g.shape), layer_spec(ln2_b.shape),
    ]
    out_spec = pl.BlockSpec((M, Dp), lambda b, l: (b, 0))   # resident across layer axis

    # vmem limit from the actual per-step block footprint (double-buffered) + margin
    def bb(shape, dt):
        return int(np.prod(shape)) * jnp.dtype(dt).itemsize
    blk = (bb((M, Pp), jnp.float32) + bb((M, Dp), jnp.float32)
           + bb((Pp, Dp), bf16) + bb((1, Dp), jnp.float32)
           + 3 * (bb((H, Dp, dk), bf16) + bb((H, 1, dk), jnp.float32))
           + bb((H, dk, Dp), bf16)
           + bb((Dp, Fp), bf16) + bb((Fp, Dp), bf16) + bb((1, Fp), jnp.float32)
           + 8 * bb((1, Dp), jnp.float32)
           + bb((M, Dp), jnp.float32))
    scratch_bytes = bb((H, tb, L, L), jnp.float32)
    vmem_est = 2 * blk + scratch_bytes + (8 << 20)
    vmem_limit = int(min(64 << 20, max(32 << 20, vmem_est)))

    kernel = functools.partial(tsti_encoder_kernel, n_layers, n_heads, D, tb, L)
    out2d = pl.pallas_call(
        kernel,
        out_shape=jax.ShapeDtypeStruct((Bp_pad * L, Dp), jnp.float32),
        grid_spec=pltpu.PrefetchScalarGridSpec(
            num_scalar_prefetch=0,
            grid=(nsteps, n_layers),              # layers innermost ("arbitrary")
            in_specs=in_specs,
            out_specs=out_spec,
            scratch_shapes=[pltpu.VMEM((H, tb, L, L), jnp.float32)],   # 'prev' carry
        ),
        compiler_params=pltpu.CompilerParams(
            dimension_semantics=("parallel", "arbitrary"),
            vmem_limit_bytes=vmem_limit),
    )(x2d, pos_t, wp_w, wp_b,
      wq_s, bq_s, wk_s, bk_s, wv_s, bv_s, wo_s, bo_p,
      ln1_g, ln1_b, ff1_w, ff1_b, ff2_w, ff2_b, ln2_g, ln2_b)

    out = out2d.reshape(Bp_pad, L, Dp)[:Bp, :, :D]      # drop batch + lane padding
    return out.reshape(bs, n_vars, L, D)


# ------------------------------ params / reference ------------------------------
def positional_encoding(q_len, d_model):
    position = jnp.arange(q_len, dtype=jnp.float32)[:, None]
    div = jnp.exp(jnp.arange(0, d_model, 2, dtype=jnp.float32)
                  * -(math.log(10000.0) / d_model))
    pe = jnp.zeros((q_len, d_model), jnp.float32)
    pe = pe.at[:, 0::2].set(jnp.sin(position * div))
    pe = pe.at[:, 1::2].set(jnp.cos(position * div))
    return pe


def init_params(key, patch_num, patch_len, d_model, d_ff, n_layers):
    def lin(k, fin, fout, stack=None):
        kw, kb = jax.random.split(k)
        bound = 1.0 / math.sqrt(fin)
        w_shape = (fin, fout) if stack is None else (stack, fin, fout)
        b_shape = (1, fout) if stack is None else (stack, 1, fout)
        w = jax.random.uniform(kw, w_shape, jnp.float32, -bound, bound)
        b = jax.random.uniform(kb, b_shape, jnp.float32, -bound, bound)
        return w, b

    ks = jax.random.split(key, 7)
    wp_w, wp_b = lin(ks[0], patch_len, d_model)
    wq, bq = lin(ks[1], d_model, d_model, n_layers)
    wk, bk = lin(ks[2], d_model, d_model, n_layers)
    wv, bv = lin(ks[3], d_model, d_model, n_layers)
    wo, bo = lin(ks[4], d_model, d_model, n_layers)
    ff1_w, ff1_b = lin(ks[5], d_model, d_ff, n_layers)
    ff2_w, ff2_b = lin(ks[6], d_ff, d_model, n_layers)
    return dict(
        pos=positional_encoding(patch_num, d_model),
        wp_w=wp_w, wp_b=wp_b,
        wq=wq, bq=bq, wk=wk, bk=bk, wv=wv, bv=bv, wo=wo, bo=bo,
        ln1_g=jnp.ones((n_layers, 1, d_model), jnp.float32),
        ln1_b=jnp.zeros((n_layers, 1, d_model), jnp.float32),
        ff1_w=ff1_w, ff1_b=ff1_b, ff2_w=ff2_w, ff2_b=ff2_b,
        ln2_g=jnp.ones((n_layers, 1, d_model), jnp.float32),
        ln2_b=jnp.zeros((n_layers, 1, d_model), jnp.float32),
    )


def _layer_norm_ref(x, g, b, eps=1e-5):
    mu = jnp.mean(x, axis=-1, keepdims=True)
    var = jnp.mean((x - mu) ** 2, axis=-1, keepdims=True)
    return (x - mu) * lax.rsqrt(var + eps) * g + b


def _gelu_exact(x):
    return 0.5 * x * (1.0 + lax.erf(x / math.sqrt(2.0)))


def tsti_encoder_ref(x, params, n_heads):
    # pure-JAX f32 reference mirroring the PyTorch forward exactly
    bs, n_vars, L, P = x.shape
    D = params['wp_w'].shape[1]
    n_layers = params['wq'].shape[0]
    dk = D // n_heads
    scale = dk ** -0.5

    h = jnp.einsum('bvlp,pd->bvld', x, params['wp_w']) + params['wp_b']
    h = h.reshape(bs * n_vars, L, D) + params['pos']
    B = h.shape[0]

    prev = None
    for l in range(n_layers):
        q = h @ params['wq'][l] + params['bq'][l]
        k = h @ params['wk'][l] + params['bk'][l]
        v = h @ params['wv'][l] + params['bv'][l]
        q = q.reshape(B, L, n_heads, dk).transpose(0, 2, 1, 3)
        k = k.reshape(B, L, n_heads, dk).transpose(0, 2, 1, 3)
        v = v.reshape(B, L, n_heads, dk).transpose(0, 2, 1, 3)
        s = jnp.einsum('bhld,bhmd->bhlm', q, k) * scale
        if prev is not None:
            s = s + prev
        prev = s
        a = jax.nn.softmax(s, axis=-1)
        o = jnp.einsum('bhlm,bhmd->bhld', a, v).transpose(0, 2, 1, 3).reshape(B, L, D)
        o = o @ params['wo'][l] + params['bo'][l]
        h = _layer_norm_ref(o, params['ln1_g'][l], params['ln1_b'][l])
        ff = _gelu_exact(h @ params['ff1_w'][l] + params['ff1_b'][l])
        ff = ff @ params['ff2_w'][l] + params['ff2_b'][l]
        h = _layer_norm_ref(h + ff, params['ln2_g'][l], params['ln2_b'][l])
    return h.reshape(bs, n_vars, L, D)


if __name__ == "__main__":
    bs, n_vars = 2, 3
    patch_num, patch_len = 8, 16
    d_model, n_heads, n_layers, d_ff = 32, 4, 3, 64

    key = jax.random.PRNGKey(0)
    kx, kp = jax.random.split(key)
    x = jax.random.normal(kx, (bs, n_vars, patch_num, patch_len), jnp.float32)
    params = init_params(kp, patch_num, patch_len, d_model, d_ff, n_layers)

    out = tsti_encoder(x, params, n_heads)
    out = jax.block_until_ready(out)

    ref = tsti_encoder_ref(x, params, n_heads)
    assert out.shape == (bs, n_vars, patch_num, d_model)
    # Tolerance reflects bf16 MXU inputs, tanh-form GELU and approx reciprocal
    # in the kernel vs. the exact-f32 reference.
    np.testing.assert_allclose(np.asarray(out), np.asarray(ref), rtol=3e-2, atol=3e-2)

    print("KERNEL_OK")
</pallas_src>

<mosaic_0001>
module attributes {stable_mosaic.version = 11 : i64} {
  func.func @tsti_encoder_kernel(%arg0: i32, %arg1: i32, %arg2: memref<24x128xf32, #tpu.memory_space<vmem>>, %arg3: memref<24x128xf32, #tpu.memory_space<vmem>>, %arg4: memref<128x128xbf16, #tpu.memory_space<vmem>>, %arg5: memref<1x128xf32, #tpu.memory_space<vmem>>, %arg6: memref<1x4x128x8xbf16, #tpu.memory_space<vmem>>, %arg7: memref<1x4x1x8xf32, #tpu.memory_space<vmem>>, %arg8: memref<1x4x128x8xbf16, #tpu.memory_space<vmem>>, %arg9: memref<1x4x1x8xf32, #tpu.memory_space<vmem>>, %arg10: memref<1x4x128x8xbf16, #tpu.memory_space<vmem>>, %arg11: memref<1x4x1x8xf32, #tpu.memory_space<vmem>>, %arg12: memref<1x4x8x128xbf16, #tpu.memory_space<vmem>>, %arg13: memref<1x1x128xf32, #tpu.memory_space<vmem>>, %arg14: memref<1x1x128xf32, #tpu.memory_space<vmem>>, %arg15: memref<1x1x128xf32, #tpu.memory_space<vmem>>, %arg16: memref<1x128x128xbf16, #tpu.memory_space<vmem>>, %arg17: memref<1x1x128xf32, #tpu.memory_space<vmem>>, %arg18: memref<1x128x128xbf16, #tpu.memory_space<vmem>>, %arg19: memref<1x1x128xf32, #tpu.memory_space<vmem>>, %arg20: memref<1x1x128xf32, #tpu.memory_space<vmem>>, %arg21: memref<1x1x128xf32, #tpu.memory_space<vmem>>, %arg22: memref<24x128xf32, #tpu.memory_space<vmem>>, %arg23: memref<4x3x8x8xf32, #tpu.memory_space<vmem>>) attributes {dimension_semantics = [#tpu.dimension_semantics<parallel>, #tpu.dimension_semantics<arbitrary>], iteration_bounds = array<i64: 2, 3>, scalar_prefetch = 0 : i64, scratch_operands = 1 : i64, tpu.core_type = #tpu.core_type<tc>, window_params = [{transform_indices = @transform_0, window_bounds = array<i64: 24, 128>}, {pipeline_mode = #tpu.pipeline_mode<synchronous>, transform_indices = @transform_1, window_bounds = array<i64: 24, 128>}, {pipeline_mode = #tpu.pipeline_mode<synchronous>, transform_indices = @transform_2, window_bounds = array<i64: 128, 128>}, {pipeline_mode = #tpu.pipeline_mode<synchronous>, transform_indices = @transform_3, window_bounds = array<i64: 1, 128>}, {transform_indices = @transform_4, window_bounds = array<i64: 1, 4, 128, 8>}, {transform_indices = @transform_5, window_bounds = array<i64: 1, 4, 1, 8>}, {transform_indices = @transform_6, window_bounds = array<i64: 1, 4, 128, 8>}, {transform_indices = @transform_7, window_bounds = array<i64: 1, 4, 1, 8>}, {transform_indices = @transform_8, window_bounds = array<i64: 1, 4, 128, 8>}, {transform_indices = @transform_9, window_bounds = array<i64: 1, 4, 1, 8>}, {transform_indices = @transform_10, window_bounds = array<i64: 1, 4, 8, 128>}, {transform_indices = @transform_11, window_bounds = array<i64: 1, 1, 128>}, {transform_indices = @transform_12, window_bounds = array<i64: 1, 1, 128>}, {transform_indices = @transform_13, window_bounds = array<i64: 1, 1, 128>}, {transform_indices = @transform_14, window_bounds = array<i64: 1, 128, 128>}, {transform_indices = @transform_15, window_bounds = array<i64: 1, 1, 128>}, {transform_indices = @transform_16, window_bounds = array<i64: 1, 128, 128>}, {transform_indices = @transform_17, window_bounds = array<i64: 1, 1, 128>}, {transform_indices = @transform_18, window_bounds = array<i64: 1, 1, 128>}, {transform_indices = @transform_19, window_bounds = array<i64: 1, 1, 128>}, {transform_indices = @transform_20, window_bounds = array<i64: 24, 128>}]} {
    %c0_i32 = arith.constant 0 : i32
    %0 = arith.cmpi eq, %arg1, %c0_i32 : i32
    %1 = arith.extui %0 : i1 to i32
    %c0_i32_0 = arith.constant 0 : i32
    %2 = arith.cmpi ne, %1, %c0_i32_0 : i32
    scf.if %2 {
      %c0_218 = arith.constant 0 : index
      %c0_219 = arith.constant 0 : index
      %313 = vector.load %arg2[%c0_218, %c0_219] : memref<24x128xf32, #tpu.memory_space<vmem>>, vector<24x128xf32>
      %314 = arith.truncf %313 : vector<24x128xf32> to vector<24x128xbf16>
      %c0_220 = arith.constant 0 : index
      %c0_221 = arith.constant 0 : index
      %315 = vector.load %arg4[%c0_220, %c0_221] : memref<128x128xbf16, #tpu.memory_space<vmem>>, vector<128x128xbf16>
      %cst_222 = arith.constant dense<0.000000e+00> : vector<24x128xf32>
      %316 = tpu.matmul %314, %315, %cst_222 {dimension_numbers = #tpu.dot_dimension_numbers<[1], [0], [0], [1], [0, 0, 1, 1], [], []>} : vector<24x128xbf16>, vector<128x128xbf16>, vector<24x128xf32> -> vector<24x128xf32>
      %c0_223 = arith.constant 0 : index
      %c0_224 = arith.constant 0 : index
      %317 = vector.load %arg5[%c0_223, %c0_224] : memref<1x128xf32, #tpu.memory_space<vmem>>, vector<1x128xf32>
      %318 = vector.broadcast %317 : vector<1x128xf32> to vector<24x128xf32>
      %319 = arith.addf %316, %318 : vector<24x128xf32>
      %c0_225 = arith.constant 0 : index
      %c0_226 = arith.constant 0 : index
      %320 = vector.load %arg3[%c0_225, %c0_226] : memref<24x128xf32, #tpu.memory_space<vmem>>, vector<24x128xf32>
      %321 = arith.addf %319, %320 : vector<24x128xf32>
      %c0_227 = arith.constant 0 : index
      %c0_228 = arith.constant 0 : index
      %322 = vector.load %arg22[%c0_227, %c0_228] : memref<24x128xf32, #tpu.memory_space<vmem>>, vector<24x128xf32>
      tpu.vector_store %arg22[%c0_227, %c0_228], %321 {strides = array<i32>} : memref<24x128xf32, #tpu.memory_space<vmem>>, vector<24x128xf32>,
      %cst_229 = arith.constant 0.000000e+00 : f32
      %323 = vector.broadcast %cst_229 : f32 to vector<4x3x8x8xf32>
      %c0_230 = arith.constant 0 : index
      %c0_231 = arith.constant 0 : index
      %c0_232 = arith.constant 0 : index
      %c0_233 = arith.constant 0 : index
      %324 = vector.load %arg23[%c0_230, %c0_231, %c0_232, %c0_233] : memref<4x3x8x8xf32, #tpu.memory_space<vmem>>, vector<4x3x8x8xf32>
      tpu.vector_store %arg23[%c0_230, %c0_231, %c0_232, %c0_233], %323 {strides = array<i32>} : memref<4x3x8x8xf32, #tpu.memory_space<vmem>>, vector<4x3x8x8xf32>,
    } else {
    }
    %c0 = arith.constant 0 : index
    %c0_1 = arith.constant 0 : index
    %3 = vector.load %arg22[%c0, %c0_1] : memref<24x128xf32, #tpu.memory_space<vmem>>, vector<24x128xf32>
    %4 = arith.truncf %3 : vector<24x128xf32> to vector<24x128xbf16>
    %cst = arith.constant 0.000000e+00 : f32
    %5 = vector.broadcast %cst : f32 to vector<24x128xf32>
    %c0_2 = arith.constant 0 : index
    %c0_3 = arith.constant 0 : index
    %c0_4 = arith.constant 0 : index
    %c0_5 = arith.constant 0 : index
    %6 = vector.load %arg6[%c0_2, %c0_3, %c0_4, %c0_5] : memref<1x4x128x8xbf16, #tpu.memory_space<vmem>>, vector<1x1x128x8xbf16>
    %7 = vector.shape_cast %6 : vector<1x1x128x8xbf16> to vector<128x8xbf16>
    %cst_6 = arith.constant dense<0.000000e+00> : vector<24x8xf32>
    %8 = tpu.matmul %4, %7, %cst_6 {dimension_numbers = #tpu.dot_dimension_numbers<[1], [0], [0], [1], [0, 0, 1, 1], [], []>} : vector<24x128xbf16>, vector<128x8xbf16>, vector<24x8xf32> -> vector<24x8xf32>
    %c0_7 = arith.constant 0 : index
    %c0_8 = arith.constant 0 : index
    %c0_9 = arith.constant 0 : index
    %c0_10 = arith.constant 0 : index
    %9 = vector.load %arg7[%c0_7, %c0_8, %c0_9, %c0_10] : memref<1x4x1x8xf32, #tpu.memory_space<vmem>>, vector<1x1x1x8xf32>
    %10 = vector.shape_cast %9 : vector<1x1x1x8xf32> to vector<1x8xf32>
    %11 = vector.broadcast %10 : vector<1x8xf32> to vector<24x8xf32>
    %12 = arith.addf %8, %11 : vector<24x8xf32>
    %13 = vector.shape_cast %12 : vector<24x8xf32> to vector<3x8x8xf32>
    %c0_11 = arith.constant 0 : index
    %c0_12 = arith.constant 0 : index
    %c0_13 = arith.constant 0 : index
    %c0_14 = arith.constant 0 : index
    %14 = vector.load %arg8[%c0_11, %c0_12, %c0_13, %c0_14] : memref<1x4x128x8xbf16, #tpu.memory_space<vmem>>, vector<1x1x128x8xbf16>
    %15 = vector.shape_cast %14 : vector<1x1x128x8xbf16> to vector<128x8xbf16>
    %cst_15 = arith.constant dense<0.000000e+00> : vector<24x8xf32>
    %16 = tpu.matmul %4, %15, %cst_15 {dimension_numbers = #tpu.dot_dimension_numbers<[1], [0], [0], [1], [0, 0, 1, 1], [], []>} : vector<24x128xbf16>, vector<128x8xbf16>, vector<24x8xf32> -> vector<24x8xf32>
    %c0_16 = arith.constant 0 : index
    %c0_17 = arith.constant 0 : index
    %c0_18 = arith.constant 0 : index
    %c0_19 = arith.constant 0 : index
    %17 = vector.load %arg9[%c0_16, %c0_17, %c0_18, %c0_19] : memref<1x4x1x8xf32, #tpu.memory_space<vmem>>, vector<1x1x1x8xf32>
    %18 = vector.shape_cast %17 : vector<1x1x1x8xf32> to vector<1x8xf32>
    %19 = vector.broadcast %18 : vector<1x8xf32> to vector<24x8xf32>
    %20 = arith.addf %16, %19 : vector<24x8xf32>
    %21 = vector.shape_cast %20 : vector<24x8xf32> to vector<3x8x8xf32>
    %c0_20 = arith.constant 0 : index
    %c0_21 = arith.constant 0 : index
    %c0_22 = arith.constant 0 : index
    %c0_23 = arith.constant 0 : index
    %22 = vector.load %arg10[%c0_20, %c0_21, %c0_22, %c0_23] : memref<1x4x128x8xbf16, #tpu.memory_space<vmem>>, vector<1x1x128x8xbf16>
    %23 = vector.shape_cast %22 : vector<1x1x128x8xbf16> to vector<128x8xbf16>
    %cst_24 = arith.constant dense<0.000000e+00> : vector<24x8xf32>
    %24 = tpu.matmul %4, %23, %cst_24 {dimension_numbers = #tpu.dot_dimension_numbers<[1], [0], [0], [1], [0, 0, 1, 1], [], []>} : vector<24x128xbf16>, vector<128x8xbf16>, vector<24x8xf32> -> vector<24x8xf32>
    %c0_25 = arith.constant 0 : index
    %c0_26 = arith.constant 0 : index
    %c0_27 = arith.constant 0 : index
    %c0_28 = arith.constant 0 : index
    %25 = vector.load %arg11[%c0_25, %c0_26, %c0_27, %c0_28] : memref<1x4x1x8xf32, #tpu.memory_space<vmem>>, vector<1x1x1x8xf32>
    %26 = vector.shape_cast %25 : vector<1x1x1x8xf32> to vector<1x8xf32>
    %27 = vector.broadcast %26 : vector<1x8xf32> to vector<24x8xf32>
    %28 = arith.addf %24, %27 : vector<24x8xf32>
    %29 = vector.shape_cast %28 : vector<24x8xf32> to vector<3x8x8xf32>
    %30 = arith.truncf %13 : vector<3x8x8xf32> to vector<3x8x8xbf16>
    %31 = arith.truncf %21 : vector<3x8x8xf32> to vector<3x8x8xbf16>
    "tpu.trace_start"() <{level = 10 : i32, message = "bld,bmd->blm"}> : () -> ()
    %cst_29 = arith.constant dense<0.000000e+00> : vector<3x8x8xf32>
    %32 = tpu.matmul %30, %31, %cst_29 {dimension_numbers = #tpu.dot_dimension_numbers<[2], [2], [1], [1], [0, 0, 0, 1, 1, 1], [0], [0]>} : vector<3x8x8xbf16>, vector<3x8x8xbf16>, vector<3x8x8xf32> -> vector<3x8x8xf32>
    "tpu.trace_stop"() : () -> ()
    %cst_30 = arith.constant 0.353553385 : f32
    %33 = vector.broadcast %cst_30 : f32 to vector<3x8x8xf32>
    %34 = arith.mulf %32, %33 : vector<3x8x8xf32>
    %c0_31 = arith.constant 0 : index
    %c0_32 = arith.constant 0 : index
    %c0_33 = arith.constant 0 : index
    %c0_34 = arith.constant 0 : index
    %35 = vector.load %arg23[%c0_31, %c0_32, %c0_33, %c0_34] : memref<4x3x8x8xf32, #tpu.memory_space<vmem>>, vector<1x3x8x8xf32>
    %36 = vector.shape_cast %35 : vector<1x3x8x8xf32> to vector<3x8x8xf32>
    %37 = arith.addf %34, %36 : vector<3x8x8xf32>
    %c1_i32 = arith.constant 1 : i32
    %38 = arith.addi %arg1, %c1_i32 : i32
    %c3_i32 = arith.constant 3 : i32
    %39 = arith.cmpi slt, %38, %c3_i32 : i32
    %40 = arith.extui %39 : i1 to i32
    %c0_i32_35 = arith.constant 0 : i32
    %41 = arith.cmpi ne, %40, %c0_i32_35 : i32
    scf.if %41 {
      %c0_218 = arith.constant 0 : index
      %c0_219 = arith.constant 0 : index
      %c0_220 = arith.constant 0 : index
      %c0_221 = arith.constant 0 : index
      %313 = vector.load %arg23[%c0_218, %c0_219, %c0_220, %c0_221] : memref<4x3x8x8xf32, #tpu.memory_space<vmem>>, vector<1x3x8x8xf32>
      %314 = vector.shape_cast %313 : vector<1x3x8x8xf32> to vector<3x8x8xf32>
      %315 = vector.shape_cast %37 : vector<3x8x8xf32> to vector<1x3x8x8xf32>
      tpu.vector_store %arg23[%c0_218, %c0_219, %c0_220, %c0_221], %315 {strides = array<i32>} : memref<4x3x8x8xf32, #tpu.memory_space<vmem>>, vector<1x3x8x8xf32>,
    } else {
    }
    %cst_36 = arith.constant dense<0xFF800000> : vector<3x8xf32>
    %42 = vector.multi_reduction <maximumf>, %37, %cst_36 [2] : vector<3x8x8xf32> to vector<3x8xf32>
    %43 = vector.shape_cast %42 : vector<3x8xf32> to vector<3x8x1xf32>
    %44 = vector.broadcast %43 : vector<3x8x1xf32> to vector<3x8x8xf32>
    %45 = arith.subf %37, %44 : vector<3x8x8xf32>
    %46 = math.exp %45 : vector<3x8x8xf32>
    %cst_37 = arith.constant dense<0.000000e+00> : vector<3x8xf32>
    %47 = vector.multi_reduction <add>, %46, %cst_37 [2] : vector<3x8x8xf32> to vector<3x8xf32>
    %48 = vector.shape_cast %47 : vector<3x8xf32> to vector<3x8x1xf32>
    %49 = tpu.reciprocal %48 {approx = true} : vector<3x8x1xf32> -> vector<3x8x1xf32>
    %50 = vector.broadcast %49 : vector<3x8x1xf32> to vector<3x8x8xf32>
    %51 = arith.mulf %46, %50 : vector<3x8x8xf32>
    %52 = arith.truncf %51 : vector<3x8x8xf32> to vector<3x8x8xbf16>
    %53 = arith.truncf %29 : vector<3x8x8xf32> to vector<3x8x8xbf16>
    "tpu.trace_start"() <{level = 10 : i32, message = "blm,bmd->bld"}> : () -> ()
    %cst_38 = arith.constant dense<0.000000e+00> : vector<3x8x8xf32>
    %54 = tpu.matmul %52, %53, %cst_38 {dimension_numbers = #tpu.dot_dimension_numbers<[2], [1], [1], [2], [0, 0, 0, 1, 1, 2], [0], [0]>} : vector<3x8x8xbf16>, vector<3x8x8xbf16>, vector<3x8x8xf32> -> vector<3x8x8xf32>
    "tpu.trace_stop"() : () -> ()
    %55 = vector.shape_cast %54 : vector<3x8x8xf32> to vector<24x8xf32>
    %56 = arith.truncf %55 : vector<24x8xf32> to vector<24x8xbf16>
    %c0_39 = arith.constant 0 : index
    %c0_40 = arith.constant 0 : index
    %c0_41 = arith.constant 0 : index
    %c0_42 = arith.constant 0 : index
    %57 = vector.load %arg12[%c0_39, %c0_40, %c0_41, %c0_42] : memref<1x4x8x128xbf16, #tpu.memory_space<vmem>>, vector<1x1x8x128xbf16>
    %58 = vector.shape_cast %57 : vector<1x1x8x128xbf16> to vector<8x128xbf16>
    %cst_43 = arith.constant dense<0.000000e+00> : vector<24x128xf32>
    %59 = tpu.matmul %56, %58, %cst_43 {dimension_numbers = #tpu.dot_dimension_numbers<[1], [0], [0], [1], [0, 0, 1, 1], [], []>} : vector<24x8xbf16>, vector<8x128xbf16>, vector<24x128xf32> -> vector<24x128xf32>
    %60 = arith.addf %5, %59 : vector<24x128xf32>
    %c0_44 = arith.constant 0 : index
    %c1 = arith.constant 1 : index
    %c0_45 = arith.constant 0 : index
    %c0_46 = arith.constant 0 : index
    %61 = vector.load %arg6[%c0_44, %c1, %c0_45, %c0_46] : memref<1x4x128x8xbf16, #tpu.memory_space<vmem>>, vector<1x1x128x8xbf16>
    %62 = vector.shape_cast %61 : vector<1x1x128x8xbf16> to vector<128x8xbf16>
    %cst_47 = arith.constant dense<0.000000e+00> : vector<24x8xf32>
    %63 = tpu.matmul %4, %62, %cst_47 {dimension_numbers = #tpu.dot_dimension_numbers<[1], [0], [0], [1], [0, 0, 1, 1], [], []>} : vector<24x128xbf16>, vector<128x8xbf16>, vector<24x8xf32> -> vector<24x8xf32>
    %c0_48 = arith.constant 0 : index
    %c1_49 = arith.constant 1 : index
    %c0_50 = arith.constant 0 : index
    %c0_51 = arith.constant 0 : index
    %64 = vector.load %arg7[%c0_48, %c1_49, %c0_50, %c0_51] : memref<1x4x1x8xf32, #tpu.memory_space<vmem>>, vector<1x1x1x8xf32>
    %65 = vector.shape_cast %64 : vector<1x1x1x8xf32> to vector<1x8xf32>
    %66 = vector.broadcast %65 : vector<1x8xf32> to vector<24x8xf32>
    %67 = arith.addf %63, %66 : vector<24x8xf32>
    %68 = vector.shape_cast %67 : vector<24x8xf32> to vector<3x8x8xf32>
    %c0_52 = arith.constant 0 : index
    %c1_53 = arith.constant 1 : index
    %c0_54 = arith.constant 0 : index
    %c0_55 = arith.constant 0 : index
    %69 = vector.load %arg8[%c0_52, %c1_53, %c0_54, %c0_55] : memref<1x4x128x8xbf16, #tpu.memory_space<vmem>>, vector<1x1x128x8xbf16>
    %70 = vector.shape_cast %69 : vector<1x1x128x8xbf16> to vector<128x8xbf16>
    %cst_56 = arith.constant dense<0.000000e+00> : vector<24x8xf32>
    %71 = tpu.matmul %4, %70, %cst_56 {dimension_numbers = #tpu.dot_dimension_numbers<[1], [0], [0], [1], [0, 0, 1, 1], [], []>} : vector<24x128xbf16>, vector<128x8xbf16>, vector<24x8xf32> -> vector<24x8xf32>
    %c0_57 = arith.constant 0 : index
    %c1_58 = arith.constant 1 : index
    %c0_59 = arith.constant 0 : index
    %c0_60 = arith.constant 0 : index
    %72 = vector.load %arg9[%c0_57, %c1_58, %c0_59, %c0_60] : memref<1x4x1x8xf32, #tpu.memory_space<vmem>>, vector<1x1x1x8xf32>
    %73 = vector.shape_cast %72 : vector<1x1x1x8xf32> to vector<1x8xf32>
    %74 = vector.broadcast %73 : vector<1x8xf32> to vector<24x8xf32>
    %75 = arith.addf %71, %74 : vector<24x8xf32>
    %76 = vector.shape_cast %75 : vector<24x8xf32> to vector<3x8x8xf32>
    %c0_61 = arith.constant 0 : index
    %c1_62 = arith.constant 1 : index
    %c0_63 = arith.constant 0 : index
    %c0_64 = arith.constant 0 : index
    %77 = vector.load %arg10[%c0_61, %c1_62, %c0_63, %c0_64] : memref<1x4x128x8xbf16, #tpu.memory_space<vmem>>, vector<1x1x128x8xbf16>
    %78 = vector.shape_cast %77 : vector<1x1x128x8xbf16> to vector<128x8xbf16>
    %cst_65 = arith.constant dense<0.000000e+00> : vector<24x8xf32>
    %79 = tpu.matmul %4, %78, %cst_65 {dimension_numbers = #tpu.dot_dimension_numbers<[1], [0], [0], [1], [0, 0, 1, 1], [], []>} : vector<24x128xbf16>, vector<128x8xbf16>, vector<24x8xf32> -> vector<24x8xf32>
    %c0_66 = arith.constant 0 : index
    %c1_67 = arith.constant 1 : index
    %c0_68 = arith.constant 0 : index
    %c0_69 = arith.constant 0 : index
    %80 = vector.load %arg11[%c0_66, %c1_67, %c0_68, %c0_69] : memref<1x4x1x8xf32, #tpu.memory_space<vmem>>, vector<1x1x1x8xf32>
    %81 = vector.shape_cast %80 : vector<1x1x1x8xf32> to vector<1x8xf32>
    %82 = vector.broadcast %81 : vector<1x8xf32> to vector<24x8xf32>
    %83 = arith.addf %79, %82 : vector<24x8xf32>
    %84 = vector.shape_cast %83 : vector<24x8xf32> to vector<3x8x8xf32>
    %85 = arith.truncf %68 : vector<3x8x8xf32> to vector<3x8x8xbf16>
    %86 = arith.truncf %76 : vector<3x8x8xf32> to vector<3x8x8xbf16>
    "tpu.trace_start"() <{level = 10 : i32, message = "bld,bmd->blm"}> : () -> ()
    %cst_70 = arith.constant dense<0.000000e+00> : vector<3x8x8xf32>
    %87 = tpu.matmul %85, %86, %cst_70 {dimension_numbers = #tpu.dot_dimension_numbers<[2], [2], [1], [1], [0, 0, 0, 1, 1, 1], [0], [0]>} : vector<3x8x8xbf16>, vector<3x8x8xbf16>, vector<3x8x8xf32> -> vector<3x8x8xf32>
    "tpu.trace_stop"() : () -> ()
    %cst_71 = arith.constant 0.353553385 : f32
    %88 = vector.broadcast %cst_71 : f32 to vector<3x8x8xf32>
    %89 = arith.mulf %87, %88 : vector<3x8x8xf32>
    %c1_72 = arith.constant 1 : index
    %c0_73 = arith.constant 0 : index
    %c0_74 = arith.constant 0 : index
    %c0_75 = arith.constant 0 : index
    %90 = vector.load %arg23[%c1_72, %c0_73, %c0_74, %c0_75] : memref<4x3x8x8xf32, #tpu.memory_space<vmem>>, vector<1x3x8x8xf32>
    %91 = vector.shape_cast %90 : vector<1x3x8x8xf32> to vector<3x8x8xf32>
    %92 = arith.addf %89, %91 : vector<3x8x8xf32>
    %c1_i32_76 = arith.constant 1 : i32
    %93 = arith.addi %arg1, %c1_i32_76 : i32
    %c3_i32_77 = arith.constant 3 : i32
    %94 = arith.cmpi slt, %93, %c3_i32_77 : i32
    %95 = arith.extui %94 : i1 to i32
    %c0_i32_78 = arith.constant 0 : i32
    %96 = arith.cmpi ne, %95, %c0_i32_78 : i32
    scf.if %96 {
      %c1_218 = arith.constant 1 : index
      %c0_219 = arith.constant 0 : index
      %c0_220 = arith.constant 0 : index
      %c0_221 = arith.constant 0 : index
      %313 = vector.load %arg23[%c1_218, %c0_219, %c0_220, %c0_221] : memref<4x3x8x8xf32, #tpu.memory_space<vmem>>, vector<1x3x8x8xf32>
      %314 = vector.shape_cast %313 : vector<1x3x8x8xf32> to vector<3x8x8xf32>
      %315 = vector.shape_cast %92 : vector<3x8x8xf32> to vector<1x3x8x8xf32>
      tpu.vector_store %arg23[%c1_218, %c0_219, %c0_220, %c0_221], %315 {strides = array<i32>} : memref<4x3x8x8xf32, #tpu.memory_space<vmem>>, vector<1x3x8x8xf32>,
    } else {
    }
    %cst_79 = arith.constant dense<0xFF800000> : vector<3x8xf32>
    %97 = vector.multi_reduction <maximumf>, %92, %cst_79 [2] : vector<3x8x8xf32> to vector<3x8xf32>
    %98 = vector.shape_cast %97 : vector<3x8xf32> to vector<3x8x1xf32>
    %99 = vector.broadcast %98 : vector<3x8x1xf32> to vector<3x8x8xf32>
    %100 = arith.subf %92, %99 : vector<3x8x8xf32>
    %101 = math.exp %100 : vector<3x8x8xf32>
    %cst_80 = arith.constant dense<0.000000e+00> : vector<3x8xf32>
    %102 = vector.multi_reduction <add>, %101, %cst_80 [2] : vector<3x8x8xf32> to vector<3x8xf32>
    %103 = vector.shape_cast %102 : vector<3x8xf32> to vector<3x8x1xf32>
    %104 = tpu.reciprocal %103 {approx = true} : vector<3x8x1xf32> -> vector<3x8x1xf32>
    %105 = vector.broadcast %104 : vector<3x8x1xf32> to vector<3x8x8xf32>
    %106 = arith.mulf %101, %105 : vector<3x8x8xf32>
    %107 = arith.truncf %106 : vector<3x8x8xf32> to vector<3x8x8xbf16>
    %108 = arith.truncf %84 : vector<3x8x8xf32> to vector<3x8x8xbf16>
    "tpu.trace_start"() <{level = 10 : i32, message = "blm,bmd->bld"}> : () -> ()
    %cst_81 = arith.constant dense<0.000000e+00> : vector<3x8x8xf32>
    %109 = tpu.matmul %107, %108, %cst_81 {dimension_numbers = #tpu.dot_dimension_numbers<[2], [1], [1], [2], [0, 0, 0, 1, 1, 2], [0], [0]>} : vector<3x8x8xbf16>, vector<3x8x8xbf16>, vector<3x8x8xf32> -> vector<3x8x8xf32>
    "tpu.trace_stop"() : () -> ()
    %110 = vector.shape_cast %109 : vector<3x8x8xf32> to vector<24x8xf32>
    %111 = arith.truncf %110 : vector<24x8xf32> to vector<24x8xbf16>
    %c0_82 = arith.constant 0 : index
    %c1_83 = arith.constant 1 : index
    %c0_84 = arith.constant 0 : index
    %c0_85 = arith.constant 0 : index
    %112 = vector.load %arg12[%c0_82, %c1_83, %c0_84, %c0_85] : memref<1x4x8x128xbf16, #tpu.memory_space<vmem>>, vector<1x1x8x128xbf16>
    %113 = vector.shape_cast %112 : vector<1x1x8x128xbf16> to vector<8x128xbf16>
    %cst_86 = arith.constant dense<0.000000e+00> : vector<24x128xf32>
    %114 = tpu.matmul %111, %113, %cst_86 {dimension_numbers = #tpu.dot_dimension_numbers<[1], [0], [0], [1], [0, 0, 1, 1], [], []>} : vector<24x8xbf16>, vector<8x128xbf16>, vector<24x128xf32> -> vector<24x128xf32>
    %115 = arith.addf %60, %114 : vector<24x128xf32>
    %c0_87 = arith.constant 0 : index
    %c2 = arith.constant 2 : index
    %c0_88 = arith.constant 0 : index
    %c0_89 = arith.constant 0 : index
    %116 = vector.load %arg6[%c0_87, %c2, %c0_88, %c0_89] : memref<1x4x128x8xbf16, #tpu.memory_space<vmem>>, vector<1x1x128x8xbf16>
    %117 = vector.shape_cast %116 : vector<1x1x128x8xbf16> to vector<128x8xbf16>
    %cst_90 = arith.constant dense<0.000000e+00> : vector<24x8xf32>
    %118 = tpu.matmul %4, %117, %cst_90 {dimension_numbers = #tpu.dot_dimension_numbers<[1], [0], [0], [1], [0, 0, 1, 1], [], []>} : vector<24x128xbf16>, vector<128x8xbf16>, vector<24x8xf32> -> vector<24x8xf32>
    %c0_91 = arith.constant 0 : index
    %c2_92 = arith.constant 2 : index
    %c0_93 = arith.constant 0 : index
    %c0_94 = arith.constant 0 : index
    %119 = vector.load %arg7[%c0_91, %c2_92, %c0_93, %c0_94] : memref<1x4x1x8xf32, #tpu.memory_space<vmem>>, vector<1x1x1x8xf32>
    %120 = vector.shape_cast %119 : vector<1x1x1x8xf32> to vector<1x8xf32>
    %121 = vector.broadcast %120 : vector<1x8xf32> to vector<24x8xf32>
    %122 = arith.addf %118, %121 : vector<24x8xf32>
    %123 = vector.shape_cast %122 : vector<24x8xf32> to vector<3x8x8xf32>
    %c0_95 = arith.constant 0 : index
    %c2_96 = arith.constant 2 : index
    %c0_97 = arith.constant 0 : index
    %c0_98 = arith.constant 0 : index
    %124 = vector.load %arg8[%c0_95, %c2_96, %c0_97, %c0_98] : memref<1x4x128x8xbf16, #tpu.memory_space<vmem>>, vector<1x1x128x8xbf16>
    %125 = vector.shape_cast %124 : vector<1x1x128x8xbf16> to vector<128x8xbf16>
    %cst_99 = arith.constant dense<0.000000e+00> : vector<24x8xf32>
    %126 = tpu.matmul %4, %125, %cst_99 {dimension_numbers = #tpu.dot_dimension_numbers<[1], [0], [0], [1], [0, 0, 1, 1], [], []>} : vector<24x128xbf16>, vector<128x8xbf16>, vector<24x8xf32> -> vector<24x8xf32>
    %c0_100 = arith.constant 0 : index
    %c2_101 = arith.constant 2 : index
    %c0_102 = arith.constant 0 : index
    %c0_103 = arith.constant 0 : index
    %127 = vector.load %arg9[%c0_100, %c2_101, %c0_102, %c0_103] : memref<1x4x1x8xf32, #tpu.memory_space<vmem>>, vector<1x1x1x8xf32>
    %128 = vector.shape_cast %127 : vector<1x1x1x8xf32> to vector<1x8xf32>
    %129 = vector.broadcast %128 : vector<1x8xf32> to vector<24x8xf32>
    %130 = arith.addf %126, %129 : vector<24x8xf32>
    %131 = vector.shape_cast %130 : vector<24x8xf32> to vector<3x8x8xf32>
    %c0_104 = arith.constant 0 : index
    %c2_105 = arith.constant 2 : index
    %c0_106 = arith.constant 0 : index
    %c0_107 = arith.constant 0 : index
    %132 = vector.load %arg10[%c0_104, %c2_105, %c0_106, %c0_107] : memref<1x4x128x8xbf16, #tpu.memory_space<vmem>>, vector<1x1x128x8xbf16>
    %133 = vector.shape_cast %132 : vector<1x1x128x8xbf16> to vector<128x8xbf16>
    %cst_108 = arith.constant dense<0.000000e+00> : vector<24x8xf32>
    %134 = tpu.matmul %4, %133, %cst_108 {dimension_numbers = #tpu.dot_dimension_numbers<[1], [0], [0], [1], [0, 0, 1, 1], [], []>} : vector<24x128xbf16>, vector<128x8xbf16>, vector<24x8xf32> -> vector<24x8xf32>
    %c0_109 = arith.constant 0 : index
    %c2_110 = arith.constant 2 : index
    %c0_111 = arith.constant 0 : index
    %c0_112 = arith.constant 0 : index
    %135 = vector.load %arg11[%c0_109, %c2_110, %c0_111, %c0_112] : memref<1x4x1x8xf32, #tpu.memory_space<vmem>>, vector<1x1x1x8xf32>
    %136 = vector.shape_cast %135 : vector<1x1x1x8xf32> to vector<1x8xf32>
    %137 = vector.broadcast %136 : vector<1x8xf32> to vector<24x8xf32>
    %138 = arith.addf %134, %137 : vector<24x8xf32>
    %139 = vector.shape_cast %138 : vector<24x8xf32> to vector<3x8x8xf32>
    %140 = arith.truncf %123 : vector<3x8x8xf32> to vector<3x8x8xbf16>
    %141 = arith.truncf %131 : vector<3x8x8xf32> to vector<3x8x8xbf16>
    "tpu.trace_start"() <{level = 10 : i32, message = "bld,bmd->blm"}> : () -> ()
    %cst_113 = arith.constant dense<0.000000e+00> : vector<3x8x8xf32>
    %142 = tpu.matmul %140, %141, %cst_113 {dimension_numbers = #tpu.dot_dimension_numbers<[2], [2], [1], [1], [0, 0, 0, 1, 1, 1], [0], [0]>} : vector<3x8x8xbf16>, vector<3x8x8xbf16>, vector<3x8x8xf32> -> vector<3x8x8xf32>
    "tpu.trace_stop"() : () -> ()
    %cst_114 = arith.constant 0.353553385 : f32
    %143 = vector.broadcast %cst_114 : f32 to vector<3x8x8xf32>
    %144 = arith.mulf %142, %143 : vector<3x8x8xf32>
    %c2_115 = arith.constant 2 : index
    %c0_116 = arith.constant 0 : index
    %c0_117 = arith.constant 0 : index
    %c0_118 = arith.constant 0 : index
    %145 = vector.load %arg23[%c2_115, %c0_116, %c0_117, %c0_118] : memref<4x3x8x8xf32, #tpu.memory_space<vmem>>, vector<1x3x8x8xf32>
    %146 = vector.shape_cast %145 : vector<1x3x8x8xf32> to vector<3x8x8xf32>
    %147 = arith.addf %144, %146 : vector<3x8x8xf32>
    %c1_i32_119 = arith.constant 1 : i32
    %148 = arith.addi %arg1, %c1_i32_119 : i32
    %c3_i32_120 = arith.constant 3 : i32
    %149 = arith.cmpi slt, %148, %c3_i32_120 : i32
    %150 = arith.extui %149 : i1 to i32
    %c0_i32_121 = arith.constant 0 : i32
    %151 = arith.cmpi ne, %150, %c0_i32_121 : i32
    scf.if %151 {
      %c2_218 = arith.constant 2 : index
      %c0_219 = arith.constant 0 : index
      %c0_220 = arith.constant 0 : index
      %c0_221 = arith.constant 0 : index
      %313 = vector.load %arg23[%c2_218, %c0_219, %c0_220, %c0_221] : memref<4x3x8x8xf32, #tpu.memory_space<vmem>>, vector<1x3x8x8xf32>
      %314 = vector.shape_cast %313 : vector<1x3x8x8xf32> to vector<3x8x8xf32>
      %315 = vector.shape_cast %147 : vector<3x8x8xf32> to vector<1x3x8x8xf32>
      tpu.vector_store %arg23[%c2_218, %c0_219, %c0_220, %c0_221], %315 {strides = array<i32>} : memref<4x3x8x8xf32, #tpu.memory_space<vmem>>, vector<1x3x8x8xf32>,
    } else {
    }
    %cst_122 = arith.constant dense<0xFF800000> : vector<3x8xf32>
    %152 = vector.multi_reduction <maximumf>, %147, %cst_122 [2] : vector<3x8x8xf32> to vector<3x8xf32>
    %153 = vector.shape_cast %152 : vector<3x8xf32> to vector<3x8x1xf32>
    %154 = vector.broadcast %153 : vector<3x8x1xf32> to vector<3x8x8xf32>
    %155 = arith.subf %147, %154 : vector<3x8x8xf32>
    %156 = math.exp %155 : vector<3x8x8xf32>
    %cst_123 = arith.constant dense<0.000000e+00> : vector<3x8xf32>
    %157 = vector.multi_reduction <add>, %156, %cst_123 [2] : vector<3x8x8xf32> to vector<3x8xf32>
    %158 = vector.shape_cast %157 : vector<3x8xf32> to vector<3x8x1xf32>
    %159 = tpu.reciprocal %158 {approx = true} : vector<3x8x1xf32> -> vector<3x8x1xf32>
    %160 = vector.broadcast %159 : vector<3x8x1xf32> to vector<3x8x8xf32>
    %161 = arith.mulf %156, %160 : vector<3x8x8xf32>
    %162 = arith.truncf %161 : vector<3x8x8xf32> to vector<3x8x8xbf16>
    %163 = arith.truncf %139 : vector<3x8x8xf32> to vector<3x8x8xbf16>
    "tpu.trace_start"() <{level = 10 : i32, message = "blm,bmd->bld"}> : () -> ()
    %cst_124 = arith.constant dense<0.000000e+00> : vector<3x8x8xf32>
    %164 = tpu.matmul %162, %163, %cst_124 {dimension_numbers = #tpu.dot_dimension_numbers<[2], [1], [1], [2], [0, 0, 0, 1, 1, 2], [0], [0]>} : vector<3x8x8xbf16>, vector<3x8x8xbf16>, vector<3x8x8xf32> -> vector<3x8x8xf32>
    "tpu.trace_stop"() : () -> ()
    %165 = vector.shape_cast %164 : vector<3x8x8xf32> to vector<24x8xf32>
    %166 = arith.truncf %165 : vector<24x8xf32> to vector<24x8xbf16>
    %c0_125 = arith.constant 0 : index
    %c2_126 = arith.constant 2 : index
    %c0_127 = arith.constant 0 : index
    %c0_128 = arith.constant 0 : index
    %167 = vector.load %arg12[%c0_125, %c2_126, %c0_127, %c0_128] : memref<1x4x8x128xbf16, #tpu.memory_space<vmem>>, vector<1x1x8x128xbf16>
    %168 = vector.shape_cast %167 : vector<1x1x8x128xbf16> to vector<8x128xbf16>
    %cst_129 = arith.constant dense<0.000000e+00> : vector<24x128xf32>
    %169 = tpu.matmul %166, %168, %cst_129 {dimension_numbers = #tpu.dot_dimension_numbers<[1], [0], [0], [1], [0, 0, 1, 1], [], []>} : vector<24x8xbf16>, vector<8x128xbf16>, vector<24x128xf32> -> vector<24x128xf32>
    %170 = arith.addf %115, %169 : vector<24x128xf32>
    %c0_130 = arith.constant 0 : index
    %c3 = arith.constant 3 : index
    %c0_131 = arith.constant 0 : index
    %c0_132 = arith.constant 0 : index
    %171 = vector.load %arg6[%c0_130, %c3, %c0_131, %c0_132] : memref<1x4x128x8xbf16, #tpu.memory_space<vmem>>, vector<1x1x128x8xbf16>
    %172 = vector.shape_cast %171 : vector<1x1x128x8xbf16> to vector<128x8xbf16>
    %cst_133 = arith.constant dense<0.000000e+00> : vector<24x8xf32>
    %173 = tpu.matmul %4, %172, %cst_133 {dimension_numbers = #tpu.dot_dimension_numbers<[1], [0], [0], [1], [0, 0, 1, 1], [], []>} : vector<24x128xbf16>, vector<128x8xbf16>, vector<24x8xf32> -> vector<24x8xf32>
    %c0_134 = arith.constant 0 : index
    %c3_135 = arith.constant 3 : index
    %c0_136 = arith.constant 0 : index
    %c0_137 = arith.constant 0 : index
    %174 = vector.load %arg7[%c0_134, %c3_135, %c0_136, %c0_137] : memref<1x4x1x8xf32, #tpu.memory_space<vmem>>, vector<1x1x1x8xf32>
    %175 = vector.shape_cast %174 : vector<1x1x1x8xf32> to vector<1x8xf32>
    %176 = vector.broadcast %175 : vector<1x8xf32> to vector<24x8xf32>
    %177 = arith.addf %173, %176 : vector<24x8xf32>
    %178 = vector.shape_cast %177 : vector<24x8xf32> to vector<3x8x8xf32>
    %c0_138 = arith.constant 0 : index
    %c3_139 = arith.constant 3 : index
    %c0_140 = arith.constant 0 : index
    %c0_141 = arith.constant 0 : index
    %179 = vector.load %arg8[%c0_138, %c3_139, %c0_140, %c0_141] : memref<1x4x128x8xbf16, #tpu.memory_space<vmem>>, vector<1x1x128x8xbf16>
    %180 = vector.shape_cast %179 : vector<1x1x128x8xbf16> to vector<128x8xbf16>
    %cst_142 = arith.constant dense<0.000000e+00> : vector<24x8xf32>
    %181 = tpu.matmul %4, %180, %cst_142 {dimension_numbers = #tpu.dot_dimension_numbers<[1], [0], [0], [1], [0, 0, 1, 1], [], []>} : vector<24x128xbf16>, vector<128x8xbf16>, vector<24x8xf32> -> vector<24x8xf32>
    %c0_143 = arith.constant 0 : index
    %c3_144 = arith.constant 3 : index
    %c0_145 = arith.constant 0 : index
    %c0_146 = arith.constant 0 : index
    %182 = vector.load %arg9[%c0_143, %c3_144, %c0_145, %c0_146] : memref<1x4x1x8xf32, #tpu.memory_space<vmem>>, vector<1x1x1x8xf32>
    %183 = vector.shape_cast %182 : vector<1x1x1x8xf32> to vector<1x8xf32>
    %184 = vector.broadcast %183 : vector<1x8xf32> to vector<24x8xf32>
    %185 = arith.addf %181, %184 : vector<24x8xf32>
    %186 = vector.shape_cast %185 : vector<24x8xf32> to vector<3x8x8xf32>
    %c0_147 = arith.constant 0 : index
    %c3_148 = arith.constant 3 : index
    %c0_149 = arith.constant 0 : index
    %c0_150 = arith.constant 0 : index
    %187 = vector.load %arg10[%c0_147, %c3_148, %c0_149, %c0_150] : memref<1x4x128x8xbf16, #tpu.memory_space<vmem>>, vector<1x1x128x8xbf16>
    %188 = vector.shape_cast %187 : vector<1x1x128x8xbf16> to vector<128x8xbf16>
    %cst_151 = arith.constant dense<0.000000e+00> : vector<24x8xf32>
    %189 = tpu.matmul %4, %188, %cst_151 {dimension_numbers = #tpu.dot_dimension_numbers<[1], [0], [0], [1], [0, 0, 1, 1], [], []>} : vector<24x128xbf16>, vector<128x8xbf16>, vector<24x8xf32> -> vector<24x8xf32>
    %c0_152 = arith.constant 0 : index
    %c3_153 = arith.constant 3 : index
    %c0_154 = arith.constant 0 : index
    %c0_155 = arith.constant 0 : index
    %190 = vector.load %arg11[%c0_152, %c3_153, %c0_154, %c0_155] : memref<1x4x1x8xf32, #tpu.memory_space<vmem>>, vector<1x1x1x8xf32>
    %191 = vector.shape_cast %190 : vector<1x1x1x8xf32> to vector<1x8xf32>
    %192 = vector.broadcast %191 : vector<1x8xf32> to vector<24x8xf32>
    %193 = arith.addf %189, %192 : vector<24x8xf32>
    %194 = vector.shape_cast %193 : vector<24x8xf32> to vector<3x8x8xf32>
    %195 = arith.truncf %178 : vector<3x8x8xf32> to vector<3x8x8xbf16>
    %196 = arith.truncf %186 : vector<3x8x8xf32> to vector<3x8x8xbf16>
    "tpu.trace_start"() <{level = 10 : i32, message = "bld,bmd->blm"}> : () -> ()
    %cst_156 = arith.constant dense<0.000000e+00> : vector<3x8x8xf32>
    %197 = tpu.matmul %195, %196, %cst_156 {dimension_numbers = #tpu.dot_dimension_numbers<[2], [2], [1], [1], [0, 0, 0, 1, 1, 1], [0], [0]>} : vector<3x8x8xbf16>, vector<3x8x8xbf16>, vector<3x8x8xf32> -> vector<3x8x8xf32>
    "tpu.trace_stop"() : () -> ()
    %cst_157 = arith.constant 0.353553385 : f32
    %198 = vector.broadcast %cst_157 : f32 to vector<3x8x8xf32>
    %199 = arith.mulf %197, %198 : vector<3x8x8xf32>
    %c3_158 = arith.constant 3 : index
    %c0_159 = arith.constant 0 : index
    %c0_160 = arith.constant 0 : index
    %c0_161 = arith.constant 0 : index
    %200 = vector.load %arg23[%c3_158, %c0_159, %c0_160, %c0_161] : memref<4x3x8x8xf32, #tpu.memory_space<vmem>>, vector<1x3x8x8xf32>
    %201 = vector.shape_cast %200 : vector<1x3x8x8xf32> to vector<3x8x8xf32>
    %202 = arith.addf %199, %201 : vector<3x8x8xf32>
    %c1_i32_162 = arith.constant 1 : i32
    %203 = arith.addi %arg1, %c1_i32_162 : i32
    %c3_i32_163 = arith.constant 3 : i32
    %204 = arith.cmpi slt, %203, %c3_i32_163 : i32
    %205 = arith.extui %204 : i1 to i32
    %c0_i32_164 = arith.constant 0 : i32
    %206 = arith.cmpi ne, %205, %c0_i32_164 : i32
    scf.if %206 {
      %c3_218 = arith.constant 3 : index
      %c0_219 = arith.constant 0 : index
      %c0_220 = arith.constant 0 : index
      %c0_221 = arith.constant 0 : index
      %313 = vector.load %arg23[%c3_218, %c0_219, %c0_220, %c0_221] : memref<4x3x8x8xf32, #tpu.memory_space<vmem>>, vector<1x3x8x8xf32>
      %314 = vector.shape_cast %313 : vector<1x3x8x8xf32> to vector<3x8x8xf32>
      %315 = vector.shape_cast %202 : vector<3x8x8xf32> to vector<1x3x8x8xf32>
      tpu.vector_store %arg23[%c3_218, %c0_219, %c0_220, %c0_221], %315 {strides = array<i32>} : memref<4x3x8x8xf32, #tpu.memory_space<vmem>>, vector<1x3x8x8xf32>,
    } else {
    }
    %cst_165 = arith.constant dense<0xFF800000> : vector<3x8xf32>
    %207 = vector.multi_reduction <maximumf>, %202, %cst_165 [2] : vector<3x8x8xf32> to vector<3x8xf32>
    %208 = vector.shape_cast %207 : vector<3x8xf32> to vector<3x8x1xf32>
    %209 = vector.broadcast %208 : vector<3x8x1xf32> to vector<3x8x8xf32>
    %210 = arith.subf %202, %209 : vector<3x8x8xf32>
    %211 = math.exp %210 : vector<3x8x8xf32>
    %cst_166 = arith.constant dense<0.000000e+00> : vector<3x8xf32>
    %212 = vector.multi_reduction <add>, %211, %cst_166 [2] : vector<3x8x8xf32> to vector<3x8xf32>
    %213 = vector.shape_cast %212 : vector<3x8xf32> to vector<3x8x1xf32>
    %214 = tpu.reciprocal %213 {approx = true} : vector<3x8x1xf32> -> vector<3x8x1xf32>
    %215 = vector.broadcast %214 : vector<3x8x1xf32> to vector<3x8x8xf32>
    %216 = arith.mulf %211, %215 : vector<3x8x8xf32>
    %217 = arith.truncf %216 : vector<3x8x8xf32> to vector<3x8x8xbf16>
    %218 = arith.truncf %194 : vector<3x8x8xf32> to vector<3x8x8xbf16>
    "tpu.trace_start"() <{level = 10 : i32, message = "blm,bmd->bld"}> : () -> ()
    %cst_167 = arith.constant dense<0.000000e+00> : vector<3x8x8xf32>
    %219 = tpu.matmul %217, %218, %cst_167 {dimension_numbers = #tpu.dot_dimension_numbers<[2], [1], [1], [2], [0, 0, 0, 1, 1, 2], [0], [0]>} : vector<3x8x8xbf16>, vector<3x8x8xbf16>, vector<3x8x8xf32> -> vector<3x8x8xf32>
    "tpu.trace_stop"() : () -> ()
    %220 = vector.shape_cast %219 : vector<3x8x8xf32> to vector<24x8xf32>
    %221 = arith.truncf %220 : vector<24x8xf32> to vector<24x8xbf16>
    %c0_168 = arith.constant 0 : index
    %c3_169 = arith.constant 3 : index
    %c0_170 = arith.constant 0 : index
    %c0_171 = arith.constant 0 : index
    %222 = vector.load %arg12[%c0_168, %c3_169, %c0_170, %c0_171] : memref<1x4x8x128xbf16, #tpu.memory_space<vmem>>, vector<1x1x8x128xbf16>
    %223 = vector.shape_cast %222 : vector<1x1x8x128xbf16> to vector<8x128xbf16>
    %cst_172 = arith.constant dense<0.000000e+00> : vector<24x128xf32>
    %224 = tpu.matmul %221, %223, %cst_172 {dimension_numbers = #tpu.dot_dimension_numbers<[1], [0], [0], [1], [0, 0, 1, 1], [], []>} : vector<24x8xbf16>, vector<8x128xbf16>, vector<24x128xf32> -> vector<24x128xf32>
    %225 = arith.addf %170, %224 : vector<24x128xf32>
    %c0_173 = arith.constant 0 : index
    %c0_174 = arith.constant 0 : index
    %c0_175 = arith.constant 0 : index
    %226 = vector.load %arg13[%c0_173, %c0_174, %c0_175] : memref<1x1x128xf32, #tpu.memory_space<vmem>>, vector<1x1x128xf32>
    %227 = vector.shape_cast %226 : vector<1x1x128xf32> to vector<1x128xf32>
    %228 = vector.broadcast %227 : vector<1x128xf32> to vector<24x128xf32>
    %229 = arith.addf %225, %228 : vector<24x128xf32>
    %c0_176 = arith.constant 0 : index
    %c0_177 = arith.constant 0 : index
    %c0_178 = arith.constant 0 : index
    %230 = vector.load %arg14[%c0_176, %c0_177, %c0_178] : memref<1x1x128xf32, #tpu.memory_space<vmem>>, vector<1x1x128xf32>
    %231 = vector.shape_cast %230 : vector<1x1x128xf32> to vector<1x128xf32>
    %c0_179 = arith.constant 0 : index
    %c0_180 = arith.constant 0 : index
    %c0_181 = arith.constant 0 : index
    %232 = vector.load %arg15[%c0_179, %c0_180, %c0_181] : memref<1x1x128xf32, #tpu.memory_space<vmem>>, vector<1x1x128xf32>
    %233 = vector.shape_cast %232 : vector<1x1x128xf32> to vector<1x128xf32>
    %cst_182 = arith.constant dense<0.000000e+00> : vector<24xf32>
    %234 = vector.multi_reduction <add>, %229, %cst_182 [1] : vector<24x128xf32> to vector<24xf32>
    %235 = vector.shape_cast %234 : vector<24xf32> to vector<24x1xf32>
    %cst_183 = arith.constant 3.125000e-02 : f32
    %236 = vector.broadcast %cst_183 : f32 to vector<24x1xf32>
    %237 = arith.mulf %235, %236 : vector<24x1xf32>
    %238 = arith.mulf %229, %229 : vector<24x128xf32>
    %cst_184 = arith.constant dense<0.000000e+00> : vector<24xf32>
    %239 = vector.multi_reduction <add>, %238, %cst_184 [1] : vector<24x128xf32> to vector<24xf32>
    %240 = vector.shape_cast %239 : vector<24xf32> to vector<24x1xf32>
    %cst_185 = arith.constant 3.125000e-02 : f32
    %241 = vector.broadcast %cst_185 : f32 to vector<24x1xf32>
    %242 = arith.mulf %240, %241 : vector<24x1xf32>
    %243 = arith.mulf %237, %237 : vector<24x1xf32>
    %244 = arith.subf %242, %243 : vector<24x1xf32>
    %245 = vector.broadcast %237 : vector<24x1xf32> to vector<24x128xf32>
    %246 = arith.subf %229, %245 : vector<24x128xf32>
    %cst_186 = arith.constant 9.99999974E-6 : f32
    %247 = vector.broadcast %cst_186 : f32 to vector<24x1xf32>
    %248 = arith.addf %244, %247 : vector<24x1xf32>
    %249 = math.rsqrt %248 : vector<24x1xf32>
    %250 = vector.broadcast %249 : vector<24x1xf32> to vector<24x128xf32>
    %251 = arith.mulf %246, %250 : vector<24x128xf32>
    %252 = vector.broadcast %231 : vector<1x128xf32> to vector<24x128xf32>
    %253 = arith.mulf %251, %252 : vector<24x128xf32>
    %254 = vector.broadcast %233 : vector<1x128xf32> to vector<24x128xf32>
    %255 = arith.addf %253, %254 : vector<24x128xf32>
    %256 = arith.truncf %255 : vector<24x128xf32> to vector<24x128xbf16>
    %c0_187 = arith.constant 0 : index
    %c0_188 = arith.constant 0 : index
    %c0_189 = arith.constant 0 : index
    %257 = vector.load %arg16[%c0_187, %c0_188, %c0_189] : memref<1x128x128xbf16, #tpu.memory_space<vmem>>, vector<1x128x128xbf16>
    %258 = vector.shape_cast %257 : vector<1x128x128xbf16> to vector<128x128xbf16>
    %cst_190 = arith.constant dense<0.000000e+00> : vector<24x128xf32>
    %259 = tpu.matmul %256, %258, %cst_190 {dimension_numbers = #tpu.dot_dimension_numbers<[1], [0], [0], [1], [0, 0, 1, 1], [], []>} : vector<24x128xbf16>, vector<128x128xbf16>, vector<24x128xf32> -> vector<24x128xf32>
    %c0_191 = arith.constant 0 : index
    %c0_192 = arith.constant 0 : index
    %c0_193 = arith.constant 0 : index
    %260 = vector.load %arg17[%c0_191, %c0_192, %c0_193] : memref<1x1x128xf32, #tpu.memory_space<vmem>>, vector<1x1x128xf32>
    %261 = vector.shape_cast %260 : vector<1x1x128xf32> to vector<1x128xf32>
    %262 = vector.broadcast %261 : vector<1x128xf32> to vector<24x128xf32>
    %263 = arith.addf %259, %262 : vector<24x128xf32>
    %cst_194 = arith.constant 5.000000e-01 : f32
    %264 = vector.broadcast %cst_194 : f32 to vector<24x128xf32>
    %265 = arith.mulf %264, %263 : vector<24x128xf32>
    %cst_195 = arith.constant 4.471500e-02 : f32
    %266 = vector.broadcast %cst_195 : f32 to vector<24x128xf32>
    %267 = arith.mulf %266, %263 : vector<24x128xf32>
    %268 = arith.mulf %267, %263 : vector<24x128xf32>
    %269 = arith.mulf %268, %263 : vector<24x128xf32>
    %270 = arith.addf %263, %269 : vector<24x128xf32>
    %cst_196 = arith.constant 0.797884583 : f32
    %271 = vector.broadcast %cst_196 : f32 to vector<24x128xf32>
    %272 = arith.mulf %271, %270 : vector<24x128xf32>
    %273 = math.tanh %272 : vector<24x128xf32>
    %cst_197 = arith.constant 1.000000e+00 : f32
    %274 = vector.broadcast %cst_197 : f32 to vector<24x128xf32>
    %275 = arith.addf %274, %273 : vector<24x128xf32>
    %276 = arith.mulf %265, %275 : vector<24x128xf32>
    %277 = arith.truncf %276 : vector<24x128xf32> to vector<24x128xbf16>
    %c0_198 = arith.constant 0 : index
    %c0_199 = arith.constant 0 : index
    %c0_200 = arith.constant 0 : index
    %278 = vector.load %arg18[%c0_198, %c0_199, %c0_200] : memref<1x128x128xbf16, #tpu.memory_space<vmem>>, vector<1x128x128xbf16>
    %279 = vector.shape_cast %278 : vector<1x128x128xbf16> to vector<128x128xbf16>
    %cst_201 = arith.constant dense<0.000000e+00> : vector<24x128xf32>
    %280 = tpu.matmul %277, %279, %cst_201 {dimension_numbers = #tpu.dot_dimension_numbers<[1], [0], [0], [1], [0, 0, 1, 1], [], []>} : vector<24x128xbf16>, vector<128x128xbf16>, vector<24x128xf32> -> vector<24x128xf32>
    %c0_202 = arith.constant 0 : index
    %c0_203 = arith.constant 0 : index
    %c0_204 = arith.constant 0 : index
    %281 = vector.load %arg19[%c0_202, %c0_203, %c0_204] : memref<1x1x128xf32, #tpu.memory_space<vmem>>, vector<1x1x128xf32>
    %282 = vector.shape_cast %281 : vector<1x1x128xf32> to vector<1x128xf32>
    %283 = vector.broadcast %282 : vector<1x128xf32> to vector<24x128xf32>
    %284 = arith.addf %280, %283 : vector<24x128xf32>
    %285 = arith.addf %255, %284 : vector<24x128xf32>
    %c0_205 = arith.constant 0 : index
    %c0_206 = arith.constant 0 : index
    %c0_207 = arith.constant 0 : index
    %286 = vector.load %arg20[%c0_205, %c0_206, %c0_207] : memref<1x1x128xf32, #tpu.memory_space<vmem>>, vector<1x1x128xf32>
    %287 = vector.shape_cast %286 : vector<1x1x128xf32> to vector<1x128xf32>
    %c0_208 = arith.constant 0 : index
    %c0_209 = arith.constant 0 : index
    %c0_210 = arith.constant 0 : index
    %288 = vector.load %arg21[%c0_208, %c0_209, %c0_210] : memref<1x1x128xf32, #tpu.memory_space<vmem>>, vector<1x1x128xf32>
    %289 = vector.shape_cast %288 : vector<1x1x128xf32> to vector<1x128xf32>
    %cst_211 = arith.constant dense<0.000000e+00> : vector<24xf32>
    %290 = vector.multi_reduction <add>, %285, %cst_211 [1] : vector<24x128xf32> to vector<24xf32>
    %291 = vector.shape_cast %290 : vector<24xf32> to vector<24x1xf32>
    %cst_212 = arith.constant 3.125000e-02 : f32
    %292 = vector.broadcast %cst_212 : f32 to vector<24x1xf32>
    %293 = arith.mulf %291, %292 : vector<24x1xf32>
    %294 = arith.mulf %285, %285 : vector<24x128xf32>
    %cst_213 = arith.constant dense<0.000000e+00> : vector<24xf32>
    %295 = vector.multi_reduction <add>, %294, %cst_213 [1] : vector<24x128xf32> to vector<24xf32>
    %296 = vector.shape_cast %295 : vector<24xf32> to vector<24x1xf32>
    %cst_214 = arith.constant 3.125000e-02 : f32
    %297 = vector.broadcast %cst_214 : f32 to vector<24x1xf32>
    %298 = arith.mulf %296, %297 : vector<24x1xf32>
    %299 = arith.mulf %293, %293 : vector<24x1xf32>
    %300 = arith.subf %298, %299 : vector<24x1xf32>
    %301 = vector.broadcast %293 : vector<24x1xf32> to vector<24x128xf32>
    %302 = arith.subf %285, %301 : vector<24x128xf32>
    %cst_215 = arith.constant 9.99999974E-6 : f32
    %303 = vector.broadcast %cst_215 : f32 to vector<24x1xf32>
    %304 = arith.addf %300, %303 : vector<24x1xf32>
    %305 = math.rsqrt %304 : vector<24x1xf32>
    %306 = vector.broadcast %305 : vector<24x1xf32> to vector<24x128xf32>
    %307 = arith.mulf %302, %306 : vector<24x128xf32>
    %308 = vector.broadcast %287 : vector<1x128xf32> to vector<24x128xf32>
    %309 = arith.mulf %307, %308 : vector<24x128xf32>
    %310 = vector.broadcast %289 : vector<1x128xf32> to vector<24x128xf32>
    %311 = arith.addf %309, %310 : vector<24x128xf32>
    %c0_216 = arith.constant 0 : index
    %c0_217 = arith.constant 0 : index
    %312 = vector.load %arg22[%c0_216, %c0_217] : memref<24x128xf32, #tpu.memory_space<vmem>>, vector<24x128xf32>
    tpu.vector_store %arg22[%c0_216, %c0_217], %311 {strides = array<i32>} : memref<24x128xf32, #tpu.memory_space<vmem>>, vector<24x128xf32>,
    return
  }
  func.func @transform_0(%arg0: i32, %arg1: i32) -> (i32, i32) {
    %c0_i32 = arith.constant 0 : i32
    %c0_i32_0 = arith.constant 0 : i32
    return %arg0, %c0_i32 : i32, i32
  }
  func.func @transform_1(%arg0: i32, %arg1: i32) -> (i32, i32) {
    %c0_i32 = arith.constant 0 : i32
    %c0_i32_0 = arith.constant 0 : i32
    %c0_i32_1 = arith.constant 0 : i32
    return %c0_i32, %c0_i32_0 : i32, i32
  }
  func.func @transform_2(%arg0: i32, %arg1: i32) -> (i32, i32) {
    %c0_i32 = arith.constant 0 : i32
    %c0_i32_0 = arith.constant 0 : i32
    %c0_i32_1 = arith.constant 0 : i32
    return %c0_i32, %c0_i32_0 : i32, i32
  }
  func.func @transform_3(%arg0: i32, %arg1: i32) -> (i32, i32) {
    %c0_i32 = arith.constant 0 : i32
    %c0_i32_0 = arith.constant 0 : i32
    %c0_i32_1 = arith.constant 0 : i32
    return %c0_i32, %c0_i32_0 : i32, i32
  }
  func.func @transform_4(%arg0: i32, %arg1: i32) -> (i32, i32, i32, i32) {
    %c0_i32 = arith.constant 0 : i32
    %c0_i32_0 = arith.constant 0 : i32
    %c0_i32_1 = arith.constant 0 : i32
    %c0_i32_2 = arith.constant 0 : i32
    return %arg1, %c0_i32, %c0_i32_0, %c0_i32_1 : i32, i32, i32, i32
  }
  func.func @transform_5(%arg0: i32, %arg1: i32) -> (i32, i32, i32, i32) {
    %c0_i32 = arith.constant 0 : i32
    %c0_i32_0 = arith.constant 0 : i32
    %c0_i32_1 = arith.constant 0 : i32
    %c0_i32_2 = arith.constant 0 : i32
    return %arg1, %c0_i32, %c0_i32_0, %c0_i32_1 : i32, i32, i32, i32
  }
  func.func @transform_6(%arg0: i32, %arg1: i32) -> (i32, i32, i32, i32) {
    %c0_i32 = arith.constant 0 : i32
    %c0_i32_0 = arith.constant 0 : i32
    %c0_i32_1 = arith.constant 0 : i32
    %c0_i32_2 = arith.constant 0 : i32
    return %arg1, %c0_i32, %c0_i32_0, %c0_i32_1 : i32, i32, i32, i32
  }
  func.func @transform_7(%arg0: i32, %arg1: i32) -> (i32, i32, i32, i32) {
    %c0_i32 = arith.constant 0 : i32
    %c0_i32_0 = arith.constant 0 : i32
    %c0_i32_1 = arith.constant 0 : i32
    %c0_i32_2 = arith.constant 0 : i32
    return %arg1, %c0_i32, %c0_i32_0, %c0_i32_1 : i32, i32, i32, i32
  }
  func.func @transform_8(%arg0: i32, %arg1: i32) -> (i32, i32, i32, i32) {
    %c0_i32 = arith.constant 0 : i32
    %c0_i32_0 = arith.constant 0 : i32
    %c0_i32_1 = arith.constant 0 : i32
    %c0_i32_2 = arith.constant 0 : i32
    return %arg1, %c0_i32, %c0_i32_0, %c0_i32_1 : i32, i32, i32, i32
  }
  func.func @transform_9(%arg0: i32, %arg1: i32) -> (i32, i32, i32, i32) {
    %c0_i32 = arith.constant 0 : i32
    %c0_i32_0 = arith.constant 0 : i32
    %c0_i32_1 = arith.constant 0 : i32
    %c0_i32_2 = arith.constant 0 : i32
    return %arg1, %c0_i32, %c0_i32_0, %c0_i32_1 : i32, i32, i32, i32
  }
  func.func @transform_10(%arg0: i32, %arg1: i32) -> (i32, i32, i32, i32) {
    %c0_i32 = arith.constant 0 : i32
    %c0_i32_0 = arith.constant 0 : i32
    %c0_i32_1 = arith.constant 0 : i32
    %c0_i32_2 = arith.constant 0 : i32
    return %arg1, %c0_i32, %c0_i32_0, %c0_i32_1 : i32, i32, i32, i32
  }
  func.func @transform_11(%arg0: i32, %arg1: i32) -> (i32, i32, i32) {
    %c0_i32 = arith.constant 0 : i32
    %c0_i32_0 = arith.constant 0 : i32
    %c0_i32_1 = arith.constant 0 : i32
    return %arg1, %c0_i32, %c0_i32_0 : i32, i32, i32
  }
  func.func @transform_12(%arg0: i32, %arg1: i32) -> (i32, i32, i32) {
    %c0_i32 = arith.constant 0 : i32
    %c0_i32_0 = arith.constant 0 : i32
    %c0_i32_1 = arith.constant 0 : i32
    return %arg1, %c0_i32, %c0_i32_0 : i32, i32, i32
  }
  func.func @transform_13(%arg0: i32, %arg1: i32) -> (i32, i32, i32) {
    %c0_i32 = arith.constant 0 : i32
    %c0_i32_0 = arith.constant 0 : i32
    %c0_i32_1 = arith.constant 0 : i32
    return %arg1, %c0_i32, %c0_i32_0 : i32, i32, i32
  }
  func.func @transform_14(%arg0: i32, %arg1: i32) -> (i32, i32, i32) {
    %c0_i32 = arith.constant 0 : i32
    %c0_i32_0 = arith.constant 0 : i32
    %c0_i32_1 = arith.constant 0 : i32
    return %arg1, %c0_i32, %c0_i32_0 : i32, i32, i32
  }
  func.func @transform_15(%arg0: i32, %arg1: i32) -> (i32, i32, i32) {
    %c0_i32 = arith.constant 0 : i32
    %c0_i32_0 = arith.constant 0 : i32
    %c0_i32_1 = arith.constant 0 : i32
    return %arg1, %c0_i32, %c0_i32_0 : i32, i32, i32
  }
  func.func @transform_16(%arg0: i32, %arg1: i32) -> (i32, i32, i32) {
    %c0_i32 = arith.constant 0 : i32
    %c0_i32_0 = arith.constant 0 : i32
    %c0_i32_1 = arith.constant 0 : i32
    return %arg1, %c0_i32, %c0_i32_0 : i32, i32, i32
  }
  func.func @transform_17(%arg0: i32, %arg1: i32) -> (i32, i32, i32) {
    %c0_i32 = arith.constant 0 : i32
    %c0_i32_0 = arith.constant 0 : i32
    %c0_i32_1 = arith.constant 0 : i32
    return %arg1, %c0_i32, %c0_i32_0 : i32, i32, i32
  }
  func.func @transform_18(%arg0: i32, %arg1: i32) -> (i32, i32, i32) {
    %c0_i32 = arith.constant 0 : i32
    %c0_i32_0 = arith.constant 0 : i32
    %c0_i32_1 = arith.constant 0 : i32
    return %arg1, %c0_i32, %c0_i32_0 : i32, i32, i32
  }
  func.func @transform_19(%arg0: i32, %arg1: i32) -> (i32, i32, i32) {
    %c0_i32 = arith.constant 0 : i32
    %c0_i32_0 = arith.constant 0 : i32
    %c0_i32_1 = arith.constant 0 : i32
    return %arg1, %c0_i32, %c0_i32_0 : i32, i32, i32
  }
  func.func @transform_20(%arg0: i32, %arg1: i32) -> (i32, i32) {
    %c0_i32 = arith.constant 0 : i32
    %c0_i32_0 = arith.constant 0 : i32
    return %arg0, %c0_i32 : i32, i32
  }
}

</mosaic_0001>

<llo_original>
// kernel: tpu_custom_call.1
$region0: #{tpu_custom_call.1}
  #allocation0 [shape = 'u32[]', space=smem, size = 0x4, offset = 0x4, fixed_abs, tag = 'smem constant byte address 0x4 - core index']
  #allocation1 [shape = 'u32[144,128]{1,0:T(1,128)}', space=vmem, size = 0x12000, scoped, tag = 'internal scratch']
  #allocation2 [shape = 'f32[4,3,8,8]{3,2,1,0:T(8,128)}', space=vmem, size = 0xc000, scoped, tag = 'scratch operand']
  %s0 = inlined_call_operand.vmem [shape: f32[48,128], index: 0, kind: input, shape index: {}]
  %s1 = inlined_call_operand.vmem [shape: f32[24,128], index: 1, kind: input, shape index: {}]
  %s2 = inlined_call_operand.vmem [shape: bf16[128,128], index: 2, kind: input, shape index: {}]
  %s3 = inlined_call_operand.vmem [shape: f32[1,128], index: 3, kind: input, shape index: {}]
  %s4 = inlined_call_operand.vmem [shape: bf16[3,4,128,8], index: 4, kind: input, shape index: {}]
  %s5 = inlined_call_operand.vmem [shape: f32[3,4,1,8], index: 5, kind: input, shape index: {}]
  %s6 = inlined_call_operand.vmem [shape: bf16[3,4,128,8], index: 6, kind: input, shape index: {}]
  %s7 = inlined_call_operand.vmem [shape: f32[3,4,1,8], index: 7, kind: input, shape index: {}]
  %s8 = inlined_call_operand.vmem [shape: bf16[3,4,128,8], index: 8, kind: input, shape index: {}]
  %s9 = inlined_call_operand.vmem [shape: f32[3,4,1,8], index: 9, kind: input, shape index: {}]
  %s10 = inlined_call_operand.vmem [shape: bf16[3,4,8,128], index: 10, kind: input, shape index: {}]
  %s11 = inlined_call_operand.vmem [shape: f32[3,1,128], index: 11, kind: input, shape index: {}]
  %s12 = inlined_call_operand.vmem [shape: f32[3,1,128], index: 12, kind: input, shape index: {}]
  %s13 = inlined_call_operand.vmem [shape: f32[3,1,128], index: 13, kind: input, shape index: {}]
  %s14 = inlined_call_operand.vmem [shape: bf16[3,128,128], index: 14, kind: input, shape index: {}]
  %s15 = inlined_call_operand.vmem [shape: f32[3,1,128], index: 15, kind: input, shape index: {}]
  %s16 = inlined_call_operand.vmem [shape: bf16[3,128,128], index: 16, kind: input, shape index: {}]
  %s17 = inlined_call_operand.vmem [shape: f32[3,1,128], index: 17, kind: input, shape index: {}]
  %s18 = inlined_call_operand.vmem [shape: f32[3,1,128], index: 18, kind: input, shape index: {}]
  %s19 = inlined_call_operand.vmem [shape: f32[3,1,128], index: 19, kind: input, shape index: {}]
  %s20 = inlined_call_operand.hbm [shape: f32[48,128], index: 20, kind: output, shape index: {}]
  %s21 = sld [smem:[#allocation0]]
  $region133: #{tpu_custom_call.1} parent=0
    _
  %s23 = ssub.s32 1, %s21
  %s24 = scalar_select 0, %s23, %s21
  $region1: #{tpu_custom_call.1} parent=0
    #allocation3 [shape = 'u8[24576]{0}', space=vmem, size = 0x6000, scoped, tag = 'output window, operand 0']
    #allocation4 [shape = 's32[2]{0}', space=sflag, size = 0x8, scoped, tag = 'scoped memory for tpu_custom_call.1']
    %25 = vsyncpa [#allocation4], 0
    %s26 = scalar_lea.sflag [#allocation4], 1
    %27 = vsyncpa %s26, 0
    loop: start=0, step=1, limit=8
    $region2: #{tpu_custom_call.1} parent=1 // loop_pre_header
      _
    $region3: #{tpu_custom_call.1} parent=1 // loop_header
      %s29 = sphi 0, %s33
      %p30 = scmp.ge.s32.totalorder %s29, 8
      %s36 = sphi 0, %s48
      %s37 = sphi 0, %s44
      %s38 = sphi 0, %s36
      %s39 = sphi 0, %s37
      %s40 = sphi 0, %s38
      %s41 = sphi 0, %s39
      %s51 = sphi 0, %s53
      %s54 = sphi 0, %s51
      %s55 = sphi 0, %s54
      %s71 = sphi 0, %s55
      %s75 = sphi 0, %s75
      %s77 = sphi 0, %s75
      %s78 = sphi 0, %s77
      %s92 = sphi 0, %s78
      %s96 = sphi 0, %s96
      %s98 = sphi 0, %s96
      %s99 = sphi 0, %s98
      %s113 = sphi 0, %s99
      %s117 = sphi 0, %s117
      %s119 = sphi 0, %s117
      %s120 = sphi 0, %s119
      %s134 = sphi 0, %s120
      %s140 = sphi 0, %s142
      %s143 = sphi 0, %s140
      %s144 = sphi 0, %s143
      %s160 = sphi 0, %s144
      %s166 = sphi 0, %s168
      %s169 = sphi 0, %s166
      %s170 = sphi 0, %s169
      %s186 = sphi 0, %s170
      %s192 = sphi 0, %s194
      %s195 = sphi 0, %s192
      %s196 = sphi 0, %s195
      %s212 = sphi 0, %s196
      %s218 = sphi 0, %s220
      %s221 = sphi 0, %s218
      %s222 = sphi 0, %s221
      %s238 = sphi 0, %s222
      %s244 = sphi 0, %s246
      %s247 = sphi 0, %s244
      %s248 = sphi 0, %s247
      %s264 = sphi 0, %s248
      %s270 = sphi 0, %s272
      %s273 = sphi 0, %s270
      %s274 = sphi 0, %s273
      %s290 = sphi 0, %s274
      %s296 = sphi 0, %s298
      %s299 = sphi 0, %s296
      %s300 = sphi 0, %s299
      %s316 = sphi 0, %s300
      %s322 = sphi 0, %s324
      %s325 = sphi 0, %s322
      %s326 = sphi 0, %s325
      %s342 = sphi 0, %s326
      %s348 = sphi 0, %s350
      %s351 = sphi 0, %s348
      %s352 = sphi 0, %s351
      %s368 = sphi 0, %s352
      %s374 = sphi 0, %s376
      %s377 = sphi 0, %s374
      %s378 = sphi 0, %s377
      %s394 = sphi 0, %s378
      %s400 = sphi 0, %s402
      %s403 = sphi 0, %s400
      %s404 = sphi 0, %s403
      %s420 = sphi 0, %s404
      %s426 = sphi 0, %s428
      %s429 = sphi 0, %s426
      %s430 = sphi 0, %s429
      %s446 = sphi 0, %s430
      %s452 = sphi 0, %s454
      %s455 = sphi 0, %s452
      %s456 = sphi 0, %s455
      %s472 = sphi 0, %s456
      %s478 = sphi 0, %s480
      %s481 = sphi 0, %s478
      %s482 = sphi 0, %s481
      %s498 = sphi 0, %s482
      %s504 = sphi 0, %s506
      %s507 = sphi 0, %s504
      %s508 = sphi 0, %s507
      %s524 = sphi 0, %s508
      %s530 = sphi 0, %s532
      %s533 = sphi 0, %s530
      %s534 = sphi 0, %s533
      %s550 = sphi 0, %s534
      %s556 = sphi 0, %s558
      %s559 = sphi 0, %s556
      %s560 = sphi 0, %s559
      %s576 = sphi 0, %s560
    $region4: #{tpu_custom_call.1} parent=1 // loop_header_branch
      %32 = sbr.rel (%p30) target = $region8
    $region5: #{tpu_custom_call.1} parent=1 // loop_body
      %s34 = ssub.s32 %s29, 1
      %s35 = ssub.s32 %s29, 2
      %s42 = sadd.s32 1, %s37
      %p43 = scmp.ge.s32.totalorder %s42, 3
      %s44 = scalar_select %p43, 0, %s42
      %s45 = sadd.s32 1, %s36
      %s46 = scalar_select %p43, %s45, %s36
      %p47 = scmp.ge.s32.totalorder %s46, 2
      %s48 = scalar_select %p47, 0, %s46
      %s49 = ssub.s32 %s36, %s48
      %p50 = scmp.eq.s32.totalorder %s49, 0
      %s52 = sadd.s32 %s51, 1
      %s53 = scalar_select %p50, %s51, %s52
      %p56 = pneg %p50
      %p57 = scmp.eq.s32.totalorder %s29, 5
      %p58 = por %p56, %p57
      %p59 = scmp.ne.s32.totalorder %s51, %s54
      %p60 = scmp.eq.s32.totalorder %s29, 0
      %p61 = por %p59, %p60
      %p62 = scmp.ne.s32.totalorder %s51, %s54
      %p63 = scmp.eq.s32.totalorder %s34, 5
      %p64 = por %p62, %p63
      %p65 = scmp.ne.s32.totalorder %s54, %s55
      %p66 = scmp.eq.s32.totalorder %s34, 0
      %p67 = por %p65, %p66
      %p68 = scmp.ne.s32.totalorder %s54, %s55
      %p69 = scmp.eq.s32.totalorder %s35, 5
      %p70 = por %p68, %p69
      %p72 = scmp.ne.s32.totalorder %s55, %s71
      %p73 = scmp.eq.s32.totalorder %s35, 0
      %p74 = por %p72, %p73
      %s76 = sadd.s32 %s75, 1
      %p79 = scmp.eq.s32.totalorder %s29, 5
      %p80 = scmp.ne.s32.totalorder %s75, %s77
      %p81 = scmp.eq.s32.totalorder %s29, 0
      %p82 = por %p80, %p81
      %p83 = scmp.ne.s32.totalorder %s75, %s77
      %p84 = scmp.eq.s32.totalorder %s34, 5
      %p85 = por %p83, %p84
      %p86 = scmp.ne.s32.totalorder %s77, %s78
      %p87 = scmp.eq.s32.totalorder %s34, 0
      %p88 = por %p86, %p87
      %p89 = scmp.ne.s32.totalorder %s77, %s78
      %p90 = scmp.eq.s32.totalorder %s35, 5
      %p91 = por %p89, %p90
      %p93 = scmp.ne.s32.totalorder %s78, %s92
      %p94 = scmp.eq.s32.totalorder %s35, 0
      %p95 = por %p93, %p94
      %s97 = sadd.s32 %s96, 1
      %p100 = scmp.eq.s32.totalorder %s29, 5
      %p101 = scmp.ne.s32.totalorder %s96, %s98
      %p102 = scmp.eq.s32.totalorder %s29, 0
      %p103 = por %p101, %p102
      %p104 = scmp.ne.s32.totalorder %s96, %s98
      %p105 = scmp.eq.s32.totalorder %s34, 5
      %p106 = por %p104, %p105
      %p107 = scmp.ne.s32.totalorder %s98, %s99
      %p108 = scmp.eq.s32.totalorder %s34, 0
      %p109 = por %p107, %p108
      %p110 = scmp.ne.s32.totalorder %s98, %s99
      %p111 = scmp.eq.s32.totalorder %s35, 5
      %p112 = por %p110, %p111
      %p114 = scmp.ne.s32.totalorder %s99, %s113
      %p115 = scmp.eq.s32.totalorder %s35, 0
      %p116 = por %p114, %p115
      %s118 = sadd.s32 %s117, 1
      %p121 = scmp.eq.s32.totalorder %s29, 5
      %p122 = scmp.ne.s32.totalorder %s117, %s119
      %p123 = scmp.eq.s32.totalorder %s29, 0
      %p124 = por %p122, %p123
      %p125 = scmp.ne.s32.totalorder %s117, %s119
      %p126 = scmp.eq.s32.totalorder %s34, 5
      %p127 = por %p125, %p126
      %p128 = scmp.ne.s32.totalorder %s119, %s120
      %p129 = scmp.eq.s32.totalorder %s34, 0
      %p130 = por %p128, %p129
      %p131 = scmp.ne.s32.totalorder %s119, %s120
      %p132 = scmp.eq.s32.totalorder %s35, 5
      %p133 = por %p131, %p132
      %p135 = scmp.ne.s32.totalorder %s120, %s134
      %p136 = scmp.eq.s32.totalorder %s35, 0
      %p137 = por %p135, %p136
      %s138 = ssub.s32 %s37, %s44
      %p139 = scmp.eq.s32.totalorder %s138, 0
      %s141 = sadd.s32 %s140, 1
      %s142 = scalar_select %p139, %s140, %s141
      %p145 = pneg %p139
      %p146 = scmp.eq.s32.totalorder %s29, 5
      %p147 = por %p145, %p146
      %p148 = scmp.ne.s32.totalorder %s140, %s143
      %p149 = scmp.eq.s32.totalorder %s29, 0
      %p150 = por %p148, %p149
      %p151 = scmp.ne.s32.totalorder %s140, %s143
      %p152 = scmp.eq.s32.totalorder %s34, 5
      %p153 = por %p151, %p152
      %p154 = scmp.ne.s32.totalorder %s143, %s144
      %p155 = scmp.eq.s32.totalorder %s34, 0
      %p156 = por %p154, %p155
      %p157 = scmp.ne.s32.totalorder %s143, %s144
      %p158 = scmp.eq.s32.totalorder %s35, 5
      %p159 = por %p157, %p158
      %p161 = scmp.ne.s32.totalorder %s144, %s160
      %p162 = scmp.eq.s32.totalorder %s35, 0
      %p163 = por %p161, %p162
      %s164 = ssub.s32 %s37, %s44
      %p165 = scmp.eq.s32.totalorder %s164, 0
      %s167 = sadd.s32 %s166, 1
      %s168 = scalar_select %p165, %s166, %s167
      %p171 = pneg %p165
      %p172 = scmp.eq.s32.totalorder %s29, 5
      %p173 = por %p171, %p172
      %p174 = scmp.ne.s32.totalorder %s166, %s169
      %p175 = scmp.eq.s32.totalorder %s29, 0
      %p176 = por %p174, %p175
      %p177 = scmp.ne.s32.totalorder %s166, %s169
      %p178 = scmp.eq.s32.totalorder %s34, 5
      %p179 = por %p177, %p178
      %p180 = scmp.ne.s32.totalorder %s169, %s170
      %p181 = scmp.eq.s32.totalorder %s34, 0
      %p182 = por %p180, %p181
      %p183 = scmp.ne.s32.totalorder %s169, %s170
      %p184 = scmp.eq.s32.totalorder %s35, 5
      %p185 = por %p183, %p184
      %p187 = scmp.ne.s32.totalorder %s170, %s186
      %p188 = scmp.eq.s32.totalorder %s35, 0
      %p189 = por %p187, %p188
      %s190 = ssub.s32 %s37, %s44
      %p191 = scmp.eq.s32.totalorder %s190, 0
      %s193 = sadd.s32 %s192, 1
      %s194 = scalar_select %p191, %s192, %s193
      %p197 = pneg %p191
      %p198 = scmp.eq.s32.totalorder %s29, 5
      %p199 = por %p197, %p198
      %p200 = scmp.ne.s32.totalorder %s192, %s195
      %p201 = scmp.eq.s32.totalorder %s29, 0
      %p202 = por %p200, %p201
      %p203 = scmp.ne.s32.totalorder %s192, %s195
      %p204 = scmp.eq.s32.totalorder %s34, 5
      %p205 = por %p203, %p204
      %p206 = scmp.ne.s32.totalorder %s195, %s196
      %p207 = scmp.eq.s32.totalorder %s34, 0
      %p208 = por %p206, %p207
      %p209 = scmp.ne.s32.totalorder %s195, %s196
      %p210 = scmp.eq.s32.totalorder %s35, 5
      %p211 = por %p209, %p210
      %p213 = scmp.ne.s32.totalorder %s196, %s212
      %p214 = scmp.eq.s32.totalorder %s35, 0
      %p215 = por %p213, %p214
      %s216 = ssub.s32 %s37, %s44
      %p217 = scmp.eq.s32.totalorder %s216, 0
      %s219 = sadd.s32 %s218, 1
      %s220 = scalar_select %p217, %s218, %s219
      %p223 = pneg %p217
      %p224 = scmp.eq.s32.totalorder %s29, 5
      %p225 = por %p223, %p224
      %p226 = scmp.ne.s32.totalorder %s218, %s221
      %p227 = scmp.eq.s32.totalorder %s29, 0
      %p228 = por %p226, %p227
      %p229 = scmp.ne.s32.totalorder %s218, %s221
      %p230 = scmp.eq.s32.totalorder %s34, 5
      %p231 = por %p229, %p230
      %p232 = scmp.ne.s32.totalorder %s221, %s222
      %p233 = scmp.eq.s32.totalorder %s34, 0
      %p234 = por %p232, %p233
      %p235 = scmp.ne.s32.totalorder %s221, %s222
      %p236 = scmp.eq.s32.totalorder %s35, 5
      %p237 = por %p235, %p236
      %p239 = scmp.ne.s32.totalorder %s222, %s238
      %p240 = scmp.eq.s32.totalorder %s35, 0
      %p241 = por %p239, %p240
      %s242 = ssub.s32 %s37, %s44
      %p243 = scmp.eq.s32.totalorder %s242, 0
      %s245 = sadd.s32 %s244, 1
      %s246 = scalar_select %p243, %s244, %s245
      %p249 = pneg %p243
      %p250 = scmp.eq.s32.totalorder %s29, 5
      %p251 = por %p249, %p250
      %p252 = scmp.ne.s32.totalorder %s244, %s247
      %p253 = scmp.eq.s32.totalorder %s29, 0
      %p254 = por %p252, %p253
      %p255 = scmp.ne.s32.totalorder %s244, %s247
      %p256 = scmp.eq.s32.totalorder %s34, 5
      %p257 = por %p255, %p256
      %p258 = scmp.ne.s32.totalorder %s247, %s248
      %p259 = scmp.eq.s32.totalorder %s34, 0
      %p260 = por %p258, %p259
      %p261 = scmp.ne.s32.totalorder %s247, %s248
      %p262 = scmp.eq.s32.totalorder %s35, 5
      %p263 = por %p261, %p262
      %p265 = scmp.ne.s32.totalorder %s248, %s264
      %p266 = scmp.eq.s32.totalorder %s35, 0
      %p267 = por %p265, %p266
      %s268 = ssub.s32 %s37, %s44
      %p269 = scmp.eq.s32.totalorder %s268, 0
      %s271 = sadd.s32 %s270, 1
      %s272 = scalar_select %p269, %s270, %s271
      %p275 = pneg %p269
      %p276 = scmp.eq.s32.totalorder %s29, 5
      %p277 = por %p275, %p276
      %p278 = scmp.ne.s32.totalorder %s270, %s273
      %p279 = scmp.eq.s32.totalorder %s29, 0
      %p280 = por %p278, %p279
      %p281 = scmp.ne.s32.totalorder %s270, %s273
      %p282 = scmp.eq.s32.totalorder %s34, 5
      %p283 = por %p281, %p282
      %p284 = scmp.ne.s32.totalorder %s273, %s274
      %p285 = scmp.eq.s32.totalorder %s34, 0
      %p286 = por %p284, %p285
      %p287 = scmp.ne.s32.totalorder %s273, %s274
      %p288 = scmp.eq.s32.totalorder %s35, 5
      %p289 = por %p287, %p288
      %p291 = scmp.ne.s32.totalorder %s274, %s290
      %p292 = scmp.eq.s32.totalorder %s35, 0
      %p293 = por %p291, %p292
      %s294 = ssub.s32 %s37, %s44
      %p295 = scmp.eq.s32.totalorder %s294, 0
      %s297 = sadd.s32 %s296, 1
      %s298 = scalar_select %p295, %s296, %s297
      %p301 = pneg %p295
      %p302 = scmp.eq.s32.totalorder %s29, 5
      %p303 = por %p301, %p302
      %p304 = scmp.ne.s32.totalorder %s296, %s299
      %p305 = scmp.eq.s32.totalorder %s29, 0
      %p306 = por %p304, %p305
      %p307 = scmp.ne.s32.totalorder %s296, %s299
      %p308 = scmp.eq.s32.totalorder %s34, 5
      %p309 = por %p307, %p308
      %p310 = scmp.ne.s32.totalorder %s299, %s300
      %p311 = scmp.eq.s32.totalorder %s34, 0
      %p312 = por %p310, %p311
      %p313 = scmp.ne.s32.totalorder %s299, %s300
      %p314 = scmp.eq.s32.totalorder %s35, 5
      %p315 = por %p313, %p314
      %p317 = scmp.ne.s32.totalorder %s300, %s316
      %p318 = scmp.eq.s32.totalorder %s35, 0
      %p319 = por %p317, %p318
      %s320 = ssub.s32 %s37, %s44
      %p321 = scmp.eq.s32.totalorder %s320, 0
      %s323 = sadd.s32 %s322, 1
      %s324 = scalar_select %p321, %s322, %s323
      %p327 = pneg %p321
      %p328 = scmp.eq.s32.totalorder %s29, 5
      %p329 = por %p327, %p328
      %p330 = scmp.ne.s32.totalorder %s322, %s325
      %p331 = scmp.eq.s32.totalorder %s29, 0
      %p332 = por %p330, %p331
      %p333 = scmp.ne.s32.totalorder %s322, %s325
      %p334 = scmp.eq.s32.totalorder %s34, 5
      %p335 = por %p333, %p334
      %p336 = scmp.ne.s32.totalorder %s325, %s326
      %p337 = scmp.eq.s32.totalorder %s34, 0
      %p338 = por %p336, %p337
      %p339 = scmp.ne.s32.totalorder %s325, %s326
      %p340 = scmp.eq.s32.totalorder %s35, 5
      %p341 = por %p339, %p340
      %p343 = scmp.ne.s32.totalorder %s326, %s342
      %p344 = scmp.eq.s32.totalorder %s35, 0
      %p345 = por %p343, %p344
      %s346 = ssub.s32 %s37, %s44
      %p347 = scmp.eq.s32.totalorder %s346, 0
      %s349 = sadd.s32 %s348, 1
      %s350 = scalar_select %p347, %s348, %s349
      %p353 = pneg %p347
      %p354 = scmp.eq.s32.totalorder %s29, 5
      %p355 = por %p353, %p354
      %p356 = scmp.ne.s32.totalorder %s348, %s351
      %p357 = scmp.eq.s32.totalorder %s29, 0
      %p358 = por %p356, %p357
      %p359 = scmp.ne.s32.totalorder %s348, %s351
      %p360 = scmp.eq.s32.totalorder %s34, 5
      %p361 = por %p359, %p360
      %p362 = scmp.ne.s32.totalorder %s351, %s352
      %p363 = scmp.eq.s32.totalorder %s34, 0
      %p364 = por %p362, %p363
      %p365 = scmp.ne.s32.totalorder %s351, %s352
      %p366 = scmp.eq.s32.totalorder %s35, 5
      %p367 = por %p365, %p366
      %p369 = scmp.ne.s32.totalorder %s352, %s368
      %p370 = scmp.eq.s32.totalorder %s35, 0
      %p371 = por %p369, %p370
      %s372 = ssub.s32 %s37, %s44
      %p373 = scmp.eq.s32.totalorder %s372, 0
      %s375 = sadd.s32 %s374, 1
      %s376 = scalar_select %p373, %s374, %s375
      %p379 = pneg %p373
      %p380 = scmp.eq.s32.totalorder %s29, 5
      %p381 = por %p379, %p380
      %p382 = scmp.ne.s32.totalorder %s374, %s377
      %p383 = scmp.eq.s32.totalorder %s29, 0
      %p384 = por %p382, %p383
      %p385 = scmp.ne.s32.totalorder %s374, %s377
      %p386 = scmp.eq.s32.totalorder %s34, 5
      %p387 = por %p385, %p386
      %p388 = scmp.ne.s32.totalorder %s377, %s378
      %p389 = scmp.eq.s32.totalorder %s34, 0
      %p390 = por %p388, %p389
      %p391 = scmp.ne.s32.totalorder %s377, %s378
      %p392 = scmp.eq.s32.totalorder %s35, 5
      %p393 = por %p391, %p392
      %p395 = scmp.ne.s32.totalorder %s378, %s394
      %p396 = scmp.eq.s32.totalorder %s35, 0
      %p397 = por %p395, %p396
      %s398 = ssub.s32 %s37, %s44
      %p399 = scmp.eq.s32.totalorder %s398, 0
      %s401 = sadd.s32 %s400, 1
      %s402 = scalar_select %p399, %s400, %s401
      %p405 = pneg %p399
      %p406 = scmp.eq.s32.totalorder %s29, 5
      %p407 = por %p405, %p406
      %p408 = scmp.ne.s32.totalorder %s400, %s403
      %p409 = scmp.eq.s32.totalorder %s29, 0
      %p410 = por %p408, %p409
      %p411 = scmp.ne.s32.totalorder %s400, %s403
      %p412 = scmp.eq.s32.totalorder %s34, 5
      %p413 = por %p411, %p412
      %p414 = scmp.ne.s32.totalorder %s403, %s404
      %p415 = scmp.eq.s32.totalorder %s34, 0
      %p416 = por %p414, %p415
      %p417 = scmp.ne.s32.totalorder %s403, %s404
      %p418 = scmp.eq.s32.totalorder %s35, 5
      %p419 = por %p417, %p418
      %p421 = scmp.ne.s32.totalorder %s404, %s420
      %p422 = scmp.eq.s32.totalorder %s35, 0
      %p423 = por %p421, %p422
      %s424 = ssub.s32 %s37, %s44
      %p425 = scmp.eq.s32.totalorder %s424, 0
      %s427 = sadd.s32 %s426, 1
      %s428 = scalar_select %p425, %s426, %s427
      %p431 = pneg %p425
      %p432 = scmp.eq.s32.totalorder %s29, 5
      %p433 = por %p431, %p432
      %p434 = scmp.ne.s32.totalorder %s426, %s429
      %p435 = scmp.eq.s32.totalorder %s29, 0
      %p436 = por %p434, %p435
      %p437 = scmp.ne.s32.totalorder %s426, %s429
      %p438 = scmp.eq.s32.totalorder %s34, 5
      %p439 = por %p437, %p438
      %p440 = scmp.ne.s32.totalorder %s429, %s430
      %p441 = scmp.eq.s32.totalorder %s34, 0
      %p442 = por %p440, %p441
      %p443 = scmp.ne.s32.totalorder %s429, %s430
      %p444 = scmp.eq.s32.totalorder %s35, 5
      %p445 = por %p443, %p444
      %p447 = scmp.ne.s32.totalorder %s430, %s446
      %p448 = scmp.eq.s32.totalorder %s35, 0
      %p449 = por %p447, %p448
      %s450 = ssub.s32 %s37, %s44
      %p451 = scmp.eq.s32.totalorder %s450, 0
      %s453 = sadd.s32 %s452, 1
      %s454 = scalar_select %p451, %s452, %s453
      %p457 = pneg %p451
      %p458 = scmp.eq.s32.totalorder %s29, 5
      %p459 = por %p457, %p458
      %p460 = scmp.ne.s32.totalorder %s452, %s455
      %p461 = scmp.eq.s32.totalorder %s29, 0
      %p462 = por %p460, %p461
      %p463 = scmp.ne.s32.totalorder %s452, %s455
      %p464 = scmp.eq.s32.totalorder %s34, 5
      %p465 = por %p463, %p464
      %p466 = scmp.ne.s32.totalorder %s455, %s456
      %p467 = scmp.eq.s32.totalorder %s34, 0
      %p468 = por %p466, %p467
      %p469 = scmp.ne.s32.totalorder %s455, %s456
      %p470 = scmp.eq.s32.totalorder %s35, 5
      %p471 = por %p469, %p470
      %p473 = scmp.ne.s32.totalorder %s456, %s472
      %p474 = scmp.eq.s32.totalorder %s35, 0
      %p475 = por %p473, %p474
      %s476 = ssub.s32 %s37, %s44
      %p477 = scmp.eq.s32.totalorder %s476, 0
      %s479 = sadd.s32 %s478, 1
      %s480 = scalar_select %p477, %s478, %s479
      %p483 = pneg %p477
      %p484 = scmp.eq.s32.totalorder %s29, 5
      %p485 = por %p483, %p484
      %p486 = scmp.ne.s32.totalorder %s478, %s481
      %p487 = scmp.eq.s32.totalorder %s29, 0
      %p488 = por %p486, %p487
      %p489 = scmp.ne.s32.totalorder %s478, %s481
      %p490 = scmp.eq.s32.totalorder %s34, 5
      %p491 = por %p489, %p490
      %p492 = scmp.ne.s32.totalorder %s481, %s482
      %p493 = scmp.eq.s32.totalorder %s34, 0
      %p494 = por %p492, %p493
      %p495 = scmp.ne.s32.totalorder %s481, %s482
      %p496 = scmp.eq.s32.totalorder %s35, 5
      %p497 = por %p495, %p496
      %p499 = scmp.ne.s32.totalorder %s482, %s498
      %p500 = scmp.eq.s32.totalorder %s35, 0
      %p501 = por %p499, %p500
      %s502 = ssub.s32 %s37, %s44
      %p503 = scmp.eq.s32.totalorder %s502, 0
      %s505 = sadd.s32 %s504, 1
      %s506 = scalar_select %p503, %s504, %s505
      %p509 = pneg %p503
      %p510 = scmp.eq.s32.totalorder %s29, 5
      %p511 = por %p509, %p510
      %p512 = scmp.ne.s32.totalorder %s504, %s507
      %p513 = scmp.eq.s32.totalorder %s29, 0
      %p514 = por %p512, %p513
      %p515 = scmp.ne.s32.totalorder %s504, %s507
      %p516 = scmp.eq.s32.totalorder %s34, 5
      %p517 = por %p515, %p516
      %p518 = scmp.ne.s32.totalorder %s507, %s508
      %p519 = scmp.eq.s32.totalorder %s34, 0
      %p520 = por %p518, %p519
      %p521 = scmp.ne.s32.totalorder %s507, %s508
      %p522 = scmp.eq.s32.totalorder %s35, 5
      %p523 = por %p521, %p522
      %p525 = scmp.ne.s32.totalorder %s508, %s524
      %p526 = scmp.eq.s32.totalorder %s35, 0
      %p527 = por %p525, %p526
      %s528 = ssub.s32 %s37, %s44
      %p529 = scmp.eq.s32.totalorder %s528, 0
      %s531 = sadd.s32 %s530, 1
      %s532 = scalar_select %p529, %s530, %s531
      %p535 = pneg %p529
      %p536 = scmp.eq.s32.totalorder %s29, 5
      %p537 = por %p535, %p536
      %p538 = scmp.ne.s32.totalorder %s530, %s533
      %p539 = scmp.eq.s32.totalorder %s29, 0
      %p540 = por %p538, %p539
      %p541 = scmp.ne.s32.totalorder %s530, %s533
      %p542 = scmp.eq.s32.totalorder %s34, 5
      %p543 = por %p541, %p542
      %p544 = scmp.ne.s32.totalorder %s533, %s534
      %p545 = scmp.eq.s32.totalorder %s34, 0
      %p546 = por %p544, %p545
      %p547 = scmp.ne.s32.totalorder %s533, %s534
      %p548 = scmp.eq.s32.totalorder %s35, 5
      %p549 = por %p547, %p548
      %p551 = scmp.ne.s32.totalorder %s534, %s550
      %p552 = scmp.eq.s32.totalorder %s35, 0
      %p553 = por %p551, %p552
      %s554 = ssub.s32 %s36, %s48
      %p555 = scmp.eq.s32.totalorder %s554, 0
      %s557 = sadd.s32 %s556, 1
      %s558 = scalar_select %p555, %s556, %s557
      %p561 = pneg %p555
      %p562 = scmp.eq.s32.totalorder %s29, 5
      %p563 = por %p561, %p562
      %p564 = scmp.ne.s32.totalorder %s556, %s559
      %p565 = scmp.eq.s32.totalorder %s29, 0
      %p566 = por %p564, %p565
      %p567 = scmp.ne.s32.totalorder %s556, %s559
      %p568 = scmp.eq.s32.totalorder %s34, 5
      %p569 = por %p567, %p568
      %p570 = scmp.ne.s32.totalorder %s559, %s560
      %p571 = scmp.eq.s32.totalorder %s34, 0
      %p572 = por %p570, %p571
      %p573 = scmp.ne.s32.totalorder %s559, %s560
      %p574 = scmp.eq.s32.totalorder %s35, 5
      %p575 = por %p573, %p574
      %p577 = scmp.ne.s32.totalorder %s560, %s576
      %p578 = scmp.eq.s32.totalorder %s35, 0
      %p579 = por %p577, %p578
      %p580 = scmp.le.s32.totalorder 1, %s29
      %p581 = scmp.lt.s32.totalorder %s29, 7
      %p582 = pnand %p580, %p581
      %p583 = pneg %p582
      // Predicated region
      $region9: #{tpu_custom_call.1} parent=5 // pred_check
        _
      $region10: #{tpu_custom_call.1} parent=5 // pred_check_branch
        %585 = sbr.rel (%p582) target = $region12
      $region11: #{tpu_custom_call.1} parent=5 // pred_region
        %s586 = ssub.s32 %s29, 1
        // Predicated region
        $region13: #{tpu_custom_call.1} parent=11 // pred_check
          %p587 = pneg %p88
        $region14: #{tpu_custom_call.1} parent=11 // pred_check_branch
          %589 = sbr.rel (%p587) target = $region16
        $region15: #{tpu_custom_call.1} parent=11 // pred_region
          _
        $region16: #{tpu_custom_call.1} parent=11 // pred_fallthru
          _
        // Predicated region
        $region17: #{tpu_custom_call.1} parent=11 // pred_check
          %p590 = pneg %p109
        $region18: #{tpu_custom_call.1} parent=11 // pred_check_branch
          %592 = sbr.rel (%p590) target = $region20
        $region19: #{tpu_custom_call.1} parent=11 // pred_region
          _
        $region20: #{tpu_custom_call.1} parent=11 // pred_fallthru
          _
        // Predicated region
        $region21: #{tpu_custom_call.1} parent=11 // pred_check
          %p593 = pneg %p130
        $region22: #{tpu_custom_call.1} parent=11 // pred_check_branch
          %595 = sbr.rel (%p593) target = $region24
        $region23: #{tpu_custom_call.1} parent=11 // pred_region
          _
        $region24: #{tpu_custom_call.1} parent=11 // pred_fallthru
          _
      $region12: #{tpu_custom_call.1} parent=5 // pred_fallthru
        _
      %p596 = scmp.lt.s32.totalorder %s29, 6
      // Predicated region
      $region25: #{tpu_custom_call.1} parent=5 // pred_check
        %p597 = pneg %p596
      $region26: #{tpu_custom_call.1} parent=5 // pred_check_branch
        %599 = sbr.rel (%p597) target = $region28
      $region27: #{tpu_custom_call.1} parent=5 // pred_region
        // Predicated region
        $region29: #{tpu_custom_call.1} parent=27 // pred_check
          %p600 = pneg %p61
        $region30: #{tpu_custom_call.1} parent=27 // pred_check_branch
          %602 = sbr.rel (%p600) target = $region32
        $region31: #{tpu_custom_call.1} parent=27 // pred_region
          %s603 = smul.u32 3, %s36
          %p604 = scmp.lt.s32.totalorder %s603, 5
          %s605 = scalar_select %p604, %s603, 5
          %s606 = smul.addr %s605, 8
          %s607 = scalar_lea.vmem %s0, %s606
          %s608 = smul.u32 3, %s36
        $region32: #{tpu_custom_call.1} parent=27 // pred_fallthru
          _
        // Predicated region
        $region33: #{tpu_custom_call.1} parent=27 // pred_check
          %p609 = pneg %p150
        $region34: #{tpu_custom_call.1} parent=27 // pred_check_branch
          %611 = sbr.rel (%p609) target = $region36
        $region35: #{tpu_custom_call.1} parent=27 // pred_region
          %p612 = scmp.lt.s32.totalorder %s37, 2
          %s613 = scalar_select %p612, %s37, 2
          %s614 = smul.addr %s613, 64
          %s615 = smul.addr %s614, 4
          %s616 = scalar_lea.vmem %s4, %s615
        $region36: #{tpu_custom_call.1} parent=27 // pred_fallthru
          _
        // Predicated region
        $region37: #{tpu_custom_call.1} parent=27 // pred_check
          %p617 = pneg %p176
        $region38: #{tpu_custom_call.1} parent=27 // pred_check_branch
          %619 = sbr.rel (%p617) target = $region40
        $region39: #{tpu_custom_call.1} parent=27 // pred_region
          %p620 = scmp.lt.s32.totalorder %s37, 2
          %s621 = scalar_select %p620, %s37, 2
          %s622 = smul.addr %s621, 4
          %s623 = scalar_lea.vmem %s5, %s622
        $region40: #{tpu_custom_call.1} parent=27 // pred_fallthru
          _
        // Predicated region
        $region41: #{tpu_custom_call.1} parent=27 // pred_check
          %p624 = pneg %p202
        $region42: #{tpu_custom_call.1} parent=27 // pred_check_branch
          %626 = sbr.rel (%p624) target = $region44
        $region43: #{tpu_custom_call.1} parent=27 // pred_region
          %p627 = scmp.lt.s32.totalorder %s37, 2
          %s628 = scalar_select %p627, %s37, 2
          %s629 = smul.addr %s628, 64
          %s630 = smul.addr %s629, 4
          %s631 = scalar_lea.vmem %s6, %s630
        $region44: #{tpu_custom_call.1} parent=27 // pred_fallthru
          _
        // Predicated region
        $region45: #{tpu_custom_call.1} parent=27 // pred_check
          %p632 = pneg %p228
        $region46: #{tpu_custom_call.1} parent=27 // pred_check_branch
          %634 = sbr.rel (%p632) target = $region48
        $region47: #{tpu_custom_call.1} parent=27 // pred_region
          %p635 = scmp.lt.s32.totalorder %s37, 2
          %s636 = scalar_select %p635, %s37, 2
          %s637 = smul.addr %s636, 4
          %s638 = scalar_lea.vmem %s7, %s637
        $region48: #{tpu_custom_call.1} parent=27 // pred_fallthru
          _
        // Predicated region
        $region49: #{tpu_custom_call.1} parent=27 // pred_check
          %p639 = pneg %p254
        $region50: #{tpu_custom_call.1} parent=27 // pred_check_branch
          %641 = sbr.rel (%p639) target = $region52
        $region51: #{tpu_custom_call.1} parent=27 // pred_region
          %p642 = scmp.lt.s32.totalorder %s37, 2
          %s643 = scalar_select %p642, %s37, 2
          %s644 = smul.addr %s643, 64
          %s645 = smul.addr %s644, 4
          %s646 = scalar_lea.vmem %s8, %s645
        $region52: #{tpu_custom_call.1} parent=27 // pred_fallthru
          _
        // Predicated region
        $region53: #{tpu_custom_call.1} parent=27 // pred_check
          %p647 = pneg %p280
        $region54: #{tpu_custom_call.1} parent=27 // pred_check_branch
          %649 = sbr.rel (%p647) target = $region56
        $region55: #{tpu_custom_call.1} parent=27 // pred_region
          %p650 = scmp.lt.s32.totalorder %s37, 2
          %s651 = scalar_select %p650, %s37, 2
          %s652 = smul.addr %s651, 4
          %s653 = scalar_lea.vmem %s9, %s652
        $region56: #{tpu_custom_call.1} parent=27 // pred_fallthru
          _
        // Predicated region
        $region57: #{tpu_custom_call.1} parent=27 // pred_check
          %p654 = pneg %p306
        $region58: #{tpu_custom_call.1} parent=27 // pred_check_branch
          %656 = sbr.rel (%p654) target = $region60
        $region59: #{tpu_custom_call.1} parent=27 // pred_region
          %p657 = scmp.lt.s32.totalorder %s37, 2
          %s658 = scalar_select %p657, %s37, 2
          %s659 = smul.addr %s658, 4
          %s660 = smul.addr %s659, 4
          %s661 = scalar_lea.vmem %s10, %s660
        $region60: #{tpu_custom_call.1} parent=27 // pred_fallthru
          _
        // Predicated region
        $region61: #{tpu_custom_call.1} parent=27 // pred_check
          %p662 = pneg %p332
        $region62: #{tpu_custom_call.1} parent=27 // pred_check_branch
          %664 = sbr.rel (%p662) target = $region64
        $region63: #{tpu_custom_call.1} parent=27 // pred_region
          %p665 = scmp.lt.s32.totalorder %s37, 2
          %s666 = scalar_select %p665, %s37, 2
          %s667 = scalar_lea.vmem %s11, %s666
        $region64: #{tpu_custom_call.1} parent=27 // pred_fallthru
          _
        // Predicated region
        $region65: #{tpu_custom_call.1} parent=27 // pred_check
          %p668 = pneg %p358
        $region66: #{tpu_custom_call.1} parent=27 // pred_check_branch
          %670 = sbr.rel (%p668) target = $region68
        $region67: #{tpu_custom_call.1} parent=27 // pred_region
          %p671 = scmp.lt.s32.totalorder %s37, 2
          %s672 = scalar_select %p671, %s37, 2
          %s673 = scalar_lea.vmem %s12, %s672
        $region68: #{tpu_custom_call.1} parent=27 // pred_fallthru
          _
        // Predicated region
        $region69: #{tpu_custom_call.1} parent=27 // pred_check
          %p674 = pneg %p384
        $region70: #{tpu_custom_call.1} parent=27 // pred_check_branch
          %676 = sbr.rel (%p674) target = $region72
        $region71: #{tpu_custom_call.1} parent=27 // pred_region
          %p677 = scmp.lt.s32.totalorder %s37, 2
          %s678 = scalar_select %p677, %s37, 2
          %s679 = scalar_lea.vmem %s13, %s678
        $region72: #{tpu_custom_call.1} parent=27 // pred_fallthru
          _
        // Predicated region
        $region73: #{tpu_custom_call.1} parent=27 // pred_check
          %p680 = pneg %p410
        $region74: #{tpu_custom_call.1} parent=27 // pred_check_branch
          %682 = sbr.rel (%p680) target = $region76
        $region75: #{tpu_custom_call.1} parent=27 // pred_region
          %p683 = scmp.lt.s32.totalorder %s37, 2
          %s684 = scalar_select %p683, %s37, 2
          %s685 = smul.addr %s684, 16
          %s686 = smul.addr %s685, 4
          %s687 = scalar_lea.vmem %s14, %s686
        $region76: #{tpu_custom_call.1} parent=27 // pred_fallthru
          _
        // Predicated region
        $region77: #{tpu_custom_call.1} parent=27 // pred_check
          %p688 = pneg %p436
        $region78: #{tpu_custom_call.1} parent=27 // pred_check_branch
          %690 = sbr.rel (%p688) target = $region80
        $region79: #{tpu_custom_call.1} parent=27 // pred_region
          %p691 = scmp.lt.s32.totalorder %s37, 2
          %s692 = scalar_select %p691, %s37, 2
          %s693 = scalar_lea.vmem %s15, %s692
        $region80: #{tpu_custom_call.1} parent=27 // pred_fallthru
          _
        // Predicated region
        $region81: #{tpu_custom_call.1} parent=27 // pred_check
          %p694 = pneg %p462
        $region82: #{tpu_custom_call.1} parent=27 // pred_check_branch
          %696 = sbr.rel (%p694) target = $region84
        $region83: #{tpu_custom_call.1} parent=27 // pred_region
          %p697 = scmp.lt.s32.totalorder %s37, 2
          %s698 = scalar_select %p697, %s37, 2
          %s699 = smul.addr %s698, 16
          %s700 = smul.addr %s699, 4
          %s701 = scalar_lea.vmem %s16, %s700
        $region84: #{tpu_custom_call.1} parent=27 // pred_fallthru
          _
        // Predicated region
        $region85: #{tpu_custom_call.1} parent=27 // pred_check
          %p702 = pneg %p488
        $region86: #{tpu_custom_call.1} parent=27 // pred_check_branch
          %704 = sbr.rel (%p702) target = $region88
        $region87: #{tpu_custom_call.1} parent=27 // pred_region
          %p705 = scmp.lt.s32.totalorder %s37, 2
          %s706 = scalar_select %p705, %s37, 2
          %s707 = scalar_lea.vmem %s17, %s706
        $region88: #{tpu_custom_call.1} parent=27 // pred_fallthru
          _
        // Predicated region
        $region89: #{tpu_custom_call.1} parent=27 // pred_check
          %p708 = pneg %p514
        $region90: #{tpu_custom_call.1} parent=27 // pred_check_branch
          %710 = sbr.rel (%p708) target = $region92
        $region91: #{tpu_custom_call.1} parent=27 // pred_region
          %p711 = scmp.lt.s32.totalorder %s37, 2
          %s712 = scalar_select %p711, %s37, 2
          %s713 = scalar_lea.vmem %s18, %s712
        $region92: #{tpu_custom_call.1} parent=27 // pred_fallthru
          _
        // Predicated region
        $region93: #{tpu_custom_call.1} parent=27 // pred_check
          %p714 = pneg %p540
        $region94: #{tpu_custom_call.1} parent=27 // pred_check_branch
          %716 = sbr.rel (%p714) target = $region96
        $region95: #{tpu_custom_call.1} parent=27 // pred_region
          %p717 = scmp.lt.s32.totalorder %s37, 2
          %s718 = scalar_select %p717, %s37, 2
          %s719 = scalar_lea.vmem %s19, %s718
        $region96: #{tpu_custom_call.1} parent=27 // pred_fallthru
          _
      $region28: #{tpu_custom_call.1} parent=5 // pred_fallthru
        _
      %p720 = scmp.le.s32.totalorder 1, %s29
      %p721 = scmp.lt.s32.totalorder %s29, 7
      %p722 = pnand %p720, %p721
      %p723 = pneg %p722
      // Predicated region
      $region97: #{tpu_custom_call.1} parent=5 // pred_check
        _
      $region98: #{tpu_custom_call.1} parent=5 // pred_check_branch
        %725 = sbr.rel (%p722) target = $region100
      $region99: #{tpu_custom_call.1} parent=5 // pred_region
        %s726 = ssub.s32 %s29, 1
        %s727 = smul.u32 3, %s38
        %p728 = scmp.lt.s32.totalorder %s727, 5
        %s729 = scalar_select %p728, %s727, 5
        %s730 = smul.addr %s729, 8
        %s731 = scalar_lea.vmem %s0, %s730
        %p732 = pneg %p67
        %p733 = pneg %p64
        %p734 = pneg %p88
        %p735 = pneg %p85
        %p736 = pneg %p109
        %p737 = pneg %p106
        %p738 = pneg %p130
        %p739 = pneg %p127
        %p740 = scmp.lt.s32.totalorder %s39, 2
        %s741 = scalar_select %p740, %s39, 2
        %s742 = smul.addr %s741, 64
        %s743 = smul.addr %s742, 4
        %s744 = scalar_lea.vmem %s4, %s743
        %p745 = pneg %p156
        %p746 = pneg %p153
        %p747 = scmp.lt.s32.totalorder %s39, 2
        %s748 = scalar_select %p747, %s39, 2
        %s749 = smul.addr %s748, 4
        %s750 = scalar_lea.vmem %s5, %s749
        %p751 = pneg %p182
        %p752 = pneg %p179
        %p753 = scmp.lt.s32.totalorder %s39, 2
        %s754 = scalar_select %p753, %s39, 2
        %s755 = smul.addr %s754, 64
        %s756 = smul.addr %s755, 4
        %s757 = scalar_lea.vmem %s6, %s756
        %p758 = pneg %p208
        %p759 = pneg %p205
        %p760 = scmp.lt.s32.totalorder %s39, 2
        %s761 = scalar_select %p760, %s39, 2
        %s762 = smul.addr %s761, 4
        %s763 = scalar_lea.vmem %s7, %s762
        %p764 = pneg %p234
        %p765 = pneg %p231
        %p766 = scmp.lt.s32.totalorder %s39, 2
        %s767 = scalar_select %p766, %s39, 2
        %s768 = smul.addr %s767, 64
        %s769 = smul.addr %s768, 4
        %s770 = scalar_lea.vmem %s8, %s769
        %p771 = pneg %p260
        %p772 = pneg %p257
        %p773 = scmp.lt.s32.totalorder %s39, 2
        %s774 = scalar_select %p773, %s39, 2
        %s775 = smul.addr %s774, 4
        %s776 = scalar_lea.vmem %s9, %s775
        %p777 = pneg %p286
        %p778 = pneg %p283
        %p779 = scmp.lt.s32.totalorder %s39, 2
        %s780 = scalar_select %p779, %s39, 2
        %s781 = smul.addr %s780, 4
        %s782 = smul.addr %s781, 4
        %s783 = scalar_lea.vmem %s10, %s782
        %p784 = pneg %p312
        %p785 = pneg %p309
        %p786 = scmp.lt.s32.totalorder %s39, 2
        %s787 = scalar_select %p786, %s39, 2
        %s788 = scalar_lea.vmem %s11, %s787
        %p789 = pneg %p338
        %p790 = pneg %p335
        %p791 = scmp.lt.s32.totalorder %s39, 2
        %s792 = scalar_select %p791, %s39, 2
        %s793 = scalar_lea.vmem %s12, %s792
        %p794 = pneg %p364
        %p795 = pneg %p361
        %p796 = scmp.lt.s32.totalorder %s39, 2
        %s797 = scalar_select %p796, %s39, 2
        %s798 = scalar_lea.vmem %s13, %s797
        %p799 = pneg %p390
        %p800 = pneg %p387
        %p801 = scmp.lt.s32.totalorder %s39, 2
        %s802 = scalar_select %p801, %s39, 2
        %s803 = smul.addr %s802, 16
        %s804 = smul.addr %s803, 4
        %s805 = scalar_lea.vmem %s14, %s804
        %p806 = pneg %p416
        %p807 = pneg %p413
        %p808 = scmp.lt.s32.totalorder %s39, 2
        %s809 = scalar_select %p808, %s39, 2
        %s810 = scalar_lea.vmem %s15, %s809
        %p811 = pneg %p442
        %p812 = pneg %p439
        %p813 = scmp.lt.s32.totalorder %s39, 2
        %s814 = scalar_select %p813, %s39, 2
        %s815 = smul.addr %s814, 16
        %s816 = smul.addr %s815, 4
        %s817 = scalar_lea.vmem %s16, %s816
        %p818 = pneg %p468
        %p819 = pneg %p465
        %p820 = scmp.lt.s32.totalorder %s39, 2
        %s821 = scalar_select %p820, %s39, 2
        %s822 = scalar_lea.vmem %s17, %s821
        %p823 = pneg %p494
        %p824 = pneg %p491
        %p825 = scmp.lt.s32.totalorder %s39, 2
        %s826 = scalar_select %p825, %s39, 2
        %s827 = scalar_lea.vmem %s18, %s826
        %p828 = pneg %p520
        %p829 = pneg %p517
        %p830 = scmp.lt.s32.totalorder %s39, 2
        %s831 = scalar_select %p830, %s39, 2
        %s832 = scalar_lea.vmem %s19, %s831
        %p833 = pneg %p546
        %p834 = pneg %p543
        %p835 = pneg %p572
        %p836 = pneg %p569
        %s837 = sand.u32 %s559, 1
        %s838 = scalar_lea.sflag [#allocation4], %s837
        %s839 = sand.u32 %s559, 1
        %s840 = smul.addr %s839, 24
        %s841 = scalar_lea.vmem [#allocation3], %s840
        %s842 = smul.u32 3, %s38
        %p843 = scmp.lt.s32.totalorder %s842, 5
        %s844 = scalar_select %p843, %s842, 5
        %s845 = smul.addr %s844, 8
        %s846 = scalar_lea.vmem %s0, %s845
        %s847 = smul.u32 3, %s38
        %p848 = scmp.lt.s32.totalorder %s39, 2
        %s849 = scalar_select %p848, %s39, 2
        %s850 = smul.addr %s849, 64
        %s851 = smul.addr %s850, 4
        %s852 = scalar_lea.vmem %s4, %s851
        %p853 = scmp.lt.s32.totalorder %s39, 2
        %s854 = scalar_select %p853, %s39, 2
        %s855 = smul.addr %s854, 4
        %s856 = scalar_lea.vmem %s5, %s855
        %p857 = scmp.lt.s32.totalorder %s39, 2
        %s858 = scalar_select %p857, %s39, 2
        %s859 = smul.addr %s858, 64
        %s860 = smul.addr %s859, 4
        %s861 = scalar_lea.vmem %s6, %s860
        %p862 = scmp.lt.s32.totalorder %s39, 2
        %s863 = scalar_select %p862, %s39, 2
        %s864 = smul.addr %s863, 4
        %s865 = scalar_lea.vmem %s7, %s864
        %p866 = scmp.lt.s32.totalorder %s39, 2
        %s867 = scalar_select %p866, %s39, 2
        %s868 = smul.addr %s867, 64
        %s869 = smul.addr %s868, 4
        %s870 = scalar_lea.vmem %s8, %s869
        %p871 = scmp.lt.s32.totalorder %s39, 2
        %s872 = scalar_select %p871, %s39, 2
        %s873 = smul.addr %s872, 4
        %s874 = scalar_lea.vmem %s9, %s873
        %p875 = scmp.lt.s32.totalorder %s39, 2
        %s876 = scalar_select %p875, %s39, 2
        %s877 = smul.addr %s876, 4
        %s878 = smul.addr %s877, 4
        %s879 = scalar_lea.vmem %s10, %s878
        %p880 = scmp.lt.s32.totalorder %s39, 2
        %s881 = scalar_select %p880, %s39, 2
        %s882 = scalar_lea.vmem %s11, %s881
        %p883 = scmp.lt.s32.totalorder %s39, 2
        %s884 = scalar_select %p883, %s39, 2
        %s885 = scalar_lea.vmem %s12, %s884
        %p886 = scmp.lt.s32.totalorder %s39, 2
        %s887 = scalar_select %p886, %s39, 2
        %s888 = scalar_lea.vmem %s13, %s887
        %p889 = scmp.lt.s32.totalorder %s39, 2
        %s890 = scalar_select %p889, %s39, 2
        %s891 = smul.addr %s890, 16
        %s892 = smul.addr %s891, 4
        %s893 = scalar_lea.vmem %s14, %s892
        %p894 = scmp.lt.s32.totalorder %s39, 2
        %s895 = scalar_select %p894, %s39, 2
        %s896 = scalar_lea.vmem %s15, %s895
        %p897 = scmp.lt.s32.totalorder %s39, 2
        %s898 = scalar_select %p897, %s39, 2
        %s899 = smul.addr %s898, 16
        %s900 = smul.addr %s899, 4
        %s901 = scalar_lea.vmem %s16, %s900
        %p902 = scmp.lt.s32.totalorder %s39, 2
        %s903 = scalar_select %p902, %s39, 2
        %s904 = scalar_lea.vmem %s17, %s903
        %p905 = scmp.lt.s32.totalorder %s39, 2
        %s906 = scalar_select %p905, %s39, 2
        %s907 = scalar_lea.vmem %s18, %s906
        %p908 = scmp.lt.s32.totalorder %s39, 2
        %s909 = scalar_select %p908, %s39, 2
        %s910 = scalar_lea.vmem %s19, %s909
        %s911 = smul.u32 3, %s38
        %p913 = scmp.eq.s32.totalorder %s39, 0
        // Predicated region
        $region101: #{tpu_custom_call.1} parent=99 // pred_check
          %p914 = pneg %p913
        $region102: #{tpu_custom_call.1} parent=99 // pred_check_branch
          %916 = sbr.rel (%p914) target = $region104
        $region103: #{tpu_custom_call.1} parent=99 // pred_region
          %v917 = vld [vmem:[%s846] sm:$0xff]
          %v918 = vld [vmem:[%s846 + $0x8] sm:$0xff]
          %v919 = vld [vmem:[%s846 + $0x10] sm:$0xff]
          %v920 = vpack.c.bf16 %v918, %v917
          %v921 = vpack.c.bf16 %v919, %v919
          %v922 = vld [vmem:[%s2] sm:$0xf]
          %v923 = vld [vmem:[%s2 + $0x4] sm:$0xf]
          %v924 = vld [vmem:[%s2 + $0x8] sm:$0xf]
          %v925 = vld [vmem:[%s2 + $0xc] sm:$0xf]
          %v926 = vld [vmem:[%s2 + $0x10] sm:$0xf]
          %v927 = vld [vmem:[%s2 + $0x14] sm:$0xf]
          %v928 = vld [vmem:[%s2 + $0x18] sm:$0xf]
          %v929 = vld [vmem:[%s2 + $0x1c] sm:$0xf]
          %v930 = vld [vmem:[%s2 + $0x20] sm:$0xf]
          %v931 = vld [vmem:[%s2 + $0x24] sm:$0xf]
          %v932 = vld [vmem:[%s2 + $0x28] sm:$0xf]
          %v933 = vld [vmem:[%s2 + $0x2c] sm:$0xf]
          %v934 = vld [vmem:[%s2 + $0x30] sm:$0xf]
          %v935 = vld [vmem:[%s2 + $0x34] sm:$0xf]
          %v936 = vld [vmem:[%s2 + $0x38] sm:$0xf]
          %v937 = vld [vmem:[%s2 + $0x3c] sm:$0xf]
          %v938 = vld [vmem:[%s3] sm:$0x1]
          %v940 = vlaneseq
          %v941 = vshrl.u32 %v940, 7
          %v942 = vsub.s32 0, %v941
          %v943 = vrot.slane %v938, %v942
          %v961 = vunpack.c.l.b16 %v922
          %v962 = vunpack.c.l.b16 %v923
          %v963 = vunpack.c.l.b16 %v924
          %v964 = vunpack.c.l.b16 %v925
          %v965 = vunpack.c.l.b16 %v926
          %v966 = vunpack.c.l.b16 %v927
          %v967 = vunpack.c.l.b16 %v928
          %v968 = vunpack.c.l.b16 %v929
          %v969 = vunpack.c.l.b16 %v930
          %v970 = vunpack.c.l.b16 %v931
          %v971 = vunpack.c.l.b16 %v932
          %v972 = vunpack.c.l.b16 %v933
          %v973 = vunpack.c.l.b16 %v934
          %v974 = vunpack.c.l.b16 %v935
          %v975 = vunpack.c.l.b16 %v936
          %v976 = vunpack.c.l.b16 %v937
          %v977 = vpack.c.b16 %v962, %v961
          %v978 = vpack.c.b16 %v964, %v963
          %v979 = vpack.c.b16 %v966, %v965
          %v980 = vpack.c.b16 %v968, %v967
          %v981 = vpack.c.b16 %v970, %v969
          %v982 = vpack.c.b16 %v972, %v971
          %v983 = vpack.c.b16 %v974, %v973
          %v984 = vpack.c.b16 %v976, %v975
          %993 = vmatprep.subr.bf16.mxu0 0
          %994 = vmatpush1.bf16.msra.mxu0 %v977
          %995 = vmatprep.subr.bf16.mxu0 0
          %996 = vmatpush1.bf16.msra.mxu0 %v978
          %997 = vmatprep.subr.bf16.mxu0 0
          %998 = vmatpush1.bf16.msra.mxu0 %v979
          %999 = vmatprep.subr.bf16.mxu0 0
          %1000 = vmatpush1.bf16.msra.mxu0 %v980
          %1001 = vmatprep.subr.bf16.mxu0 0
          %1002 = vmatpush1.bf16.msra.mxu0 %v981
          %1003 = vmatprep.subr.bf16.mxu0 0
          %1004 = vmatpush1.bf16.msra.mxu0 %v982
          %1005 = vmatprep.subr.bf16.mxu0 0
          %1006 = vmatpush1.bf16.msra.mxu0 %v983
          %1007 = vmatprep.subr.bf16.mxu0 0
          %1008 = vmatpush1.bf16.msra.mxu0 %v984
          %1009 = vmatprep.subr.bf16.mxu0 0
          %1010 = vmatpush1.bf16.msra.mxu0 0
          %1011 = vmatprep.subr.bf16.mxu0 0
          %1012 = vmatpush1.bf16.msra.mxu0 0
          %1013 = vmatprep.subr.bf16.mxu0 0
          %1014 = vmatpush1.bf16.msra.mxu0 0
          %1015 = vmatprep.subr.bf16.mxu0 0
          %1016 = vmatpush1.bf16.msra.mxu0 0
          %1017 = vmatprep.subr.bf16.mxu0 0
          %1018 = vmatpush1.bf16.msra.mxu0 0
          %1019 = vmatprep.subr.bf16.mxu0 0
          %1020 = vmatpush1.bf16.msra.mxu0 0
          %1021 = vmatprep.subr.bf16.mxu0 0
          %1022 = vmatpush1.bf16.msra.mxu0 0
          %1023 = vmatprep.subr.bf16.mxu0 0
          %1024 = vmatpush1.bf16.msra.mxu0 0
          %1025 = vmatprep.mubr.bf16.mxu0 0
          %1026 = vmatmul.mubr.bf16.gmra.mrb[0].mxu0 %v920
          %v1027 = vpop.f32.mrb[0].mxu0
          %v1028 = vadd.f32 %v943, %v1027
          %v1029 = vpop.f32.mrb[0].mxu0
          %v1030 = vpop.f32.mrb[0].mxu0
          %v1031 = vadd.f32 %v943, %v1030
          %v1032 = vpop.f32.mrb[0].mxu0
          %1033 = vmatprep.mubr.bf16.mxu0 0
          %1034 = vmatmul.mubr.bf16.gmra.mrb[0].mxu0 %v921
          %v1035 = vpop.f32.mrb[0].mxu0
          %v1036 = vadd.f32 %v943, %v1035
          %v1037 = vpop.f32.mrb[0].mxu0
          %v1038 = vpop.f32.mrb[0].mxu0
          %v1039 = vpop.f32.mrb[0].mxu0
          %1040 = vdwg.mxu0
          %v1041 = vld [vmem:[%s1] sm:$0xff]
          %v1042 = vld [vmem:[%s1 + $0x8] sm:$0xff]
          %v1043 = vld [vmem:[%s1 + $0x10] sm:$0xff]
          %v1044 = vadd.f32 %v1028, %v1041
          %v1045 = vadd.f32 %v1031, %v1042
          %v1046 = vadd.f32 %v1036, %v1043
          %1047 = vst [vmem:[%s841] sm:$0xff] %v1044
          %1048 = vst [vmem:[%s841 + $0x8] sm:$0xff] %v1045
          %1049 = vst [vmem:[%s841 + $0x10] sm:$0xff] %v1046
          %vm1050 = vcmask 64512
          %1051 = vst.msk [vmem:[#allocation2] sm:$0xff] %vm1050, 0.0
          %1052 = vst.msk [vmem:[#allocation2 + $0x8] sm:$0xff] %vm1050, 0.0
          %1053 = vst.msk [vmem:[#allocation2 + $0x10] sm:$0xff] %vm1050, 0.0
          %1054 = vst.msk [vmem:[#allocation2 + $0x18] sm:$0xff] %vm1050, 0.0
          %1055 = vst.msk [vmem:[#allocation2 + $0x20] sm:$0xff] %vm1050, 0.0
          %1056 = vst.msk [vmem:[#allocation2 + $0x28] sm:$0xff] %vm1050, 0.0
          %1057 = vst.msk [vmem:[#allocation2 + $0x30] sm:$0xff] %vm1050, 0.0
          %1058 = vst.msk [vmem:[#allocation2 + $0x38] sm:$0xff] %vm1050, 0.0
          %1059 = vst.msk [vmem:[#allocation2 + $0x40] sm:$0xff] %vm1050, 0.0
          %1060 = vst.msk [vmem:[#allocation2 + $0x48] sm:$0xff] %vm1050, 0.0
          %1061 = vst.msk [vmem:[#allocation2 + $0x50] sm:$0xff] %vm1050, 0.0
          %1062 = vst.msk [vmem:[#allocation2 + $0x58] sm:$0xff] %vm1050, 0.0
        $region104: #{tpu_custom_call.1} parent=99 // pred_fallthru
          _
        %v1063 = vld [vmem:[%s841] sm:$0xff]
        %v1064 = vld [vmem:[%s841 + $0x8] sm:$0xff]
        %v1065 = vld [vmem:[%s841 + $0x10] sm:$0xff]
        %v1066 = vpack.c.bf16 %v1064, %v1063
        %v1067 = vpack.c.bf16 %v1065, %v1065
        %v1068 = vld [vmem:[%s852] sm:$0xf]
        %v1069 = vld [vmem:[%s852 + $0x4] sm:$0xf]
        %v1070 = vld [vmem:[%s852 + $0x8] sm:$0xf]
        %v1071 = vld [vmem:[%s852 + $0xc] sm:$0xf]
        %v1072 = vld [vmem:[%s852 + $0x10] sm:$0xf]
        %v1073 = vld [vmem:[%s852 + $0x14] sm:$0xf]
        %v1074 = vld [vmem:[%s852 + $0x18] sm:$0xf]
        %v1075 = vld [vmem:[%s852 + $0x1c] sm:$0xf]
        %v1076 = vld [vmem:[%s852 + $0x20] sm:$0xf]
        %v1077 = vld [vmem:[%s852 + $0x24] sm:$0xf]
        %v1078 = vld [vmem:[%s852 + $0x28] sm:$0xf]
        %v1079 = vld [vmem:[%s852 + $0x2c] sm:$0xf]
        %v1080 = vld [vmem:[%s852 + $0x30] sm:$0xf]
        %v1081 = vld [vmem:[%s852 + $0x34] sm:$0xf]
        %v1082 = vld [vmem:[%s852 + $0x38] sm:$0xf]
        %v1083 = vld [vmem:[%s852 + $0x3c] sm:$0xf]
        %v1084 = vld [vmem:[%s856] sm:$0x1]
        %v1086 = vlaneseq
        %v1087 = vshrl.u32 %v1086, 7
        %v1088 = vsub.s32 0, %v1087
        %v1089 = vrot.slane %v1084, %v1088
        %v1107 = vunpack.c.l.b16 %v1068
        %v1108 = vunpack.c.l.b16 %v1069
        %v1109 = vunpack.c.l.b16 %v1070
        %v1110 = vunpack.c.l.b16 %v1071
        %v1111 = vunpack.c.l.b16 %v1072
        %v1112 = vunpack.c.l.b16 %v1073
        %v1113 = vunpack.c.l.b16 %v1074
        %v1114 = vunpack.c.l.b16 %v1075
        %v1115 = vunpack.c.l.b16 %v1076
        %v1116 = vunpack.c.l.b16 %v1077
        %v1117 = vunpack.c.l.b16 %v1078
        %v1118 = vunpack.c.l.b16 %v1079
        %v1119 = vunpack.c.l.b16 %v1080
        %v1120 = vunpack.c.l.b16 %v1081
        %v1121 = vunpack.c.l.b16 %v1082
        %v1122 = vunpack.c.l.b16 %v1083
        %v1123 = vpack.c.b16 %v1108, %v1107
        %v1124 = vpack.c.b16 %v1110, %v1109
        %v1125 = vpack.c.b16 %v1112, %v1111
        %v1126 = vpack.c.b16 %v1114, %v1113
        %v1127 = vpack.c.b16 %v1116, %v1115
        %v1128 = vpack.c.b16 %v1118, %v1117
        %v1129 = vpack.c.b16 %v1120, %v1119
        %v1130 = vpack.c.b16 %v1122, %v1121
        %1139 = vmatprep.subr.bf16.mxu0 0
        %1140 = vmatpush1.bf16.msra.mxu0 %v1123
        %1141 = vmatprep.subr.bf16.mxu0 0
        %1142 = vmatpush1.bf16.msra.mxu0 %v1124
        %1143 = vmatprep.subr.bf16.mxu0 0
        %1144 = vmatpush1.bf16.msra.mxu0 %v1125
        %1145 = vmatprep.subr.bf16.mxu0 0
        %1146 = vmatpush1.bf16.msra.mxu0 %v1126
        %1147 = vmatprep.subr.bf16.mxu0 0
        %1148 = vmatpush1.bf16.msra.mxu0 %v1127
        %1149 = vmatprep.subr.bf16.mxu0 0
        %1150 = vmatpush1.bf16.msra.mxu0 %v1128
        %1151 = vmatprep.subr.bf16.mxu0 0
        %1152 = vmatpush1.bf16.msra.mxu0 %v1129
        %1153 = vmatprep.subr.bf16.mxu0 0
        %1154 = vmatpush1.bf16.msra.mxu0 %v1130
        %1155 = vmatprep.subr.bf16.mxu0 0
        %1156 = vmatpush1.bf16.msra.mxu0 0
        %1157 = vmatprep.subr.bf16.mxu0 0
        %1158 = vmatpush1.bf16.msra.mxu0 0
        %1159 = vmatprep.subr.bf16.mxu0 0
        %1160 = vmatpush1.bf16.msra.mxu0 0
        %1161 = vmatprep.subr.bf16.mxu0 0
        %1162 = vmatpush1.bf16.msra.mxu0 0
        %1163 = vmatprep.subr.bf16.mxu0 0
        %1164 = vmatpush1.bf16.msra.mxu0 0
        %1165 = vmatprep.subr.bf16.mxu0 0
        %1166 = vmatpush1.bf16.msra.mxu0 0
        %1167 = vmatprep.subr.bf16.mxu0 0
        %1168 = vmatpush1.bf16.msra.mxu0 0
        %1169 = vmatprep.subr.bf16.mxu0 0
        %1170 = vmatpush1.bf16.msra.mxu0 0
        %1171 = vmatprep.mubr.bf16.mxu0 0
        %1172 = vmatmul.mubr.bf16.gmra.mrb[0].mxu0 %v1066
        %v1173 = vpop.f32.mrb[0].mxu0
        %v1174 = vadd.f32 %v1089, %v1173
        %v1175 = vpop.f32.mrb[0].mxu0
        %v1176 = vpop.f32.mrb[0].mxu0
        %v1177 = vadd.f32 %v1089, %v1176
        %v1178 = vpop.f32.mrb[0].mxu0
        %1179 = vmatprep.mubr.bf16.mxu0 0
        %1180 = vmatmul.mubr.bf16.gmra.mrb[0].mxu0 %v1067
        %v1181 = vpop.f32.mrb[0].mxu0
        %v1182 = vadd.f32 %v1089, %v1181
        %v1183 = vpop.f32.mrb[0].mxu0
        %v1184 = vpop.f32.mrb[0].mxu0
        %v1185 = vpop.f32.mrb[0].mxu0
        %1186 = vdwg.mxu0
        %v1187 = vld [vmem:[%s861] sm:$0xf]
        %v1188 = vld [vmem:[%s861 + $0x4] sm:$0xf]
        %v1189 = vld [vmem:[%s861 + $0x8] sm:$0xf]
        %v1190 = vld [vmem:[%s861 + $0xc] sm:$0xf]
        %v1191 = vld [vmem:[%s861 + $0x10] sm:$0xf]
        %v1192 = vld [vmem:[%s861 + $0x14] sm:$0xf]
        %v1193 = vld [vmem:[%s861 + $0x18] sm:$0xf]
        %v1194 = vld [vmem:[%s861 + $0x1c] sm:$0xf]
        %v1195 = vld [vmem:[%s861 + $0x20] sm:$0xf]
        %v1196 = vld [vmem:[%s861 + $0x24] sm:$0xf]
        %v1197 = vld [vmem:[%s861 + $0x28] sm:$0xf]
        %v1198 = vld [vmem:[%s861 + $0x2c] sm:$0xf]
        %v1199 = vld [vmem:[%s861 + $0x30] sm:$0xf]
        %v1200 = vld [vmem:[%s861 + $0x34] sm:$0xf]
        %v1201 = vld [vmem:[%s861 + $0x38] sm:$0xf]
        %v1202 = vld [vmem:[%s861 + $0x3c] sm:$0xf]
        %v1203 = vld [vmem:[%s865] sm:$0x1]
        %v1205 = vlaneseq
        %v1206 = vshrl.u32 %v1205, 7
        %v1207 = vsub.s32 0, %v1206
        %v1208 = vrot.slane %v1203, %v1207
        %v1226 = vunpack.c.l.b16 %v1187
        %v1227 = vunpack.c.l.b16 %v1188
        %v1228 = vunpack.c.l.b16 %v1189
        %v1229 = vunpack.c.l.b16 %v1190
        %v1230 = vunpack.c.l.b16 %v1191
        %v1231 = vunpack.c.l.b16 %v1192
        %v1232 = vunpack.c.l.b16 %v1193
        %v1233 = vunpack.c.l.b16 %v1194
        %v1234 = vunpack.c.l.b16 %v1195
        %v1235 = vunpack.c.l.b16 %v1196
        %v1236 = vunpack.c.l.b16 %v1197
        %v1237 = vunpack.c.l.b16 %v1198
        %v1238 = vunpack.c.l.b16 %v1199
        %v1239 = vunpack.c.l.b16 %v1200
        %v1240 = vunpack.c.l.b16 %v1201
        %v1241 = vunpack.c.l.b16 %v1202
        %v1242 = vpack.c.b16 %v1227, %v1226
        %v1243 = vpack.c.b16 %v1229, %v1228
        %v1244 = vpack.c.b16 %v1231, %v1230
        %v1245 = vpack.c.b16 %v1233, %v1232
        %v1246 = vpack.c.b16 %v1235, %v1234
        %v1247 = vpack.c.b16 %v1237, %v1236
        %v1248 = vpack.c.b16 %v1239, %v1238
        %v1249 = vpack.c.b16 %v1241, %v1240
        %1258 = vmatprep.subr.bf16.mxu0 0
        %1259 = vmatpush1.bf16.msra.mxu0 %v1242
        %1260 = vmatprep.subr.bf16.mxu0 0
        %1261 = vmatpush1.bf16.msra.mxu0 %v1243
        %1262 = vmatprep.subr.bf16.mxu0 0
        %1263 = vmatpush1.bf16.msra.mxu0 %v1244
        %1264 = vmatprep.subr.bf16.mxu0 0
        %1265 = vmatpush1.bf16.msra.mxu0 %v1245
        %1266 = vmatprep.subr.bf16.mxu0 0
        %1267 = vmatpush1.bf16.msra.mxu0 %v1246
        %1268 = vmatprep.subr.bf16.mxu0 0
        %1269 = vmatpush1.bf16.msra.mxu0 %v1247
        %1270 = vmatprep.subr.bf16.mxu0 0
        %1271 = vmatpush1.bf16.msra.mxu0 %v1248
        %1272 = vmatprep.subr.bf16.mxu0 0
        %1273 = vmatpush1.bf16.msra.mxu0 %v1249
        %1274 = vmatprep.subr.bf16.mxu0 0
        %1275 = vmatpush1.bf16.msra.mxu0 0
        %1276 = vmatprep.subr.bf16.mxu0 0
        %1277 = vmatpush1.bf16.msra.mxu0 0
        %1278 = vmatprep.subr.bf16.mxu0 0
        %1279 = vmatpush1.bf16.msra.mxu0 0
        %1280 = vmatprep.subr.bf16.mxu0 0
        %1281 = vmatpush1.bf16.msra.mxu0 0
        %1282 = vmatprep.subr.bf16.mxu0 0
        %1283 = vmatpush1.bf16.msra.mxu0 0
        %1284 = vmatprep.subr.bf16.mxu0 0
        %1285 = vmatpush1.bf16.msra.mxu0 0
        %1286 = vmatprep.subr.bf16.mxu0 0
        %1287 = vmatpush1.bf16.msra.mxu0 0
        %1288 = vmatprep.subr.bf16.mxu0 0
        %1289 = vmatpush1.bf16.msra.mxu0 0
        %1290 = vmatprep.mubr.bf16.mxu0 0
        %1291 = vmatmul.mubr.bf16.gmra.mrb[0].mxu0 %v1066
        %v1292 = vpop.f32.mrb[0].mxu0
        %v1293 = vadd.f32 %v1208, %v1292
        %v1294 = vpop.f32.mrb[0].mxu0
        %v1295 = vpop.f32.mrb[0].mxu0
        %v1296 = vadd.f32 %v1208, %v1295
        %v1297 = vpop.f32.mrb[0].mxu0
        %1298 = vmatprep.mubr.bf16.mxu0 0
        %1299 = vmatmul.mubr.bf16.gmra.mrb[0].mxu0 %v1067
        %v1300 = vpop.f32.mrb[0].mxu0
        %v1301 = vadd.f32 %v1208, %v1300
        %v1302 = vpop.f32.mrb[0].mxu0
        %v1303 = vpop.f32.mrb[0].mxu0
        %v1304 = vpop.f32.mrb[0].mxu0
        %1305 = vdwg.mxu0
        %v1306 = vld [vmem:[%s870] sm:$0xf]
        %v1307 = vld [vmem:[%s870 + $0x4] sm:$0xf]
        %v1308 = vld [vmem:[%s870 + $0x8] sm:$0xf]
        %v1309 = vld [vmem:[%s870 + $0xc] sm:$0xf]
        %v1310 = vld [vmem:[%s870 + $0x10] sm:$0xf]
        %v1311 = vld [vmem:[%s870 + $0x14] sm:$0xf]
        %v1312 = vld [vmem:[%s870 + $0x18] sm:$0xf]
        %v1313 = vld [vmem:[%s870 + $0x1c] sm:$0xf]
        %v1314 = vld [vmem:[%s870 + $0x20] sm:$0xf]
        %v1315 = vld [vmem:[%s870 + $0x24] sm:$0xf]
        %v1316 = vld [vmem:[%s870 + $0x28] sm:$0xf]
        %v1317 = vld [vmem:[%s870 + $0x2c] sm:$0xf]
        %v1318 = vld [vmem:[%s870 + $0x30] sm:$0xf]
        %v1319 = vld [vmem:[%s870 + $0x34] sm:$0xf]
        %v1320 = vld [vmem:[%s870 + $0x38] sm:$0xf]
        %v1321 = vld [vmem:[%s870 + $0x3c] sm:$0xf]
        %v1322 = vld [vmem:[%s874] sm:$0x1]
        %v1324 = vlaneseq
        %v1325 = vshrl.u32 %v1324, 7
        %v1326 = vsub.s32 0, %v1325
        %v1327 = vrot.slane %v1322, %v1326
        %v1345 = vunpack.c.l.b16 %v1306
        %v1346 = vunpack.c.l.b16 %v1307
        %v1347 = vunpack.c.l.b16 %v1308
        %v1348 = vunpack.c.l.b16 %v1309
        %v1349 = vunpack.c.l.b16 %v1310
        %v1350 = vunpack.c.l.b16 %v1311
        %v1351 = vunpack.c.l.b16 %v1312
        %v1352 = vunpack.c.l.b16 %v1313
        %v1353 = vunpack.c.l.b16 %v1314
        %v1354 = vunpack.c.l.b16 %v1315
        %v1355 = vunpack.c.l.b16 %v1316
        %v1356 = vunpack.c.l.b16 %v1317
        %v1357 = vunpack.c.l.b16 %v1318
        %v1358 = vunpack.c.l.b16 %v1319
        %v1359 = vunpack.c.l.b16 %v1320
        %v1360 = vunpack.c.l.b16 %v1321
        %v1361 = vpack.c.b16 %v1346, %v1345
        %v1362 = vpack.c.b16 %v1348, %v1347
        %v1363 = vpack.c.b16 %v1350, %v1349
        %v1364 = vpack.c.b16 %v1352, %v1351
        %v1365 = vpack.c.b16 %v1354, %v1353
        %v1366 = vpack.c.b16 %v1356, %v1355
        %v1367 = vpack.c.b16 %v1358, %v1357
        %v1368 = vpack.c.b16 %v1360, %v1359
        %1377 = vmatprep.subr.bf16.mxu0 0
        %1378 = vmatpush1.bf16.msra.mxu0 %v1361
        %1379 = vmatprep.subr.bf16.mxu0 0
        %1380 = vmatpush1.bf16.msra.mxu0 %v1362
        %1381 = vmatprep.subr.bf16.mxu0 0
        %1382 = vmatpush1.bf16.msra.mxu0 %v1363
        %1383 = vmatprep.subr.bf16.mxu0 0
        %1384 = vmatpush1.bf16.msra.mxu0 %v1364
        %1385 = vmatprep.subr.bf16.mxu0 0
        %1386 = vmatpush1.bf16.msra.mxu0 %v1365
        %1387 = vmatprep.subr.bf16.mxu0 0
        %1388 = vmatpush1.bf16.msra.mxu0 %v1366
        %1389 = vmatprep.subr.bf16.mxu0 0
        %1390 = vmatpush1.bf16.msra.mxu0 %v1367
        %1391 = vmatprep.subr.bf16.mxu0 0
        %1392 = vmatpush1.bf16.msra.mxu0 %v1368
        %1393 = vmatprep.subr.bf16.mxu0 0
        %1394 = vmatpush1.bf16.msra.mxu0 0
        %1395 = vmatprep.subr.bf16.mxu0 0
        %1396 = vmatpush1.bf16.msra.mxu0 0
        %1397 = vmatprep.subr.bf16.mxu0 0
        %1398 = vmatpush1.bf16.msra.mxu0 0
        %1399 = vmatprep.subr.bf16.mxu0 0
        %1400 = vmatpush1.bf16.msra.mxu0 0
        %1401 = vmatprep.subr.bf16.mxu0 0
        %1402 = vmatpush1.bf16.msra.mxu0 0
        %1403 = vmatprep.subr.bf16.mxu0 0
        %1404 = vmatpush1.bf16.msra.mxu0 0
        %1405 = vmatprep.subr.bf16.mxu0 0
        %1406 = vmatpush1.bf16.msra.mxu0 0
        %1407 = vmatprep.subr.bf16.mxu0 0
        %1408 = vmatpush1.bf16.msra.mxu0 0
        %1409 = vmatprep.mubr.bf16.mxu0 0
        %1410 = vmatmul.mubr.bf16.gmra.mrb[0].mxu0 %v1066
        %v1411 = vpop.f32.mrb[0].mxu0
        %v1412 = vadd.f32 %v1327, %v1411
        %v1413 = vpop.f32.mrb[0].mxu0
        %v1414 = vpop.f32.mrb[0].mxu0
        %v1415 = vadd.f32 %v1327, %v1414
        %v1416 = vpop.f32.mrb[0].mxu0
        %1417 = vmatprep.mubr.bf16.mxu0 0
        %1418 = vmatmul.mubr.bf16.gmra.mrb[0].mxu0 %v1067
        %v1419 = vpop.f32.mrb[0].mxu0
        %v1420 = vadd.f32 %v1327, %v1419
        %v1421 = vpop.f32.mrb[0].mxu0
        %v1422 = vpop.f32.mrb[0].mxu0
        %v1423 = vpop.f32.mrb[0].mxu0
        %1424 = vdwg.mxu0
        %v1425 = vpack.c.bf16 %v1174, %v1174
        %v1426 = vpack.c.bf16 %v1177, %v1177
        %v1427 = vpack.c.bf16 %v1182, %v1182
        %v1428 = vpack.c.bf16 %v1293, %v1293
        %v1429 = vpack.c.bf16 %v1296, %v1296
        %v1430 = vpack.c.bf16 %v1301, %v1301
        %vm1431 = vcmask 64512
        %v1433 = vsel %vm1431, %v1425, 0
        %v1436 = vsel %vm1431, %v1428, 0
        %1438 = vmatprep.subr.bf16.mxu0 0
        %1439 = vmatpush1.bf16.xpose.msra.mxu0 %v1436
        %1440 = vmatprep.subr.bf16.mxu0 0
        %1441 = vmatpush1.bf16.xpose.msra.mxu0 0
        %1442 = vmatprep.subr.bf16.mxu0 0
        %1443 = vmatpush1.bf16.xpose.msra.mxu0 0
        %1444 = vmatprep.subr.bf16.mxu0 0
        %1445 = vmatpush1.bf16.xpose.msra.mxu0 0
        %1446 = vmatprep.subr.bf16.mxu0 0
        %1447 = vmatpush1.bf16.xpose.msra.mxu0 0
        %1448 = vmatprep.subr.bf16.mxu0 0
        %1449 = vmatpush1.bf16.xpose.msra.mxu0 0
        %1450 = vmatprep.subr.bf16.mxu0 0
        %1451 = vmatpush1.bf16.xpose.msra.mxu0 0
        %1452 = vmatprep.subr.bf16.mxu0 0
        %1453 = vmatpush1.bf16.xpose.msra.mxu0 0
        %1454 = vmatprep.subr.bf16.mxu0 0
        %1455 = vmatpush1.bf16.xpose.msra.mxu0 0
        %1456 = vmatprep.subr.bf16.mxu0 0
        %1457 = vmatpush1.bf16.xpose.msra.mxu0 0
        %1458 = vmatprep.subr.bf16.mxu0 0
        %1459 = vmatpush1.bf16.xpose.msra.mxu0 0
        %1460 = vmatprep.subr.bf16.mxu0 0
        %1461 = vmatpush1.bf16.xpose.msra.mxu0 0
        %1462 = vmatprep.subr.bf16.mxu0 0
        %1463 = vmatpush1.bf16.xpose.msra.mxu0 0
        %1464 = vmatprep.subr.bf16.mxu0 0
        %1465 = vmatpush1.bf16.xpose.msra.mxu0 0
        %1466 = vmatprep.subr.bf16.mxu0 0
        %1467 = vmatpush1.bf16.xpose.msra.mxu0 0
        %1468 = vmatprep.subr.bf16.mxu0 0
        %1469 = vmatpush1.bf16.xpose.msra.mxu0 0
        %1470 = vmatprep.mubr.bf16.mxu0 0
        %1471 = vmatmul.mubr.bf16.gmra.mrb[0].mxu0 %v1433
        %v1472 = vpop.f32.mrb[0].mxu0
        %v1473 = vadd.f32 0.0, %v1472
        %v1474 = vpop.f32.mrb[0].mxu0
        %v1475 = vpop.f32.mrb[0].mxu0
        %v1476 = vpop.f32.mrb[0].mxu0
        %1477 = vdwg.mxu0
        %v1479 = vsel %vm1431, %v1426, 0
        %v1482 = vsel %vm1431, %v1429, 0
        %1484 = vmatprep.subr.bf16.mxu0 0
        %1485 = vmatpush1.bf16.xpose.msra.mxu0 %v1482
        %1486 = vmatprep.subr.bf16.mxu0 0
        %1487 = vmatpush1.bf16.xpose.msra.mxu0 0
        %1488 = vmatprep.subr.bf16.mxu0 0
        %1489 = vmatpush1.bf16.xpose.msra.mxu0 0
        %1490 = vmatprep.subr.bf16.mxu0 0
        %1491 = vmatpush1.bf16.xpose.msra.mxu0 0
        %1492 = vmatprep.subr.bf16.mxu0 0
        %1493 = vmatpush1.bf16.xpose.msra.mxu0 0
        %1494 = vmatprep.subr.bf16.mxu0 0
        %1495 = vmatpush1.bf16.xpose.msra.mxu0 0
        %1496 = vmatprep.subr.bf16.mxu0 0
        %1497 = vmatpush1.bf16.xpose.msra.mxu0 0
        %1498 = vmatprep.subr.bf16.mxu0 0
        %1499 = vmatpush1.bf16.xpose.msra.mxu0 0
        %1500 = vmatprep.subr.bf16.mxu0 0
        %1501 = vmatpush1.bf16.xpose.msra.mxu0 0
        %1502 = vmatprep.subr.bf16.mxu0 0
        %1503 = vmatpush1.bf16.xpose.msra.mxu0 0
        %1504 = vmatprep.subr.bf16.mxu0 0
        %1505 = vmatpush1.bf16.xpose.msra.mxu0 0
        %1506 = vmatprep.subr.bf16.mxu0 0
        %1507 = vmatpush1.bf16.xpose.msra.mxu0 0
        %1508 = vmatprep.subr.bf16.mxu0 0
        %1509 = vmatpush1.bf16.xpose.msra.mxu0 0
        %1510 = vmatprep.subr.bf16.mxu0 0
        %1511 = vmatpush1.bf16.xpose.msra.mxu0 0
        %1512 = vmatprep.subr.bf16.mxu0 0
        %1513 = vmatpush1.bf16.xpose.msra.mxu0 0
        %1514 = vmatprep.subr.bf16.mxu0 0
        %1515 = vmatpush1.bf16.xpose.msra.mxu0 0
        %1516 = vmatprep.mubr.bf16.mxu0 0
        %1517 = vmatmul.mubr.bf16.gmra.mrb[0].mxu0 %v1479
        %v1518 = vpop.f32.mrb[0].mxu0
        %v1519 = vadd.f32 0.0, %v1518
        %v1520 = vpop.f32.mrb[0].mxu0
        %v1521 = vpop.f32.mrb[0].mxu0
        %v1522 = vpop.f32.mrb[0].mxu0
        %1523 = vdwg.mxu0
        %v1525 = vsel %vm1431, %v1427, 0
        %v1528 = vsel %vm1431, %v1430, 0
        %1530 = vmatprep.subr.bf16.mxu0 0
        %1531 = vmatpush1.bf16.xpose.msra.mxu0 %v1528
        %1532 = vmatprep.subr.bf16.mxu0 0
        %1533 = vmatpush1.bf16.xpose.msra.mxu0 0
        %1534 = vmatprep.subr.bf16.mxu0 0
        %1535 = vmatpush1.bf16.xpose.msra.mxu0 0
        %1536 = vmatprep.subr.bf16.mxu0 0
        %1537 = vmatpush1.bf16.xpose.msra.mxu0 0
        %1538 = vmatprep.subr.bf16.mxu0 0
        %1539 = vmatpush1.bf16.xpose.msra.mxu0 0
        %1540 = vmatprep.subr.bf16.mxu0 0
        %1541 = vmatpush1.bf16.xpose.msra.mxu0 0
        %1542 = vmatprep.subr.bf16.mxu0 0
        %1543 = vmatpush1.bf16.xpose.msra.mxu0 0
        %1544 = vmatprep.subr.bf16.mxu0 0
        %1545 = vmatpush1.bf16.xpose.msra.mxu0 0
        %1546 = vmatprep.subr.bf16.mxu0 0
        %1547 = vmatpush1.bf16.xpose.msra.mxu0 0
        %1548 = vmatprep.subr.bf16.mxu0 0
        %1549 = vmatpush1.bf16.xpose.msra.mxu0 0
        %1550 = vmatprep.subr.bf16.mxu0 0
        %1551 = vmatpush1.bf16.xpose.msra.mxu0 0
        %1552 = vmatprep.subr.bf16.mxu0 0
        %1553 = vmatpush1.bf16.xpose.msra.mxu0 0
        %1554 = vmatprep.subr.bf16.mxu0 0
        %1555 = vmatpush1.bf16.xpose.msra.mxu0 0
        %1556 = vmatprep.subr.bf16.mxu0 0
        %1557 = vmatpush1.bf16.xpose.msra.mxu0 0
        %1558 = vmatprep.subr.bf16.mxu0 0
        %1559 = vmatpush1.bf16.xpose.msra.mxu0 0
        %1560 = vmatprep.subr.bf16.mxu0 0
        %1561 = vmatpush1.bf16.xpose.msra.mxu0 0
        %1562 = vmatprep.mubr.bf16.mxu0 0
        %1563 = vmatmul.mubr.bf16.gmra.mrb[0].mxu0 %v1525
        %v1564 = vpop.f32.mrb[0].mxu0
        %v1565 = vadd.f32 0.0, %v1564
        %v1566 = vpop.f32.mrb[0].mxu0
        %v1567 = vpop.f32.mrb[0].mxu0
        %v1568 = vpop.f32.mrb[0].mxu0
        %1569 = vdwg.mxu0
        %v1570 = vmul.f32 %v1473, 0.35355338
        %v1571 = vmul.f32 %v1519, 0.35355338
        %v1572 = vmul.f32 %v1565, 0.35355338
        %v1573 = vld [vmem:[#allocation2] sm:$0xff]
        %v1574 = vld [vmem:[#allocation2 + $0x8] sm:$0xff]
        %v1575 = vld [vmem:[#allocation2 + $0x10] sm:$0xff]
        %v1576 = vadd.f32 %v1570, %v1573
        %v1577 = vadd.f32 %v1571, %v1574
        %v1578 = vadd.f32 %v1572, %v1575
        %s1579 = sadd.s32 %s39, 1
        %p1580 = scmp.lt.s32.totalorder %s1579, 3
        // Predicated region
        $region105: #{tpu_custom_call.1} parent=99 // pred_check
          %p1581 = pneg %p1580
        $region106: #{tpu_custom_call.1} parent=99 // pred_check_branch
          %1583 = sbr.rel (%p1581) target = $region108
        $region107: #{tpu_custom_call.1} parent=99 // pred_region
          %1584 = vst.msk [vmem:[#allocation2] sm:$0xff] %vm1431, %v1576
          %1585 = vst.msk [vmem:[#allocation2 + $0x8] sm:$0xff] %vm1431, %v1577
          %1586 = vst.msk [vmem:[#allocation2 + $0x10] sm:$0xff] %vm1431, %v1578
        $region108: #{tpu_custom_call.1} parent=99 // pred_fallthru
          _
        %v1587 = vsel %vm1431, %v1576, -inf
        %1588 = vmax.xlane.f32.xlu0 %v1587
        %v1589 = vpop.xlane.xlu0 %1588
        %v1590 = vsel %vm1431, %v1577, -inf
        %1591 = vmax.xlane.f32.xlu0 %v1590
        %v1592 = vpop.xlane.xlu0 %1591
        %v1593 = vsel %vm1431, %v1578, -inf
        %1594 = vmax.xlane.f32.xlu0 %v1593
        %v1595 = vpop.xlane.xlu0 %1594
        %v1596 = vsub.f32 %v1576, %v1589
        %v1597 = vsub.f32 %v1577, %v1592
        %v1598 = vsub.f32 %v1578, %v1595
        %v1599 = vmul.f32 %v1596, 1.442695
        %v1600 = vpow.pop %v1599
        %v1601 = vmul.f32 %v1597, 1.442695
        %v1602 = vpow.pop %v1601
        %v1603 = vmul.f32 %v1598, 1.442695
        %v1604 = vpow.pop %v1603
        %v1605 = vsel %vm1431, %v1600, 0.0
        %1606 = vadd.xlane.f32.xlu0 %v1605
        %v1607 = vpop.xlane.xlu0 %1606
        %v1608 = vsel %vm1431, %v1602, 0.0
        %1609 = vadd.xlane.f32.xlu0 %v1608
        %v1610 = vpop.xlane.xlu0 %1609
        %v1611 = vsel %vm1431, %v1604, 0.0
        %1612 = vadd.xlane.f32.xlu0 %v1611
        %v1613 = vpop.xlane.xlu0 %1612
        %v1614 = vrcp.pop %v1607
        %v1615 = vrcp.pop %v1610
        %v1616 = vrcp.pop %v1613
        %v1617 = vmul.f32 %v1600, %v1614
        %v1618 = vmul.f32 %v1602, %v1615
        %v1619 = vmul.f32 %v1604, %v1616
        %v1620 = vpack.c.bf16 %v1617, %v1617
        %v1621 = vpack.c.bf16 %v1618, %v1618
        %v1622 = vpack.c.bf16 %v1619, %v1619
        %v1623 = vpack.c.bf16 %v1412, %v1412
        %v1624 = vpack.c.bf16 %v1415, %v1415
        %v1625 = vpack.c.bf16 %v1420, %v1420
        %v1627 = vsel %vm1431, %v1620, 0
        %vm1629 = vcmask 1043456
        %v1631 = vsel %vm1629, %v1623, 0
        %1633 = vmatprep.subr.bf16.mxu0 0
        %1634 = vmatpush1.bf16.msra.mxu0 %v1631
        %1635 = vmatprep.subr.bf16.mxu0 0
        %1636 = vmatpush1.bf16.msra.mxu0 0
        %1637 = vmatprep.subr.bf16.mxu0 0
        %1638 = vmatpush1.bf16.msra.mxu0 0
        %1639 = vmatprep.subr.bf16.mxu0 0
        %1640 = vmatpush1.bf16.msra.mxu0 0
        %1641 = vmatprep.subr.bf16.mxu0 0
        %1642 = vmatpush1.bf16.msra.mxu0 0
        %1643 = vmatprep.subr.bf16.mxu0 0
        %1644 = vmatpush1.bf16.msra.mxu0 0
        %1645 = vmatprep.subr.bf16.mxu0 0
        %1646 = vmatpush1.bf16.msra.mxu0 0
        %1647 = vmatprep.subr.bf16.mxu0 0
        %1648 = vmatpush1.bf16.msra.mxu0 0
        %1649 = vmatprep.subr.bf16.mxu0 0
        %1650 = vmatpush1.bf16.msra.mxu0 0
        %1651 = vmatprep.subr.bf16.mxu0 0
        %1652 = vmatpush1.bf16.msra.mxu0 0
        %1653 = vmatprep.subr.bf16.mxu0 0
        %1654 = vmatpush1.bf16.msra.mxu0 0
        %1655 = vmatprep.subr.bf16.mxu0 0
        %1656 = vmatpush1.bf16.msra.mxu0 0
        %1657 = vmatprep.subr.bf16.mxu0 0
        %1658 = vmatpush1.bf16.msra.mxu0 0
        %1659 = vmatprep.subr.bf16.mxu0 0
        %1660 = vmatpush1.bf16.msra.mxu0 0
        %1661 = vmatprep.subr.bf16.mxu0 0
        %1662 = vmatpush1.bf16.msra.mxu0 0
        %1663 = vmatprep.subr.bf16.mxu0 0
        %1664 = vmatpush1.bf16.msra.mxu0 0
        %1665 = vmatprep.mubr.bf16.mxu0 0
        %1666 = vmatmul.mubr.bf16.gmra.mrb[0].mxu0 %v1627
        %v1667 = vpop.f32.mrb[0].mxu0
        %v1668 = vadd.f32 0.0, %v1667
        %v1669 = vpop.f32.mrb[0].mxu0
        %v1670 = vpop.f32.mrb[0].mxu0
        %v1671 = vpop.f32.mrb[0].mxu0
        %1672 = vdwg.mxu0
        %v1674 = vsel %vm1431, %v1621, 0
        %v1677 = vsel %vm1629, %v1624, 0
        %1679 = vmatprep.subr.bf16.mxu0 0
        %1680 = vmatpush1.bf16.msra.mxu0 %v1677
        %1681 = vmatprep.subr.bf16.mxu0 0
        %1682 = vmatpush1.bf16.msra.mxu0 0
        %1683 = vmatprep.subr.bf16.mxu0 0
        %1684 = vmatpush1.bf16.msra.mxu0 0
        %1685 = vmatprep.subr.bf16.mxu0 0
        %1686 = vmatpush1.bf16.msra.mxu0 0
        %1687 = vmatprep.subr.bf16.mxu0 0
        %1688 = vmatpush1.bf16.msra.mxu0 0
        %1689 = vmatprep.subr.bf16.mxu0 0
        %1690 = vmatpush1.bf16.msra.mxu0 0
        %1691 = vmatprep.subr.bf16.mxu0 0
        %1692 = vmatpush1.bf16.msra.mxu0 0
        %1693 = vmatprep.subr.bf16.mxu0 0
        %1694 = vmatpush1.bf16.msra.mxu0 0
        %1695 = vmatprep.subr.bf16.mxu0 0
        %1696 = vmatpush1.bf16.msra.mxu0 0
        %1697 = vmatprep.subr.bf16.mxu0 0
        %1698 = vmatpush1.bf16.msra.mxu0 0
        %1699 = vmatprep.subr.bf16.mxu0 0
        %1700 = vmatpush1.bf16.msra.mxu0 0
        %1701 = vmatprep.subr.bf16.mxu0 0
        %1702 = vmatpush1.bf16.msra.mxu0 0
        %1703 = vmatprep.subr.bf16.mxu0 0
        %1704 = vmatpush1.bf16.msra.mxu0 0
        %1705 = vmatprep.subr.bf16.mxu0 0
        %1706 = vmatpush1.bf16.msra.mxu0 0
        %1707 = vmatprep.subr.bf16.mxu0 0
        %1708 = vmatpush1.bf16.msra.mxu0 0
        %1709 = vmatprep.subr.bf16.mxu0 0
        %1710 = vmatpush1.bf16.msra.mxu0 0
        %1711 = vmatprep.mubr.bf16.mxu0 0
        %1712 = vmatmul.mubr.bf16.gmra.mrb[0].mxu0 %v1674
        %v1713 = vpop.f32.mrb[0].mxu0
        %v1714 = vadd.f32 0.0, %v1713
        %v1715 = vpop.f32.mrb[0].mxu0
        %v1716 = vpop.f32.mrb[0].mxu0
        %v1717 = vpop.f32.mrb[0].mxu0
        %1718 = vdwg.mxu0
        %v1720 = vsel %vm1431, %v1622, 0
        %v1723 = vsel %vm1629, %v1625, 0
        %1725 = vmatprep.subr.bf16.mxu0 0
        %1726 = vmatpush1.bf16.msra.mxu0 %v1723
        %1727 = vmatprep.subr.bf16.mxu0 0
        %1728 = vmatpush1.bf16.msra.mxu0 0
        %1729 = vmatprep.subr.bf16.mxu0 0
        %1730 = vmatpush1.bf16.msra.mxu0 0
        %1731 = vmatprep.subr.bf16.mxu0 0
        %1732 = vmatpush1.bf16.msra.mxu0 0
        %1733 = vmatprep.subr.bf16.mxu0 0
        %1734 = vmatpush1.bf16.msra.mxu0 0
        %1735 = vmatprep.subr.bf16.mxu0 0
        %1736 = vmatpush1.bf16.msra.mxu0 0
        %1737 = vmatprep.subr.bf16.mxu0 0
        %1738 = vmatpush1.bf16.msra.mxu0 0
        %1739 = vmatprep.subr.bf16.mxu0 0
        %1740 = vmatpush1.bf16.msra.mxu0 0
        %1741 = vmatprep.subr.bf16.mxu0 0
        %1742 = vmatpush1.bf16.msra.mxu0 0
        %1743 = vmatprep.subr.bf16.mxu0 0
        %1744 = vmatpush1.bf16.msra.mxu0 0
        %1745 = vmatprep.subr.bf16.mxu0 0
        %1746 = vmatpush1.bf16.msra.mxu0 0
        %1747 = vmatprep.subr.bf16.mxu0 0
        %1748 = vmatpush1.bf16.msra.mxu0 0
        %1749 = vmatprep.subr.bf16.mxu0 0
        %1750 = vmatpush1.bf16.msra.mxu0 0
        %1751 = vmatprep.subr.bf16.mxu0 0
        %1752 = vmatpush1.bf16.msra.mxu0 0
        %1753 = vmatprep.subr.bf16.mxu0 0
        %1754 = vmatpush1.bf16.msra.mxu0 0
        %1755 = vmatprep.subr.bf16.mxu0 0
        %1756 = vmatpush1.bf16.msra.mxu0 0
        %1757 = vmatprep.mubr.bf16.mxu0 0
        %1758 = vmatmul.mubr.bf16.gmra.mrb[0].mxu0 %v1720
        %v1759 = vpop.f32.mrb[0].mxu0
        %v1760 = vadd.f32 0.0, %v1759
        %v1761 = vpop.f32.mrb[0].mxu0
        %v1762 = vpop.f32.mrb[0].mxu0
        %v1763 = vpop.f32.mrb[0].mxu0
        %1764 = vdwg.mxu0
        %v1765 = vpack.c.bf16 %v1714, %v1668
        %v1766 = vpack.c.bf16 %v1760, %v1760
        %v1767 = vld [vmem:[%s879] sm:$0xf]
        %s1768 = scalar_lea.vmem %s852, 64
        %v1769 = vld [vmem:[%s1768] sm:$0xf]
        %v1770 = vld [vmem:[%s1768 + $0x4] sm:$0xf]
        %v1771 = vld [vmem:[%s1768 + $0x8] sm:$0xf]
        %v1772 = vld [vmem:[%s1768 + $0xc] sm:$0xf]
        %v1773 = vld [vmem:[%s1768 + $0x10] sm:$0xf]
        %v1774 = vld [vmem:[%s1768 + $0x14] sm:$0xf]
        %v1775 = vld [vmem:[%s1768 + $0x18] sm:$0xf]
        %v1776 = vld [vmem:[%s1768 + $0x1c] sm:$0xf]
        %v1777 = vld [vmem:[%s1768 + $0x20] sm:$0xf]
        %v1778 = vld [vmem:[%s1768 + $0x24] sm:$0xf]
        %v1779 = vld [vmem:[%s1768 + $0x28] sm:$0xf]
        %v1780 = vld [vmem:[%s1768 + $0x2c] sm:$0xf]
        %v1781 = vld [vmem:[%s1768 + $0x30] sm:$0xf]
        %v1782 = vld [vmem:[%s1768 + $0x34] sm:$0xf]
        %v1783 = vld [vmem:[%s1768 + $0x38] sm:$0xf]
        %v1784 = vld [vmem:[%s1768 + $0x3c] sm:$0xf]
        %s1785 = scalar_lea.vmem %s856, 1
        %v1786 = vld [vmem:[%s1785] sm:$0x1]
        %v1788 = vlaneseq
        %v1789 = vshrl.u32 %v1788, 7
        %v1790 = vsub.s32 0, %v1789
        %v1791 = vrot.slane %v1786, %v1790
        %v1809 = vunpack.c.l.b16 %v1769
        %v1810 = vunpack.c.l.b16 %v1770
        %v1811 = vunpack.c.l.b16 %v1771
        %v1812 = vunpack.c.l.b16 %v1772
        %v1813 = vunpack.c.l.b16 %v1773
        %v1814 = vunpack.c.l.b16 %v1774
        %v1815 = vunpack.c.l.b16 %v1775
        %v1816 = vunpack.c.l.b16 %v1776
        %v1817 = vunpack.c.l.b16 %v1777
        %v1818 = vunpack.c.l.b16 %v1778
        %v1819 = vunpack.c.l.b16 %v1779
        %v1820 = vunpack.c.l.b16 %v1780
        %v1821 = vunpack.c.l.b16 %v1781
        %v1822 = vunpack.c.l.b16 %v1782
        %v1823 = vunpack.c.l.b16 %v1783
        %v1824 = vunpack.c.l.b16 %v1784
        %v1825 = vpack.c.b16 %v1810, %v1809
        %v1826 = vpack.c.b16 %v1812, %v1811
        %v1827 = vpack.c.b16 %v1814, %v1813
        %v1828 = vpack.c.b16 %v1816, %v1815
        %v1829 = vpack.c.b16 %v1818, %v1817
        %v1830 = vpack.c.b16 %v1820, %v1819
        %v1831 = vpack.c.b16 %v1822, %v1821
        %v1832 = vpack.c.b16 %v1824, %v1823
        %1841 = vmatprep.subr.bf16.mxu0 0
        %1842 = vmatpush1.bf16.msra.mxu0 %v1825
        %1843 = vmatprep.subr.bf16.mxu0 0
        %1844 = vmatpush1.bf16.msra.mxu0 %v1826
        %1845 = vmatprep.subr.bf16.mxu0 0
        %1846 = vmatpush1.bf16.msra.mxu0 %v1827
        %1847 = vmatprep.subr.bf16.mxu0 0
        %1848 = vmatpush1.bf16.msra.mxu0 %v1828
        %1849 = vmatprep.subr.bf16.mxu0 0
        %1850 = vmatpush1.bf16.msra.mxu0 %v1829
        %1851 = vmatprep.subr.bf16.mxu0 0
        %1852 = vmatpush1.bf16.msra.mxu0 %v1830
        %1853 = vmatprep.subr.bf16.mxu0 0
        %1854 = vmatpush1.bf16.msra.mxu0 %v1831
        %1855 = vmatprep.subr.bf16.mxu0 0
        %1856 = vmatpush1.bf16.msra.mxu0 %v1832
        %1857 = vmatprep.subr.bf16.mxu0 0
        %1858 = vmatpush1.bf16.msra.mxu0 0
        %1859 = vmatprep.subr.bf16.mxu0 0
        %1860 = vmatpush1.bf16.msra.mxu0 0
        %1861 = vmatprep.subr.bf16.mxu0 0
        %1862 = vmatpush1.bf16.msra.mxu0 0
        %1863 = vmatprep.subr.bf16.mxu0 0
        %1864 = vmatpush1.bf16.msra.mxu0 0
        %1865 = vmatprep.subr.bf16.mxu0 0
        %1866 = vmatpush1.bf16.msra.mxu0 0
        %1867 = vmatprep.subr.bf16.mxu0 0
        %1868 = vmatpush1.bf16.msra.mxu0 0
        %1869 = vmatprep.subr.bf16.mxu0 0
        %1870 = vmatpush1.bf16.msra.mxu0 0
        %1871 = vmatprep.subr.bf16.mxu0 0
        %1872 = vmatpush1.bf16.msra.mxu0 0
        %1873 = vmatprep.mubr.bf16.mxu0 0
        %1874 = vmatmul.mubr.bf16.gmra.mrb[0].mxu0 %v1066
        %v1875 = vpop.f32.mrb[0].mxu0
        %v1876 = vadd.f32 %v1791, %v1875
        %v1877 = vpop.f32.mrb[0].mxu0
        %v1878 = vpop.f32.mrb[0].mxu0
        %v1879 = vadd.f32 %v1791, %v1878
        %v1880 = vpop.f32.mrb[0].mxu0
        %1881 = vmatprep.mubr.bf16.mxu0 0
        %1882 = vmatmul.mubr.bf16.gmra.mrb[0].mxu0 %v1067
        %v1883 = vpop.f32.mrb[0].mxu0
        %v1884 = vadd.f32 %v1791, %v1883
        %v1885 = vpop.f32.mrb[0].mxu0
        %v1886 = vpop.f32.mrb[0].mxu0
        %v1887 = vpop.f32.mrb[0].mxu0
        %1888 = vdwg.mxu0
        %s1889 = scalar_lea.vmem %s861, 64
        %v1890 = vld [vmem:[%s1889] sm:$0xf]
        %v1891 = vld [vmem:[%s1889 + $0x4] sm:$0xf]
        %v1892 = vld [vmem:[%s1889 + $0x8] sm:$0xf]
        %v1893 = vld [vmem:[%s1889 + $0xc] sm:$0xf]
        %v1894 = vld [vmem:[%s1889 + $0x10] sm:$0xf]
        %v1895 = vld [vmem:[%s1889 + $0x14] sm:$0xf]
        %v1896 = vld [vmem:[%s1889 + $0x18] sm:$0xf]
        %v1897 = vld [vmem:[%s1889 + $0x1c] sm:$0xf]
        %v1898 = vld [vmem:[%s1889 + $0x20] sm:$0xf]
        %v1899 = vld [vmem:[%s1889 + $0x24] sm:$0xf]
        %v1900 = vld [vmem:[%s1889 + $0x28] sm:$0xf]
        %v1901 = vld [vmem:[%s1889 + $0x2c] sm:$0xf]
        %v1902 = vld [vmem:[%s1889 + $0x30] sm:$0xf]
        %v1903 = vld [vmem:[%s1889 + $0x34] sm:$0xf]
        %v1904 = vld [vmem:[%s1889 + $0x38] sm:$0xf]
        %v1905 = vld [vmem:[%s1889 + $0x3c] sm:$0xf]
        %s1906 = scalar_lea.vmem %s865, 1
        %v1907 = vld [vmem:[%s1906] sm:$0x1]
        %v1909 = vlaneseq
        %v1910 = vshrl.u32 %v1909, 7
        %v1911 = vsub.s32 0, %v1910
        %v1912 = vrot.slane %v1907, %v1911
        %v1930 = vunpack.c.l.b16 %v1890
        %v1931 = vunpack.c.l.b16 %v1891
        %v1932 = vunpack.c.l.b16 %v1892
        %v1933 = vunpack.c.l.b16 %v1893
        %v1934 = vunpack.c.l.b16 %v1894
        %v1935 = vunpack.c.l.b16 %v1895
        %v1936 = vunpack.c.l.b16 %v1896
        %v1937 = vunpack.c.l.b16 %v1897
        %v1938 = vunpack.c.l.b16 %v1898
        %v1939 = vunpack.c.l.b16 %v1899
        %v1940 = vunpack.c.l.b16 %v1900
        %v1941 = vunpack.c.l.b16 %v1901
        %v1942 = vunpack.c.l.b16 %v1902
        %v1943 = vunpack.c.l.b16 %v1903
        %v1944 = vunpack.c.l.b16 %v1904
        %v1945 = vunpack.c.l.b16 %v1905
        %v1946 = vpack.c.b16 %v1931, %v1930
        %v1947 = vpack.c.b16 %v1933, %v1932
        %v1948 = vpack.c.b16 %v1935, %v1934
        %v1949 = vpack.c.b16 %v1937, %v1936
        %v1950 = vpack.c.b16 %v1939, %v1938
        %v1951 = vpack.c.b16 %v1941, %v1940
        %v1952 = vpack.c.b16 %v1943, %v1942
        %v1953 = vpack.c.b16 %v1945, %v1944
        %1962 = vmatprep.subr.bf16.mxu0 0
        %1963 = vmatpush1.bf16.msra.mxu0 %v1946
        %1964 = vmatprep.subr.bf16.mxu0 0
        %1965 = vmatpush1.bf16.msra.mxu0 %v1947
        %1966 = vmatprep.subr.bf16.mxu0 0
        %1967 = vmatpush1.bf16.msra.mxu0 %v1948
        %1968 = vmatprep.subr.bf16.mxu0 0
        %1969 = vmatpush1.bf16.msra.mxu0 %v1949
        %1970 = vmatprep.subr.bf16.mxu0 0
        %1971 = vmatpush1.bf16.msra.mxu0 %v1950
        %1972 = vmatprep.subr.bf16.mxu0 0
        %1973 = vmatpush1.bf16.msra.mxu0 %v1951
        %1974 = vmatprep.subr.bf16.mxu0 0
        %1975 = vmatpush1.bf16.msra.mxu0 %v1952
        %1976 = vmatprep.subr.bf16.mxu0 0
        %1977 = vmatpush1.bf16.msra.mxu0 %v1953
        %1978 = vmatprep.subr.bf16.mxu0 0
        %1979 = vmatpush1.bf16.msra.mxu0 0
        %1980 = vmatprep.subr.bf16.mxu0 0
        %1981 = vmatpush1.bf16.msra.mxu0 0
        %1982 = vmatprep.subr.bf16.mxu0 0
        %1983 = vmatpush1.bf16.msra.mxu0 0
        %1984 = vmatprep.subr.bf16.mxu0 0
        %1985 = vmatpush1.bf16.msra.mxu0 0
        %1986 = vmatprep.subr.bf16.mxu0 0
        %1987 = vmatpush1.bf16.msra.mxu0 0
        %1988 = vmatprep.subr.bf16.mxu0 0
        %1989 = vmatpush1.bf16.msra.mxu0 0
        %1990 = vmatprep.subr.bf16.mxu0 0
        %1991 = vmatpush1.bf16.msra.mxu0 0
        %1992 = vmatprep.subr.bf16.mxu0 0
        %1993 = vmatpush1.bf16.msra.mxu0 0
        %1994 = vmatprep.mubr.bf16.mxu0 0
        %1995 = vmatmul.mubr.bf16.gmra.mrb[0].mxu0 %v1066
        %v1996 = vpop.f32.mrb[0].mxu0
        %v1997 = vadd.f32 %v1912, %v1996
        %v1998 = vpop.f32.mrb[0].mxu0
        %v1999 = vpop.f32.mrb[0].mxu0
        %v2000 = vadd.f32 %v1912, %v1999
        %v2001 = vpop.f32.mrb[0].mxu0
        %2002 = vmatprep.mubr.bf16.mxu0 0
        %2003 = vmatmul.mubr.bf16.gmra.mrb[0].mxu0 %v1067
        %v2004 = vpop.f32.mrb[0].mxu0
        %v2005 = vadd.f32 %v1912, %v2004
        %v2006 = vpop.f32.mrb[0].mxu0
        %v2007 = vpop.f32.mrb[0].mxu0
        %v2008 = vpop.f32.mrb[0].mxu0
        %2009 = vdwg.mxu0
        %s2010 = scalar_lea.vmem %s870, 64
        %v2011 = vld [vmem:[%s2010] sm:$0xf]
        %v2012 = vld [vmem:[%s2010 + $0x4] sm:$0xf]
        %v2013 = vld [vmem:[%s2010 + $0x8] sm:$0xf]
        %v2014 = vld [vmem:[%s2010 + $0xc] sm:$0xf]
        %v2015 = vld [vmem:[%s2010 + $0x10] sm:$0xf]
        %v2016 = vld [vmem:[%s2010 + $0x14] sm:$0xf]
        %v2017 = vld [vmem:[%s2010 + $0x18] sm:$0xf]
        %v2018 = vld [vmem:[%s2010 + $0x1c] sm:$0xf]
        %v2019 = vld [vmem:[%s2010 + $0x20] sm:$0xf]
        %v2020 = vld [vmem:[%s2010 + $0x24] sm:$0xf]
        %v2021 = vld [vmem:[%s2010 + $0x28] sm:$0xf]
        %v2022 = vld [vmem:[%s2010 + $0x2c] sm:$0xf]
        %v2023 = vld [vmem:[%s2010 + $0x30] sm:$0xf]
        %v2024 = vld [vmem:[%s2010 + $0x34] sm:$0xf]
        %v2025 = vld [vmem:[%s2010 + $0x38] sm:$0xf]
        %v2026 = vld [vmem:[%s2010 + $0x3c] sm:$0xf]
        %s2027 = scalar_lea.vmem %s874, 1
        %v2028 = vld [vmem:[%s2027] sm:$0x1]
        %v2030 = vlaneseq
        %v2031 = vshrl.u32 %v2030, 7
        %v2032 = vsub.s32 0, %v2031
        %v2033 = vrot.slane %v2028, %v2032
        %v2051 = vunpack.c.l.b16 %v2011
        %v2052 = vunpack.c.l.b16 %v2012
        %v2053 = vunpack.c.l.b16 %v2013
        %v2054 = vunpack.c.l.b16 %v2014
        %v2055 = vunpack.c.l.b16 %v2015
        %v2056 = vunpack.c.l.b16 %v2016
        %v2057 = vunpack.c.l.b16 %v2017
        %v2058 = vunpack.c.l.b16 %v2018
        %v2059 = vunpack.c.l.b16 %v2019
        %v2060 = vunpack.c.l.b16 %v2020
        %v2061 = vunpack.c.l.b16 %v2021
        %v2062 = vunpack.c.l.b16 %v2022
        %v2063 = vunpack.c.l.b16 %v2023
        %v2064 = vunpack.c.l.b16 %v2024
        %v2065 = vunpack.c.l.b16 %v2025
        %v2066 = vunpack.c.l.b16 %v2026
        %v2067 = vpack.c.b16 %v2052, %v2051
        %v2068 = vpack.c.b16 %v2054, %v2053
        %v2069 = vpack.c.b16 %v2056, %v2055
        %v2070 = vpack.c.b16 %v2058, %v2057
        %v2071 = vpack.c.b16 %v2060, %v2059
        %v2072 = vpack.c.b16 %v2062, %v2061
        %v2073 = vpack.c.b16 %v2064, %v2063
        %v2074 = vpack.c.b16 %v2066, %v2065
        %2083 = vmatprep.subr.bf16.mxu0 0
        %2084 = vmatpush1.bf16.msra.mxu0 %v2067
        %2085 = vmatprep.subr.bf16.mxu0 0
        %2086 = vmatpush1.bf16.msra.mxu0 %v2068
        %2087 = vmatprep.subr.bf16.mxu0 0
        %2088 = vmatpush1.bf16.msra.mxu0 %v2069
        %2089 = vmatprep.subr.bf16.mxu0 0
        %2090 = vmatpush1.bf16.msra.mxu0 %v2070
        %2091 = vmatprep.subr.bf16.mxu0 0
        %2092 = vmatpush1.bf16.msra.mxu0 %v2071
        %2093 = vmatprep.subr.bf16.mxu0 0
        %2094 = vmatpush1.bf16.msra.mxu0 %v2072
        %2095 = vmatprep.subr.bf16.mxu0 0
        %2096 = vmatpush1.bf16.msra.mxu0 %v2073
        %2097 = vmatprep.subr.bf16.mxu0 0
        %2098 = vmatpush1.bf16.msra.mxu0 %v2074
        %2099 = vmatprep.subr.bf16.mxu0 0
        %2100 = vmatpush1.bf16.msra.mxu0 0
        %2101 = vmatprep.subr.bf16.mxu0 0
        %2102 = vmatpush1.bf16.msra.mxu0 0
        %2103 = vmatprep.subr.bf16.mxu0 0
        %2104 = vmatpush1.bf16.msra.mxu0 0
        %2105 = vmatprep.subr.bf16.mxu0 0
        %2106 = vmatpush1.bf16.msra.mxu0 0
        %2107 = vmatprep.subr.bf16.mxu0 0
        %2108 = vmatpush1.bf16.msra.mxu0 0
        %2109 = vmatprep.subr.bf16.mxu0 0
        %2110 = vmatpush1.bf16.msra.mxu0 0
        %2111 = vmatprep.subr.bf16.mxu0 0
        %2112 = vmatpush1.bf16.msra.mxu0 0
        %2113 = vmatprep.subr.bf16.mxu0 0
        %2114 = vmatpush1.bf16.msra.mxu0 0
        %2115 = vmatprep.mubr.bf16.mxu0 0
        %2116 = vmatmul.mubr.bf16.gmra.mrb[0].mxu0 %v1066
        %v2117 = vpop.f32.mrb[0].mxu0
        %v2118 = vadd.f32 %v2033, %v2117
        %v2119 = vpop.f32.mrb[0].mxu0
        %v2120 = vpop.f32.mrb[0].mxu0
        %v2121 = vadd.f32 %v2033, %v2120
        %v2122 = vpop.f32.mrb[0].mxu0
        %2123 = vmatprep.mubr.bf16.mxu0 0
        %2124 = vmatmul.mubr.bf16.gmra.mrb[0].mxu0 %v1067
        %v2125 = vpop.f32.mrb[0].mxu0
        %v2126 = vadd.f32 %v2033, %v2125
        %v2127 = vpop.f32.mrb[0].mxu0
        %v2128 = vpop.f32.mrb[0].mxu0
        %v2129 = vpop.f32.mrb[0].mxu0
        %2130 = vdwg.mxu0
        %v2131 = vpack.c.bf16 %v1876, %v1876
        %v2132 = vpack.c.bf16 %v1879, %v1879
        %v2133 = vpack.c.bf16 %v1884, %v1884
        %v2134 = vpack.c.bf16 %v1997, %v1997
        %v2135 = vpack.c.bf16 %v2000, %v2000
        %v2136 = vpack.c.bf16 %v2005, %v2005
        %v2138 = vsel %vm1431, %v2131, 0
        %v2141 = vsel %vm1431, %v2134, 0
        %2143 = vmatprep.subr.bf16.mxu0 0
        %2144 = vmatpush1.bf16.xpose.msra.mxu0 %v2141
        %2145 = vmatprep.subr.bf16.mxu0 0
        %2146 = vmatpush1.bf16.xpose.msra.mxu0 0
        %2147 = vmatprep.subr.bf16.mxu0 0
        %2148 = vmatpush1.bf16.xpose.msra.mxu0 0
        %2149 = vmatprep.subr.bf16.mxu0 0
        %2150 = vmatpush1.bf16.xpose.msra.mxu0 0
        %2151 = vmatprep.subr.bf16.mxu0 0
        %2152 = vmatpush1.bf16.xpose.msra.mxu0 0
        %2153 = vmatprep.subr.bf16.mxu0 0
        %2154 = vmatpush1.bf16.xpose.msra.mxu0 0
        %2155 = vmatprep.subr.bf16.mxu0 0
        %2156 = vmatpush1.bf16.xpose.msra.mxu0 0
        %2157 = vmatprep.subr.bf16.mxu0 0
        %2158 = vmatpush1.bf16.xpose.msra.mxu0 0
        %2159 = vmatprep.subr.bf16.mxu0 0
        %2160 = vmatpush1.bf16.xpose.msra.mxu0 0
        %2161 = vmatprep.subr.bf16.mxu0 0
        %2162 = vmatpush1.bf16.xpose.msra.mxu0 0
        %2163 = vmatprep.subr.bf16.mxu0 0
        %2164 = vmatpush1.bf16.xpose.msra.mxu0 0
        %2165 = vmatprep.subr.bf16.mxu0 0
        %2166 = vmatpush1.bf16.xpose.msra.mxu0 0
        %2167 = vmatprep.subr.bf16.mxu0 0
        %2168 = vmatpush1.bf16.xpose.msra.mxu0 0
        %2169 = vmatprep.subr.bf16.mxu0 0
        %2170 = vmatpush1.bf16.xpose.msra.mxu0 0
        %2171 = vmatprep.subr.bf16.mxu0 0
        %2172 = vmatpush1.bf16.xpose.msra.mxu0 0
        %2173 = vmatprep.subr.bf16.mxu0 0
        %2174 = vmatpush1.bf16.xpose.msra.mxu0 0
        %2175 = vmatprep.mubr.bf16.mxu0 0
        %2176 = vmatmul.mubr.bf16.gmra.mrb[0].mxu0 %v2138
        %v2177 = vpop.f32.mrb[0].mxu0
        %v2178 = vadd.f32 0.0, %v2177
        %v2179 = vpop.f32.mrb[0].mxu0
        %v2180 = vpop.f32.mrb[0].mxu0
        %v2181 = vpop.f32.mrb[0].mxu0
        %2182 = vdwg.mxu0
        %v2184 = vsel %vm1431, %v2132, 0
        %v2187 = vsel %vm1431, %v2135, 0
        %2189 = vmatprep.subr.bf16.mxu0 0
        %2190 = vmatpush1.bf16.xpose.msra.mxu0 %v2187
        %2191 = vmatprep.subr.bf16.mxu0 0
        %2192 = vmatpush1.bf16.xpose.msra.mxu0 0
        %2193 = vmatprep.subr.bf16.mxu0 0
        %2194 = vmatpush1.bf16.xpose.msra.mxu0 0
        %2195 = vmatprep.subr.bf16.mxu0 0
        %2196 = vmatpush1.bf16.xpose.msra.mxu0 0
        %2197 = vmatprep.subr.bf16.mxu0 0
        %2198 = vmatpush1.bf16.xpose.msra.mxu0 0
        %2199 = vmatprep.subr.bf16.mxu0 0
        %2200 = vmatpush1.bf16.xpose.msra.mxu0 0
        %2201 = vmatprep.subr.bf16.mxu0 0
        %2202 = vmatpush1.bf16.xpose.msra.mxu0 0
        %2203 = vmatprep.subr.bf16.mxu0 0
        %2204 = vmatpush1.bf16.xpose.msra.mxu0 0
        %2205 = vmatprep.subr.bf16.mxu0 0
        %2206 = vmatpush1.bf16.xpose.msra.mxu0 0
        %2207 = vmatprep.subr.bf16.mxu0 0
        %2208 = vmatpush1.bf16.xpose.msra.mxu0 0
        %2209 = vmatprep.subr.bf16.mxu0 0
        %2210 = vmatpush1.bf16.xpose.msra.mxu0 0
        %2211 = vmatprep.subr.bf16.mxu0 0
        %2212 = vmatpush1.bf16.xpose.msra.mxu0 0
        %2213 = vmatprep.subr.bf16.mxu0 0
        %2214 = vmatpush1.bf16.xpose.msra.mxu0 0
        %2215 = vmatprep.subr.bf16.mxu0 0
        %2216 = vmatpush1.bf16.xpose.msra.mxu0 0
        %2217 = vmatprep.subr.bf16.mxu0 0
        %2218 = vmatpush1.bf16.xpose.msra.mxu0 0
        %2219 = vmatprep.subr.bf16.mxu0 0
        %2220 = vmatpush1.bf16.xpose.msra.mxu0 0
        %2221 = vmatprep.mubr.bf16.mxu0 0
        %2222 = vmatmul.mubr.bf16.gmra.mrb[0].mxu0 %v2184
        %v2223 = vpop.f32.mrb[0].mxu0
        %v2224 = vadd.f32 0.0, %v2223
        %v2225 = vpop.f32.mrb[0].mxu0
        %v2226 = vpop.f32.mrb[0].mxu0
        %v2227 = vpop.f32.mrb[0].mxu0
        %2228 = vdwg.mxu0
        %v2230 = vsel %vm1431, %v2133, 0
        %v2233 = vsel %vm1431, %v2136, 0
        %2235 = vmatprep.subr.bf16.mxu0 0
        %2236 = vmatpush1.bf16.xpose.msra.mxu0 %v2233
        %2237 = vmatprep.subr.bf16.mxu0 0
        %2238 = vmatpush1.bf16.xpose.msra.mxu0 0
        %2239 = vmatprep.subr.bf16.mxu0 0
        %2240 = vmatpush1.bf16.xpose.msra.mxu0 0
        %2241 = vmatprep.subr.bf16.mxu0 0
        %2242 = vmatpush1.bf16.xpose.msra.mxu0 0
        %2243 = vmatprep.subr.bf16.mxu0 0
        %2244 = vmatpush1.bf16.xpose.msra.mxu0 0
        %2245 = vmatprep.subr.bf16.mxu0 0
        %2246 = vmatpush1.bf16.xpose.msra.mxu0 0
        %2247 = vmatprep.subr.bf16.mxu0 0
        %2248 = vmatpush1.bf16.xpose.msra.mxu0 0
        %2249 = vmatprep.subr.bf16.mxu0 0
        %2250 = vmatpush1.bf16.xpose.msra.mxu0 0
        %2251 = vmatprep.subr.bf16.mxu0 0
        %2252 = vmatpush1.bf16.xpose.msra.mxu0 0
        %2253 = vmatprep.subr.bf16.mxu0 0
        %2254 = vmatpush1.bf16.xpose.msra.mxu0 0
        %2255 = vmatprep.subr.bf16.mxu0 0
        %2256 = vmatpush1.bf16.xpose.msra.mxu0 0
        %2257 = vmatprep.subr.bf16.mxu0 0
        %2258 = vmatpush1.bf16.xpose.msra.mxu0 0
        %2259 = vmatprep.subr.bf16.mxu0 0
        %2260 = vmatpush1.bf16.xpose.msra.mxu0 0
        %2261 = vmatprep.subr.bf16.mxu0 0
        %2262 = vmatpush1.bf16.xpose.msra.mxu0 0
        %2263 = vmatprep.subr.bf16.mxu0 0
        %2264 = vmatpush1.bf16.xpose.msra.mxu0 0
        %2265 = vmatprep.subr.bf16.mxu0 0
        %2266 = vmatpush1.bf16.xpose.msra.mxu0 0
        %2267 = vmatprep.mubr.bf16.mxu0 0
        %2268 = vmatmul.mubr.bf16.gmra.mrb[0].mxu0 %v2230
        %v2269 = vpop.f32.mrb[0].mxu0
        %v2270 = vadd.f32 0.0, %v2269
        %v2271 = vpop.f32.mrb[0].mxu0
        %v2272 = vpop.f32.mrb[0].mxu0
        %v2273 = vpop.f32.mrb[0].mxu0
        %2274 = vdwg.mxu0
        %v2275 = vmul.f32 %v2178, 0.35355338
        %v2276 = vmul.f32 %v2224, 0.35355338
        %v2277 = vmul.f32 %v2270, 0.35355338
        %s2278 = scalar_lea.vmem [#allocation2], 24
        %v2279 = vld [vmem:[%s2278] sm:$0xff]
        %v2280 = vld [vmem:[%s2278 + $0x8] sm:$0xff]
        %v2281 = vld [vmem:[%s2278 + $0x10] sm:$0xff]
        %v2282 = vadd.f32 %v2275, %v2279
        %v2283 = vadd.f32 %v2276, %v2280
        %v2284 = vadd.f32 %v2277, %v2281
        // Predicated region
        $region109: #{tpu_custom_call.1} parent=99 // pred_check
          %p2285 = pneg %p1580
        $region110: #{tpu_custom_call.1} parent=99 // pred_check_branch
          %2287 = sbr.rel (%p2285) target = $region112
        $region111: #{tpu_custom_call.1} parent=99 // pred_region
          %2288 = vst.msk [vmem:[%s2278] sm:$0xff] %vm1431, %v2282
          %2289 = vst.msk [vmem:[%s2278 + $0x8] sm:$0xff] %vm1431, %v2283
          %2290 = vst.msk [vmem:[%s2278 + $0x10] sm:$0xff] %vm1431, %v2284
        $region112: #{tpu_custom_call.1} parent=99 // pred_fallthru
          _
        %v2291 = vsel %vm1431, %v2282, -inf
        %2292 = vmax.xlane.f32.xlu0 %v2291
        %v2293 = vpop.xlane.xlu0 %2292
        %v2294 = vsel %vm1431, %v2283, -inf
        %2295 = vmax.xlane.f32.xlu0 %v2294
        %v2296 = vpop.xlane.xlu0 %2295
        %v2297 = vsel %vm1431, %v2284, -inf
        %2298 = vmax.xlane.f32.xlu0 %v2297
        %v2299 = vpop.xlane.xlu0 %2298
        %v2300 = vsub.f32 %v2282, %v2293
        %v2301 = vsub.f32 %v2283, %v2296
        %v2302 = vsub.f32 %v2284, %v2299
        %v2303 = vmul.f32 %v2300, 1.442695
        %v2304 = vpow.pop %v2303
        %v2305 = vmul.f32 %v2301, 1.442695
        %v2306 = vpow.pop %v2305
        %v2307 = vmul.f32 %v2302, 1.442695
        %v2308 = vpow.pop %v2307
        %v2309 = vsel %vm1431, %v2304, 0.0
        %2310 = vadd.xlane.f32.xlu0 %v2309
        %v2311 = vpop.xlane.xlu0 %2310
        %v2312 = vsel %vm1431, %v2306, 0.0
        %2313 = vadd.xlane.f32.xlu0 %v2312
        %v2314 = vpop.xlane.xlu0 %2313
        %v2315 = vsel %vm1431, %v2308, 0.0
        %2316 = vadd.xlane.f32.xlu0 %v2315
        %v2317 = vpop.xlane.xlu0 %2316
        %v2318 = vrcp.pop %v2311
        %v2319 = vrcp.pop %v2314
        %v2320 = vrcp.pop %v2317
        %v2321 = vmul.f32 %v2304, %v2318
        %v2322 = vmul.f32 %v2306, %v2319
        %v2323 = vmul.f32 %v2308, %v2320
        %v2324 = vpack.c.bf16 %v2321, %v2321
        %v2325 = vpack.c.bf16 %v2322, %v2322
        %v2326 = vpack.c.bf16 %v2323, %v2323
        %v2327 = vpack.c.bf16 %v2118, %v2118
        %v2328 = vpack.c.bf16 %v2121, %v2121
        %v2329 = vpack.c.bf16 %v2126, %v2126
        %v2331 = vsel %vm1431, %v2324, 0
        %v2334 = vsel %vm1629, %v2327, 0
        %2336 = vmatprep.subr.bf16.mxu0 0
        %2337 = vmatpush1.bf16.msra.mxu0 %v2334
        %2338 = vmatprep.subr.bf16.mxu0 0
        %2339 = vmatpush1.bf16.msra.mxu0 0
        %2340 = vmatprep.subr.bf16.mxu0 0
        %2341 = vmatpush1.bf16.msra.mxu0 0
        %2342 = vmatprep.subr.bf16.mxu0 0
        %2343 = vmatpush1.bf16.msra.mxu0 0
        %2344 = vmatprep.subr.bf16.mxu0 0
        %2345 = vmatpush1.bf16.msra.mxu0 0
        %2346 = vmatprep.subr.bf16.mxu0 0
        %2347 = vmatpush1.bf16.msra.mxu0 0
        %2348 = vmatprep.subr.bf16.mxu0 0
        %2349 = vmatpush1.bf16.msra.mxu0 0
        %2350 = vmatprep.subr.bf16.mxu0 0
        %2351 = vmatpush1.bf16.msra.mxu0 0
        %2352 = vmatprep.subr.bf16.mxu0 0
        %2353 = vmatpush1.bf16.msra.mxu0 0
        %2354 = vmatprep.subr.bf16.mxu0 0
        %2355 = vmatpush1.bf16.msra.mxu0 0
        %2356 = vmatprep.subr.bf16.mxu0 0
        %2357 = vmatpush1.bf16.msra.mxu0 0
        %2358 = vmatprep.subr.bf16.mxu0 0
        %2359 = vmatpush1.bf16.msra.mxu0 0
        %2360 = vmatprep.subr.bf16.mxu0 0
        %2361 = vmatpush1.bf16.msra.mxu0 0
        %2362 = vmatprep.subr.bf16.mxu0 0
        %2363 = vmatpush1.bf16.msra.mxu0 0
        %2364 = vmatprep.subr.bf16.mxu0 0
        %2365 = vmatpush1.bf16.msra.mxu0 0
        %2366 = vmatprep.subr.bf16.mxu0 0
        %2367 = vmatpush1.bf16.msra.mxu0 0
        %2368 = vmatprep.mubr.bf16.mxu0 0
        %2369 = vmatmul.mubr.bf16.gmra.mrb[0].mxu0 %v2331
        %v2370 = vpop.f32.mrb[0].mxu0
        %v2371 = vadd.f32 0.0, %v2370
        %v2372 = vpop.f32.mrb[0].mxu0
        %v2373 = vpop.f32.mrb[0].mxu0
        %v2374 = vpop.f32.mrb[0].mxu0
        %2375 = vdwg.mxu0
        %v2377 = vsel %vm1431, %v2325, 0
        %v2380 = vsel %vm1629, %v2328, 0
        %2382 = vmatprep.subr.bf16.mxu0 0
        %2383 = vmatpush1.bf16.msra.mxu0 %v2380
        %2384 = vmatprep.subr.bf16.mxu0 0
        %2385 = vmatpush1.bf16.msra.mxu0 0
        %2386 = vmatprep.subr.bf16.mxu0 0
        %2387 = vmatpush1.bf16.msra.mxu0 0
        %2388 = vmatprep.subr.bf16.mxu0 0
        %2389 = vmatpush1.bf16.msra.mxu0 0
        %2390 = vmatprep.subr.bf16.mxu0 0
        %2391 = vmatpush1.bf16.msra.mxu0 0
        %2392 = vmatprep.subr.bf16.mxu0 0
        %2393 = vmatpush1.bf16.msra.mxu0 0
        %2394 = vmatprep.subr.bf16.mxu0 0
        %2395 = vmatpush1.bf16.msra.mxu0 0
        %2396 = vmatprep.subr.bf16.mxu0 0
        %2397 = vmatpush1.bf16.msra.mxu0 0
        %2398 = vmatprep.subr.bf16.mxu0 0
        %2399 = vmatpush1.bf16.msra.mxu0 0
        %2400 = vmatprep.subr.bf16.mxu0 0
        %2401 = vmatpush1.bf16.msra.mxu0 0
        %2402 = vmatprep.subr.bf16.mxu0 0
        %2403 = vmatpush1.bf16.msra.mxu0 0
        %2404 = vmatprep.subr.bf16.mxu0 0
        %2405 = vmatpush1.bf16.msra.mxu0 0
        %2406 = vmatprep.subr.bf16.mxu0 0
        %2407 = vmatpush1.bf16.msra.mxu0 0
        %2408 = vmatprep.subr.bf16.mxu0 0
        %2409 = vmatpush1.bf16.msra.mxu0 0
        %2410 = vmatprep.subr.bf16.mxu0 0
        %2411 = vmatpush1.bf16.msra.mxu0 0
        %2412 = vmatprep.subr.bf16.mxu0 0
        %2413 = vmatpush1.bf16.msra.mxu0 0
        %2414 = vmatprep.mubr.bf16.mxu0 0
        %2415 = vmatmul.mubr.bf16.gmra.mrb[0].mxu0 %v2377
        %v2416 = vpop.f32.mrb[0].mxu0
        %v2417 = vadd.f32 0.0, %v2416
        %v2418 = vpop.f32.mrb[0].mxu0
        %v2419 = vpop.f32.mrb[0].mxu0
        %v2420 = vpop.f32.mrb[0].mxu0
        %2421 = vdwg.mxu0
        %v2423 = vsel %vm1431, %v2326, 0
        %v2426 = vsel %vm1629, %v2329, 0
        %2428 = vmatprep.subr.bf16.mxu0 0
        %2429 = vmatpush1.bf16.msra.mxu0 %v2426
        %2430 = vmatprep.subr.bf16.mxu0 0
        %2431 = vmatpush1.bf16.msra.mxu0 0
        %2432 = vmatprep.subr.bf16.mxu0 0
        %2433 = vmatpush1.bf16.msra.mxu0 0
        %2434 = vmatprep.subr.bf16.mxu0 0
        %2435 = vmatpush1.bf16.msra.mxu0 0
        %2436 = vmatprep.subr.bf16.mxu0 0
        %2437 = vmatpush1.bf16.msra.mxu0 0
        %2438 = vmatprep.subr.bf16.mxu0 0
        %2439 = vmatpush1.bf16.msra.mxu0 0
        %2440 = vmatprep.subr.bf16.mxu0 0
        %2441 = vmatpush1.bf16.msra.mxu0 0
        %2442 = vmatprep.subr.bf16.mxu0 0
        %2443 = vmatpush1.bf16.msra.mxu0 0
        %2444 = vmatprep.subr.bf16.mxu0 0
        %2445 = vmatpush1.bf16.msra.mxu0 0
        %2446 = vmatprep.subr.bf16.mxu0 0
        %2447 = vmatpush1.bf16.msra.mxu0 0
        %2448 = vmatprep.subr.bf16.mxu0 0
        %2449 = vmatpush1.bf16.msra.mxu0 0
        %2450 = vmatprep.subr.bf16.mxu0 0
        %2451 = vmatpush1.bf16.msra.mxu0 0
        %2452 = vmatprep.subr.bf16.mxu0 0
        %2453 = vmatpush1.bf16.msra.mxu0 0
        %2454 = vmatprep.subr.bf16.mxu0 0
        %2455 = vmatpush1.bf16.msra.mxu0 0
        %2456 = vmatprep.subr.bf16.mxu0 0
        %2457 = vmatpush1.bf16.msra.mxu0 0
        %2458 = vmatprep.subr.bf16.mxu0 0
        %2459 = vmatpush1.bf16.msra.mxu0 0
        %2460 = vmatprep.mubr.bf16.mxu0 0
        %2461 = vmatmul.mubr.bf16.gmra.mrb[0].mxu0 %v2423
        %v2462 = vpop.f32.mrb[0].mxu0
        %v2463 = vadd.f32 0.0, %v2462
        %v2464 = vpop.f32.mrb[0].mxu0
        %v2465 = vpop.f32.mrb[0].mxu0
        %v2466 = vpop.f32.mrb[0].mxu0
        %2467 = vdwg.mxu0
        %v2468 = vpack.c.bf16 %v2417, %v2371
        %v2469 = vpack.c.bf16 %v2463, %v2463
        %s2470 = scalar_lea.vmem %s879, 4
        %v2471 = vld [vmem:[%s2470] sm:$0xf]
        %v2473 = vsel %vm1431, %v2468, 0
        %v2476 = vsel %vm1431, %v2469, 0
        %v2479 = vsel %vm1629, %v2471, 0
        %2481 = vmatprep.subr.bf16.mxu0 0
        %2482 = vmatpush1.bf16.msra.mxu0 %v2479
        %2483 = vmatprep.subr.bf16.mxu0 0
        %2484 = vmatpush1.bf16.msra.mxu0 0
        %2485 = vmatprep.subr.bf16.mxu0 0
        %2486 = vmatpush1.bf16.msra.mxu0 0
        %2487 = vmatprep.subr.bf16.mxu0 0
        %2488 = vmatpush1.bf16.msra.mxu0 0
        %2489 = vmatprep.subr.bf16.mxu0 0
        %2490 = vmatpush1.bf16.msra.mxu0 0
        %2491 = vmatprep.subr.bf16.mxu0 0
        %2492 = vmatpush1.bf16.msra.mxu0 0
        %2493 = vmatprep.subr.bf16.mxu0 0
        %2494 = vmatpush1.bf16.msra.mxu0 0
        %2495 = vmatprep.subr.bf16.mxu0 0
        %2496 = vmatpush1.bf16.msra.mxu0 0
        %2497 = vmatprep.subr.bf16.mxu0 0
        %2498 = vmatpush1.bf16.msra.mxu0 0
        %2499 = vmatprep.subr.bf16.mxu0 0
        %2500 = vmatpush1.bf16.msra.mxu0 0
        %2501 = vmatprep.subr.bf16.mxu0 0
        %2502 = vmatpush1.bf16.msra.mxu0 0
        %2503 = vmatprep.subr.bf16.mxu0 0
        %2504 = vmatpush1.bf16.msra.mxu0 0
        %2505 = vmatprep.subr.bf16.mxu0 0
        %2506 = vmatpush1.bf16.msra.mxu0 0
        %2507 = vmatprep.subr.bf16.mxu0 0
        %2508 = vmatpush1.bf16.msra.mxu0 0
        %2509 = vmatprep.subr.bf16.mxu0 0
        %2510 = vmatpush1.bf16.msra.mxu0 0
        %2511 = vmatprep.subr.bf16.mxu0 0
        %2512 = vmatpush1.bf16.msra.mxu0 0
        %2513 = vmatprep.mubr.bf16.mxu0 0
        %2514 = vmatmul.mubr.bf16.gmra.mrb[0].mxu0 %v2473
        %v2515 = vpop.f32.mrb[0].mxu0
        %v2516 = vadd.f32 0.0, %v2515
        %v2517 = vpop.f32.mrb[0].mxu0
        %v2518 = vpop.f32.mrb[0].mxu0
        %v2519 = vadd.f32 0.0, %v2518
        %v2520 = vpop.f32.mrb[0].mxu0
        %2521 = vmatprep.mubr.bf16.mxu0 0
        %2522 = vmatmul.mubr.bf16.gmra.mrb[0].mxu0 %v2476
        %v2523 = vpop.f32.mrb[0].mxu0
        %v2524 = vadd.f32 0.0, %v2523
        %v2525 = vpop.f32.mrb[0].mxu0
        %v2526 = vpop.f32.mrb[0].mxu0
        %v2527 = vpop.f32.mrb[0].mxu0
        %2528 = vdwg.mxu0
        %v2530 = vsel %vm1431, %v1765, 0
        %v2533 = vsel %vm1431, %v1766, 0
        %v2536 = vsel %vm1629, %v1767, 0
        %2538 = vmatprep.subr.bf16.mxu0 0
        %2539 = vmatpush1.bf16.msra.mxu0 %v2536
        %2540 = vmatprep.subr.bf16.mxu0 0
        %2541 = vmatpush1.bf16.msra.mxu0 0
        %2542 = vmatprep.subr.bf16.mxu0 0
        %2543 = vmatpush1.bf16.msra.mxu0 0
        %2544 = vmatprep.subr.bf16.mxu0 0
        %2545 = vmatpush1.bf16.msra.mxu0 0
        %2546 = vmatprep.subr.bf16.mxu0 0
        %2547 = vmatpush1.bf16.msra.mxu0 0
        %2548 = vmatprep.subr.bf16.mxu0 0
        %2549 = vmatpush1.bf16.msra.mxu0 0
        %2550 = vmatprep.subr.bf16.mxu0 0
        %2551 = vmatpush1.bf16.msra.mxu0 0
        %2552 = vmatprep.subr.bf16.mxu0 0
        %2553 = vmatpush1.bf16.msra.mxu0 0
        %2554 = vmatprep.subr.bf16.mxu0 0
        %2555 = vmatpush1.bf16.msra.mxu0 0
        %2556 = vmatprep.subr.bf16.mxu0 0
        %2557 = vmatpush1.bf16.msra.mxu0 0
        %2558 = vmatprep.subr.bf16.mxu0 0
        %2559 = vmatpush1.bf16.msra.mxu0 0
        %2560 = vmatprep.subr.bf16.mxu0 0
        %2561 = vmatpush1.bf16.msra.mxu0 0
        %2562 = vmatprep.subr.bf16.mxu0 0
        %2563 = vmatpush1.bf16.msra.mxu0 0
        %2564 = vmatprep.subr.bf16.mxu0 0
        %2565 = vmatpush1.bf16.msra.mxu0 0
        %2566 = vmatprep.subr.bf16.mxu0 0
        %2567 = vmatpush1.bf16.msra.mxu0 0
        %2568 = vmatprep.subr.bf16.mxu0 0
        %2569 = vmatpush1.bf16.msra.mxu0 0
        %2570 = vmatprep.mubr.bf16.mxu0 0
        %2571 = vmatmul.mubr.bf16.gmra.mrb[0].mxu0 %v2530
        %v2572 = vpop.f32.mrb[0].mxu0
        %v2573 = vadd.f32 %v2516, %v2572
        %v2574 = vpop.f32.mrb[0].mxu0
        %v2575 = vpop.f32.mrb[0].mxu0
        %v2576 = vadd.f32 %v2519, %v2575
        %v2577 = vpop.f32.mrb[0].mxu0
        %2578 = vmatprep.mubr.bf16.mxu0 0
        %2579 = vmatmul.mubr.bf16.gmra.mrb[0].mxu0 %v2533
        %v2580 = vpop.f32.mrb[0].mxu0
        %v2581 = vadd.f32 %v2524, %v2580
        %v2582 = vpop.f32.mrb[0].mxu0
        %v2583 = vpop.f32.mrb[0].mxu0
        %v2584 = vpop.f32.mrb[0].mxu0
        %2585 = vdwg.mxu0
        %s2586 = scalar_lea.vmem %s852, 128
        %v2587 = vld [vmem:[%s2586] sm:$0xf]
        %v2588 = vld [vmem:[%s2586 + $0x4] sm:$0xf]
        %v2589 = vld [vmem:[%s2586 + $0x8] sm:$0xf]
        %v2590 = vld [vmem:[%s2586 + $0xc] sm:$0xf]
        %v2591 = vld [vmem:[%s2586 + $0x10] sm:$0xf]
        %v2592 = vld [vmem:[%s2586 + $0x14] sm:$0xf]
        %v2593 = vld [vmem:[%s2586 + $0x18] sm:$0xf]
        %v2594 = vld [vmem:[%s2586 + $0x1c] sm:$0xf]
        %v2595 = vld [vmem:[%s2586 + $0x20] sm:$0xf]
        %v2596 = vld [vmem:[%s2586 + $0x24] sm:$0xf]
        %v2597 = vld [vmem:[%s2586 + $0x28] sm:$0xf]
        %v2598 = vld [vmem:[%s2586 + $0x2c] sm:$0xf]
        %v2599 = vld [vmem:[%s2586 + $0x30] sm:$0xf]
        %v2600 = vld [vmem:[%s2586 + $0x34] sm:$0xf]
        %v2601 = vld [vmem:[%s2586 + $0x38] sm:$0xf]
        %v2602 = vld [vmem:[%s2586 + $0x3c] sm:$0xf]
        %s2603 = scalar_lea.vmem %s856, 2
        %v2604 = vld [vmem:[%s2603] sm:$0x1]
        %v2606 = vlaneseq
        %v2607 = vshrl.u32 %v2606, 7
        %v2608 = vsub.s32 0, %v2607
        %v2609 = vrot.slane %v2604, %v2608
        %v2627 = vunpack.c.l.b16 %v2587
        %v2628 = vunpack.c.l.b16 %v2588
        %v2629 = vunpack.c.l.b16 %v2589
        %v2630 = vunpack.c.l.b16 %v2590
        %v2631 = vunpack.c.l.b16 %v2591
        %v2632 = vunpack.c.l.b16 %v2592
        %v2633 = vunpack.c.l.b16 %v2593
        %v2634 = vunpack.c.l.b16 %v2594
        %v2635 = vunpack.c.l.b16 %v2595
        %v2636 = vunpack.c.l.b16 %v2596
        %v2637 = vunpack.c.l.b16 %v2597
        %v2638 = vunpack.c.l.b16 %v2598
        %v2639 = vunpack.c.l.b16 %v2599
        %v2640 = vunpack.c.l.b16 %v2600
        %v2641 = vunpack.c.l.b16 %v2601
        %v2642 = vunpack.c.l.b16 %v2602
        %v2643 = vpack.c.b16 %v2628, %v2627
        %v2644 = vpack.c.b16 %v2630, %v2629
        %v2645 = vpack.c.b16 %v2632, %v2631
        %v2646 = vpack.c.b16 %v2634, %v2633
        %v2647 = vpack.c.b16 %v2636, %v2635
        %v2648 = vpack.c.b16 %v2638, %v2637
        %v2649 = vpack.c.b16 %v2640, %v2639
        %v2650 = vpack.c.b16 %v2642, %v2641
        %2659 = vmatprep.subr.bf16.mxu0 0
        %2660 = vmatpush1.bf16.msra.mxu0 %v2643
        %2661 = vmatprep.subr.bf16.mxu0 0
        %2662 = vmatpush1.bf16.msra.mxu0 %v2644
        %2663 = vmatprep.subr.bf16.mxu0 0
        %2664 = vmatpush1.bf16.msra.mxu0 %v2645
        %2665 = vmatprep.subr.bf16.mxu0 0
        %2666 = vmatpush1.bf16.msra.mxu0 %v2646
        %2667 = vmatprep.subr.bf16.mxu0 0
        %2668 = vmatpush1.bf16.msra.mxu0 %v2647
        %2669 = vmatprep.subr.bf16.mxu0 0
        %2670 = vmatpush1.bf16.msra.mxu0 %v2648
        %2671 = vmatprep.subr.bf16.mxu0 0
        %2672 = vmatpush1.bf16.msra.mxu0 %v2649
        %2673 = vmatprep.subr.bf16.mxu0 0
        %2674 = vmatpush1.bf16.msra.mxu0 %v2650
        %2675 = vmatprep.subr.bf16.mxu0 0
        %2676 = vmatpush1.bf16.msra.mxu0 0
        %2677 = vmatprep.subr.bf16.mxu0 0
        %2678 = vmatpush1.bf16.msra.mxu0 0
        %2679 = vmatprep.subr.bf16.mxu0 0
        %2680 = vmatpush1.bf16.msra.mxu0 0
        %2681 = vmatprep.subr.bf16.mxu0 0
        %2682 = vmatpush1.bf16.msra.mxu0 0
        %2683 = vmatprep.subr.bf16.mxu0 0
        %2684 = vmatpush1.bf16.msra.mxu0 0
        %2685 = vmatprep.subr.bf16.mxu0 0
        %2686 = vmatpush1.bf16.msra.mxu0 0
        %2687 = vmatprep.subr.bf16.mxu0 0
        %2688 = vmatpush1.bf16.msra.mxu0 0
        %2689 = vmatprep.subr.bf16.mxu0 0
        %2690 = vmatpush1.bf16.msra.mxu0 0
        %2691 = vmatprep.mubr.bf16.mxu0 0
        %2692 = vmatmul.mubr.bf16.gmra.mrb[0].mxu0 %v1066
        %v2693 = vpop.f32.mrb[0].mxu0
        %v2694 = vadd.f32 %v2609, %v2693
        %v2695 = vpop.f32.mrb[0].mxu0
        %v2696 = vpop.f32.mrb[0].mxu0
        %v2697 = vadd.f32 %v2609, %v2696
        %v2698 = vpop.f32.mrb[0].mxu0
        %2699 = vmatprep.mubr.bf16.mxu0 0
        %2700 = vmatmul.mubr.bf16.gmra.mrb[0].mxu0 %v1067
        %v2701 = vpop.f32.mrb[0].mxu0
        %v2702 = vadd.f32 %v2609, %v2701
        %v2703 = vpop.f32.mrb[0].mxu0
        %v2704 = vpop.f32.mrb[0].mxu0
        %v2705 = vpop.f32.mrb[0].mxu0
        %2706 = vdwg.mxu0
        %s2707 = scalar_lea.vmem %s861, 128
        %v2708 = vld [vmem:[%s2707] sm:$0xf]
        %v2709 = vld [vmem:[%s2707 + $0x4] sm:$0xf]
        %v2710 = vld [vmem:[%s2707 + $0x8] sm:$0xf]
        %v2711 = vld [vmem:[%s2707 + $0xc] sm:$0xf]
        %v2712 = vld [vmem:[%s2707 + $0x10] sm:$0xf]
        %v2713 = vld [vmem:[%s2707 + $0x14] sm:$0xf]
        %v2714 = vld [vmem:[%s2707 + $0x18] sm:$0xf]
        %v2715 = vld [vmem:[%s2707 + $0x1c] sm:$0xf]
        %v2716 = vld [vmem:[%s2707 + $0x20] sm:$0xf]
        %v2717 = vld [vmem:[%s2707 + $0x24] sm:$0xf]
        %v2718 = vld [vmem:[%s2707 + $0x28] sm:$0xf]
        %v2719 = vld [vmem:[%s2707 + $0x2c] sm:$0xf]
        %v2720 = vld [vmem:[%s2707 + $0x30] sm:$0xf]
        %v2721 = vld [vmem:[%s2707 + $0x34] sm:$0xf]
        %v2722 = vld [vmem:[%s2707 + $0x38] sm:$0xf]
        %v2723 = vld [vmem:[%s2707 + $0x3c] sm:$0xf]
        %s2724 = scalar_lea.vmem %s865, 2
        %v2725 = vld [vmem:[%s2724] sm:$0x1]
        %v2727 = vlaneseq
        %v2728 = vshrl.u32 %v2727, 7
        %v2729 = vsub.s32 0, %v2728
        %v2730 = vrot.slane %v2725, %v2729
        %v2748 = vunpack.c.l.b16 %v2708
        %v2749 = vunpack.c.l.b16 %v2709
        %v2750 = vunpack.c.l.b16 %v2710
        %v2751 = vunpack.c.l.b16 %v2711
        %v2752 = vunpack.c.l.b16 %v2712
        %v2753 = vunpack.c.l.b16 %v2713
        %v2754 = vunpack.c.l.b16 %v2714
        %v2755 = vunpack.c.l.b16 %v2715
        %v2756 = vunpack.c.l.b16 %v2716
        %v2757 = vunpack.c.l.b16 %v2717
        %v2758 = vunpack.c.l.b16 %v2718
        %v2759 = vunpack.c.l.b16 %v2719
        %v2760 = vunpack.c.l.b16 %v2720
        %v2761 = vunpack.c.l.b16 %v2721
        %v2762 = vunpack.c.l.b16 %v2722
        %v2763 = vunpack.c.l.b16 %v2723
        %v2764 = vpack.c.b16 %v2749, %v2748
        %v2765 = vpack.c.b16 %v2751, %v2750
        %v2766 = vpack.c.b16 %v2753, %v2752
        %v2767 = vpack.c.b16 %v2755, %v2754
        %v2768 = vpack.c.b16 %v2757, %v2756
        %v2769 = vpack.c.b16 %v2759, %v2758
        %v2770 = vpack.c.b16 %v2761, %v2760
        %v2771 = vpack.c.b16 %v2763, %v2762
        %2780 = vmatprep.subr.bf16.mxu0 0
        %2781 = vmatpush1.bf16.msra.mxu0 %v2764
        %2782 = vmatprep.subr.bf16.mxu0 0
        %2783 = vmatpush1.bf16.msra.mxu0 %v2765
        %2784 = vmatprep.subr.bf16.mxu0 0
        %2785 = vmatpush1.bf16.msra.mxu0 %v2766
        %2786 = vmatprep.subr.bf16.mxu0 0
        %2787 = vmatpush1.bf16.msra.mxu0 %v2767
        %2788 = vmatprep.subr.bf16.mxu0 0
        %2789 = vmatpush1.bf16.msra.mxu0 %v2768
        %2790 = vmatprep.subr.bf16.mxu0 0
        %2791 = vmatpush1.bf16.msra.mxu0 %v2769
        %2792 = vmatprep.subr.bf16.mxu0 0
        %2793 = vmatpush1.bf16.msra.mxu0 %v2770
        %2794 = vmatprep.subr.bf16.mxu0 0
        %2795 = vmatpush1.bf16.msra.mxu0 %v2771
        %2796 = vmatprep.subr.bf16.mxu0 0
        %2797 = vmatpush1.bf16.msra.mxu0 0
        %2798 = vmatprep.subr.bf16.mxu0 0
        %2799 = vmatpush1.bf16.msra.mxu0 0
        %2800 = vmatprep.subr.bf16.mxu0 0
        %2801 = vmatpush1.bf16.msra.mxu0 0
        %2802 = vmatprep.subr.bf16.mxu0 0
        %2803 = vmatpush1.bf16.msra.mxu0 0
        %2804 = vmatprep.subr.bf16.mxu0 0
        %2805 = vmatpush1.bf16.msra.mxu0 0
        %2806 = vmatprep.subr.bf16.mxu0 0
        %2807 = vmatpush1.bf16.msra.mxu0 0
        %2808 = vmatprep.subr.bf16.mxu0 0
        %2809 = vmatpush1.bf16.msra.mxu0 0
        %2810 = vmatprep.subr.bf16.mxu0 0
        %2811 = vmatpush1.bf16.msra.mxu0 0
        %2812 = vmatprep.mubr.bf16.mxu0 0
        %2813 = vmatmul.mubr.bf16.gmra.mrb[0].mxu0 %v1066
        %v2814 = vpop.f32.mrb[0].mxu0
        %v2815 = vadd.f32 %v2730, %v2814
        %v2816 = vpop.f32.mrb[0].mxu0
        %v2817 = vpop.f32.mrb[0].mxu0
        %v2818 = vadd.f32 %v2730, %v2817
        %v2819 = vpop.f32.mrb[0].mxu0
        %2820 = vmatprep.mubr.bf16.mxu0 0
        %2821 = vmatmul.mubr.bf16.gmra.mrb[0].mxu0 %v1067
        %v2822 = vpop.f32.mrb[0].mxu0
        %v2823 = vadd.f32 %v2730, %v2822
        %v2824 = vpop.f32.mrb[0].mxu0
        %v2825 = vpop.f32.mrb[0].mxu0
        %v2826 = vpop.f32.mrb[0].mxu0
        %2827 = vdwg.mxu0
        %s2828 = scalar_lea.vmem %s870, 128
        %v2829 = vld [vmem:[%s2828] sm:$0xf]
        %v2830 = vld [vmem:[%s2828 + $0x4] sm:$0xf]
        %v2831 = vld [vmem:[%s2828 + $0x8] sm:$0xf]
        %v2832 = vld [vmem:[%s2828 + $0xc] sm:$0xf]
        %v2833 = vld [vmem:[%s2828 + $0x10] sm:$0xf]
        %v2834 = vld [vmem:[%s2828 + $0x14] sm:$0xf]
        %v2835 = vld [vmem:[%s2828 + $0x18] sm:$0xf]
        %v2836 = vld [vmem:[%s2828 + $0x1c] sm:$0xf]
        %v2837 = vld [vmem:[%s2828 + $0x20] sm:$0xf]
        %v2838 = vld [vmem:[%s2828 + $0x24] sm:$0xf]
        %v2839 = vld [vmem:[%s2828 + $0x28] sm:$0xf]
        %v2840 = vld [vmem:[%s2828 + $0x2c] sm:$0xf]
        %v2841 = vld [vmem:[%s2828 + $0x30] sm:$0xf]
        %v2842 = vld [vmem:[%s2828 + $0x34] sm:$0xf]
        %v2843 = vld [vmem:[%s2828 + $0x38] sm:$0xf]
        %v2844 = vld [vmem:[%s2828 + $0x3c] sm:$0xf]
        %s2845 = scalar_lea.vmem %s874, 2
        %v2846 = vld [vmem:[%s2845] sm:$0x1]
        %v2848 = vlaneseq
        %v2849 = vshrl.u32 %v2848, 7
        %v2850 = vsub.s32 0, %v2849
        %v2851 = vrot.slane %v2846, %v2850
        %v2869 = vunpack.c.l.b16 %v2829
        %v2870 = vunpack.c.l.b16 %v2830
        %v2871 = vunpack.c.l.b16 %v2831
        %v2872 = vunpack.c.l.b16 %v2832
        %v2873 = vunpack.c.l.b16 %v2833
        %v2874 = vunpack.c.l.b16 %v2834
        %v2875 = vunpack.c.l.b16 %v2835
        %v2876 = vunpack.c.l.b16 %v2836
        %v2877 = vunpack.c.l.b16 %v2837
        %v2878 = vunpack.c.l.b16 %v2838
        %v2879 = vunpack.c.l.b16 %v2839
        %v2880 = vunpack.c.l.b16 %v2840
        %v2881 = vunpack.c.l.b16 %v2841
        %v2882 = vunpack.c.l.b16 %v2842
        %v2883 = vunpack.c.l.b16 %v2843
        %v2884 = vunpack.c.l.b16 %v2844
        %v2885 = vpack.c.b16 %v2870, %v2869
        %v2886 = vpack.c.b16 %v2872, %v2871
        %v2887 = vpack.c.b16 %v2874, %v2873
        %v2888 = vpack.c.b16 %v2876, %v2875
        %v2889 = vpack.c.b16 %v2878, %v2877
        %v2890 = vpack.c.b16 %v2880, %v2879
        %v2891 = vpack.c.b16 %v2882, %v2881
        %v2892 = vpack.c.b16 %v2884, %v2883
        %2901 = vmatprep.subr.bf16.mxu0 0
        %2902 = vmatpush1.bf16.msra.mxu0 %v2885
        %2903 = vmatprep.subr.bf16.mxu0 0
        %2904 = vmatpush1.bf16.msra.mxu0 %v2886
        %2905 = vmatprep.subr.bf16.mxu0 0
        %2906 = vmatpush1.bf16.msra.mxu0 %v2887
        %2907 = vmatprep.subr.bf16.mxu0 0
        %2908 = vmatpush1.bf16.msra.mxu0 %v2888
        %2909 = vmatprep.subr.bf16.mxu0 0
        %2910 = vmatpush1.bf16.msra.mxu0 %v2889
        %2911 = vmatprep.subr.bf16.mxu0 0
        %2912 = vmatpush1.bf16.msra.mxu0 %v2890
        %2913 = vmatprep.subr.bf16.mxu0 0
        %2914 = vmatpush1.bf16.msra.mxu0 %v2891
        %2915 = vmatprep.subr.bf16.mxu0 0
        %2916 = vmatpush1.bf16.msra.mxu0 %v2892
        %2917 = vmatprep.subr.bf16.mxu0 0
        %2918 = vmatpush1.bf16.msra.mxu0 0
        %2919 = vmatprep.subr.bf16.mxu0 0
        %2920 = vmatpush1.bf16.msra.mxu0 0
        %2921 = vmatprep.subr.bf16.mxu0 0
        %2922 = vmatpush1.bf16.msra.mxu0 0
        %2923 = vmatprep.subr.bf16.mxu0 0
        %2924 = vmatpush1.bf16.msra.mxu0 0
        %2925 = vmatprep.subr.bf16.mxu0 0
        %2926 = vmatpush1.bf16.msra.mxu0 0
        %2927 = vmatprep.subr.bf16.mxu0 0
        %2928 = vmatpush1.bf16.msra.mxu0 0
        %2929 = vmatprep.subr.bf16.mxu0 0
        %2930 = vmatpush1.bf16.msra.mxu0 0
        %2931 = vmatprep.subr.bf16.mxu0 0
        %2932 = vmatpush1.bf16.msra.mxu0 0
        %2933 = vmatprep.mubr.bf16.mxu0 0
        %2934 = vmatmul.mubr.bf16.gmra.mrb[0].mxu0 %v1066
        %v2935 = vpop.f32.mrb[0].mxu0
        %v2936 = vadd.f32 %v2851, %v2935
        %v2937 = vpop.f32.mrb[0].mxu0
        %v2938 = vpop.f32.mrb[0].mxu0
        %v2939 = vadd.f32 %v2851, %v2938
        %v2940 = vpop.f32.mrb[0].mxu0
        %2941 = vmatprep.mubr.bf16.mxu0 0
        %2942 = vmatmul.mubr.bf16.gmra.mrb[0].mxu0 %v1067
        %v2943 = vpop.f32.mrb[0].mxu0
        %v2944 = vadd.f32 %v2851, %v2943
        %v2945 = vpop.f32.mrb[0].mxu0
        %v2946 = vpop.f32.mrb[0].mxu0
        %v2947 = vpop.f32.mrb[0].mxu0
        %2948 = vdwg.mxu0
        %v2949 = vpack.c.bf16 %v2694, %v2694
        %v2950 = vpack.c.bf16 %v2697, %v2697
        %v2951 = vpack.c.bf16 %v2702, %v2702
        %v2952 = vpack.c.bf16 %v2815, %v2815
        %v2953 = vpack.c.bf16 %v2818, %v2818
        %v2954 = vpack.c.bf16 %v2823, %v2823
        %v2956 = vsel %vm1431, %v2949, 0
        %v2959 = vsel %vm1431, %v2952, 0
        %2961 = vmatprep.subr.bf16.mxu0 0
        %2962 = vmatpush1.bf16.xpose.msra.mxu0 %v2959
        %2963 = vmatprep.subr.bf16.mxu0 0
        %2964 = vmatpush1.bf16.xpose.msra.mxu0 0
        %2965 = vmatprep.subr.bf16.mxu0 0
        %2966 = vmatpush1.bf16.xpose.msra.mxu0 0
        %2967 = vmatprep.subr.bf16.mxu0 0
        %2968 = vmatpush1.bf16.xpose.msra.mxu0 0
        %2969 = vmatprep.subr.bf16.mxu0 0
        %2970 = vmatpush1.bf16.xpose.msra.mxu0 0
        %2971 = vmatprep.subr.bf16.mxu0 0
        %2972 = vmatpush1.bf16.xpose.msra.mxu0 0
        %2973 = vmatprep.subr.bf16.mxu0 0
        %2974 = vmatpush1.bf16.xpose.msra.mxu0 0
        %2975 = vmatprep.subr.bf16.mxu0 0
        %2976 = vmatpush1.bf16.xpose.msra.mxu0 0
        %2977 = vmatprep.subr.bf16.mxu0 0
        %2978 = vmatpush1.bf16.xpose.msra.mxu0 0
        %2979 = vmatprep.subr.bf16.mxu0 0
        %2980 = vmatpush1.bf16.xpose.msra.mxu0 0
        %2981 = vmatprep.subr.bf16.mxu0 0
        %2982 = vmatpush1.bf16.xpose.msra.mxu0 0
        %2983 = vmatprep.subr.bf16.mxu0 0
        %2984 = vmatpush1.bf16.xpose.msra.mxu0 0
        %2985 = vmatprep.subr.bf16.mxu0 0
        %2986 = vmatpush1.bf16.xpose.msra.mxu0 0
        %2987 = vmatprep.subr.bf16.mxu0 0
        %2988 = vmatpush1.bf16.xpose.msra.mxu0 0
        %2989 = vmatprep.subr.bf16.mxu0 0
        %2990 = vmatpush1.bf16.xpose.msra.mxu0 0
        %2991 = vmatprep.subr.bf16.mxu0 0
        %2992 = vmatpush1.bf16.xpose.msra.mxu0 0
        %2993 = vmatprep.mubr.bf16.mxu0 0
        %2994 = vmatmul.mubr.bf16.gmra.mrb[0].mxu0 %v2956
        %v2995 = vpop.f32.mrb[0].mxu0
        %v2996 = vadd.f32 0.0, %v2995
        %v2997 = vpop.f32.mrb[0].mxu0
        %v2998 = vpop.f32.mrb[0].mxu0
        %v2999 = vpop.f32.mrb[0].mxu0
        %3000 = vdwg.mxu0
        %v3002 = vsel %vm1431, %v2950, 0
        %v3005 = vsel %vm1431, %v2953, 0
        %3007 = vmatprep.subr.bf16.mxu0 0
        %3008 = vmatpush1.bf16.xpose.msra.mxu0 %v3005
        %3009 = vmatprep.subr.bf16.mxu0 0
        %3010 = vmatpush1.bf16.xpose.msra.mxu0 0
        %3011 = vmatprep.subr.bf16.mxu0 0
        %3012 = vmatpush1.bf16.xpose.msra.mxu0 0
        %3013 = vmatprep.subr.bf16.mxu0 0
        %3014 = vmatpush1.bf16.xpose.msra.mxu0 0
        %3015 = vmatprep.subr.bf16.mxu0 0
        %3016 = vmatpush1.bf16.xpose.msra.mxu0 0
        %3017 = vmatprep.subr.bf16.mxu0 0
        %3018 = vmatpush1.bf16.xpose.msra.mxu0 0
        %3019 = vmatprep.subr.bf16.mxu0 0
        %3020 = vmatpush1.bf16.xpose.msra.mxu0 0
        %3021 = vmatprep.subr.bf16.mxu0 0
        %3022 = vmatpush1.bf16.xpose.msra.mxu0 0
        %3023 = vmatprep.subr.bf16.mxu0 0
        %3024 = vmatpush1.bf16.xpose.msra.mxu0 0
        %3025 = vmatprep.subr.bf16.mxu0 0
        %3026 = vmatpush1.bf16.xpose.msra.mxu0 0
        %3027 = vmatprep.subr.bf16.mxu0 0
        %3028 = vmatpush1.bf16.xpose.msra.mxu0 0
        %3029 = vmatprep.subr.bf16.mxu0 0
        %3030 = vmatpush1.bf16.xpose.msra.mxu0 0
        %3031 = vmatprep.subr.bf16.mxu0 0
        %3032 = vmatpush1.bf16.xpose.msra.mxu0 0
        %3033 = vmatprep.subr.bf16.mxu0 0
        %3034 = vmatpush1.bf16.xpose.msra.mxu0 0
        %3035 = vmatprep.subr.bf16.mxu0 0
        %3036 = vmatpush1.bf16.xpose.msra.mxu0 0
        %3037 = vmatprep.subr.bf16.mxu0 0
        %3038 = vmatpush1.bf16.xpose.msra.mxu0 0
        %3039 = vmatprep.mubr.bf16.mxu0 0
        %3040 = vmatmul.mubr.bf16.gmra.mrb[0].mxu0 %v3002
        %v3041 = vpop.f32.mrb[0].mxu0
        %v3042 = vadd.f32 0.0, %v3041
        %v3043 = vpop.f32.mrb[0].mxu0
        %v3044 = vpop.f32.mrb[0].mxu0
        %v3045 = vpop.f32.mrb[0].mxu0
        %3046 = vdwg.mxu0
        %v3048 = vsel %vm1431, %v2951, 0
        %v3051 = vsel %vm1431, %v2954, 0
        %3053 = vmatprep.subr.bf16.mxu0 0
        %3054 = vmatpush1.bf16.xpose.msra.mxu0 %v3051
        %3055 = vmatprep.subr.bf16.mxu0 0
        %3056 = vmatpush1.bf16.xpose.msra.mxu0 0
        %3057 = vmatprep.subr.bf16.mxu0 0
        %3058 = vmatpush1.bf16.xpose.msra.mxu0 0
        %3059 = vmatprep.subr.bf16.mxu0 0
        %3060 = vmatpush1.bf16.xpose.msra.mxu0 0
        %3061 = vmatprep.subr.bf16.mxu0 0
        %3062 = vmatpush1.bf16.xpose.msra.mxu0 0
        %3063 = vmatprep.subr.bf16.mxu0 0
        %3064 = vmatpush1.bf16.xpose.msra.mxu0 0
        %3065 = vmatprep.subr.bf16.mxu0 0
        %3066 = vmatpush1.bf16.xpose.msra.mxu0 0
        %3067 = vmatprep.subr.bf16.mxu0 0
        %3068 = vmatpush1.bf16.xpose.msra.mxu0 0
        %3069 = vmatprep.subr.bf16.mxu0 0
        %3070 = vmatpush1.bf16.xpose.msra.mxu0 0
        %3071 = vmatprep.subr.bf16.mxu0 0
        %3072 = vmatpush1.bf16.xpose.msra.mxu0 0
        %3073 = vmatprep.subr.bf16.mxu0 0
        %3074 = vmatpush1.bf16.xpose.msra.mxu0 0
        %3075 = vmatprep.subr.bf16.mxu0 0
        %3076 = vmatpush1.bf16.xpose.msra.mxu0 0
        %3077 = vmatprep.subr.bf16.mxu0 0
        %3078 = vmatpush1.bf16.xpose.msra.mxu0 0
        %3079 = vmatprep.subr.bf16.mxu0 0
        %3080 = vmatpush1.bf16.xpose.msra.mxu0 0
        %3081 = vmatprep.subr.bf16.mxu0 0
        %3082 = vmatpush1.bf16.xpose.msra.mxu0 0
        %3083 = vmatprep.subr.bf16.mxu0 0
        %3084 = vmatpush1.bf16.xpose.msra.mxu0 0
        %3085 = vmatprep.mubr.bf16.mxu0 0
        %3086 = vmatmul.mubr.bf16.gmra.mrb[0].mxu0 %v3048
        %v3087 = vpop.f32.mrb[0].mxu0
        %v3088 = vadd.f32 0.0, %v3087
        %v3089 = vpop.f32.mrb[0].mxu0
        %v3090 = vpop.f32.mrb[0].mxu0
        %v3091 = vpop.f32.mrb[0].mxu0
        %3092 = vdwg.mxu0
        %v3093 = vmul.f32 %v2996, 0.35355338
        %v3094 = vmul.f32 %v3042, 0.35355338
        %v3095 = vmul.f32 %v3088, 0.35355338
        %s3096 = scalar_lea.vmem [#allocation2], 48
        %v3097 = vld [vmem:[%s3096] sm:$0xff]
        %v3098 = vld [vmem:[%s3096 + $0x8] sm:$0xff]
        %v3099 = vld [vmem:[%s3096 + $0x10] sm:$0xff]
        %v3100 = vadd.f32 %v3093, %v3097
        %v3101 = vadd.f32 %v3094, %v3098
        %v3102 = vadd.f32 %v3095, %v3099
        // Predicated region
        $region113: #{tpu_custom_call.1} parent=99 // pred_check
          %p3103 = pneg %p1580
        $region114: #{tpu_custom_call.1} parent=99 // pred_check_branch
          %3105 = sbr.rel (%p3103) target = $region116
        $region115: #{tpu_custom_call.1} parent=99 // pred_region
          %3106 = vst.msk [vmem:[%s3096] sm:$0xff] %vm1431, %v3100
          %3107 = vst.msk [vmem:[%s3096 + $0x8] sm:$0xff] %vm1431, %v3101
          %3108 = vst.msk [vmem:[%s3096 + $0x10] sm:$0xff] %vm1431, %v3102
        $region116: #{tpu_custom_call.1} parent=99 // pred_fallthru
          _
        %v3109 = vsel %vm1431, %v3100, -inf
        %3110 = vmax.xlane.f32.xlu0 %v3109
        %v3111 = vpop.xlane.xlu0 %3110
        %v3112 = vsel %vm1431, %v3101, -inf
        %3113 = vmax.xlane.f32.xlu0 %v3112
        %v3114 = vpop.xlane.xlu0 %3113
        %v3115 = vsel %vm1431, %v3102, -inf
        %3116 = vmax.xlane.f32.xlu0 %v3115
        %v3117 = vpop.xlane.xlu0 %3116
        %v3118 = vsub.f32 %v3100, %v3111
        %v3119 = vsub.f32 %v3101, %v3114
        %v3120 = vsub.f32 %v3102, %v3117
        %v3121 = vmul.f32 %v3118, 1.442695
        %v3122 = vpow.pop %v3121
        %v3123 = vmul.f32 %v3119, 1.442695
        %v3124 = vpow.pop %v3123
        %v3125 = vmul.f32 %v3120, 1.442695
        %v3126 = vpow.pop %v3125
        %v3127 = vsel %vm1431, %v3122, 0.0
        %3128 = vadd.xlane.f32.xlu0 %v3127
        %v3129 = vpop.xlane.xlu0 %3128
        %v3130 = vsel %vm1431, %v3124, 0.0
        %3131 = vadd.xlane.f32.xlu0 %v3130
        %v3132 = vpop.xlane.xlu0 %3131
        %v3133 = vsel %vm1431, %v3126, 0.0
        %3134 = vadd.xlane.f32.xlu0 %v3133
        %v3135 = vpop.xlane.xlu0 %3134
        %v3136 = vrcp.pop %v3129
        %v3137 = vrcp.pop %v3132
        %v3138 = vrcp.pop %v3135
        %v3139 = vmul.f32 %v3122, %v3136
        %v3140 = vmul.f32 %v3124, %v3137
        %v3141 = vmul.f32 %v3126, %v3138
        %v3142 = vpack.c.bf16 %v3139, %v3139
        %v3143 = vpack.c.bf16 %v3140, %v3140
        %v3144 = vpack.c.bf16 %v3141, %v3141
        %v3145 = vpack.c.bf16 %v2936, %v2936
        %v3146 = vpack.c.bf16 %v2939, %v2939
        %v3147 = vpack.c.bf16 %v2944, %v2944
        %v3149 = vsel %vm1431, %v3142, 0
        %v3152 = vsel %vm1629, %v3145, 0
        %3154 = vmatprep.subr.bf16.mxu0 0
        %3155 = vmatpush1.bf16.msra.mxu0 %v3152
        %3156 = vmatprep.subr.bf16.mxu0 0
        %3157 = vmatpush1.bf16.msra.mxu0 0
        %3158 = vmatprep.subr.bf16.mxu0 0
        %3159 = vmatpush1.bf16.msra.mxu0 0
        %3160 = vmatprep.subr.bf16.mxu0 0
        %3161 = vmatpush1.bf16.msra.mxu0 0
        %3162 = vmatprep.subr.bf16.mxu0 0
        %3163 = vmatpush1.bf16.msra.mxu0 0
        %3164 = vmatprep.subr.bf16.mxu0 0
        %3165 = vmatpush1.bf16.msra.mxu0 0
        %3166 = vmatprep.subr.bf16.mxu0 0
        %3167 = vmatpush1.bf16.msra.mxu0 0
        %3168 = vmatprep.subr.bf16.mxu0 0
        %3169 = vmatpush1.bf16.msra.mxu0 0
        %3170 = vmatprep.subr.bf16.mxu0 0
        %3171 = vmatpush1.bf16.msra.mxu0 0
        %3172 = vmatprep.subr.bf16.mxu0 0
        %3173 = vmatpush1.bf16.msra.mxu0 0
        %3174 = vmatprep.subr.bf16.mxu0 0
        %3175 = vmatpush1.bf16.msra.mxu0 0
        %3176 = vmatprep.subr.bf16.mxu0 0
        %3177 = vmatpush1.bf16.msra.mxu0 0
        %3178 = vmatprep.subr.bf16.mxu0 0
        %3179 = vmatpush1.bf16.msra.mxu0 0
        %3180 = vmatprep.subr.bf16.mxu0 0
        %3181 = vmatpush1.bf16.msra.mxu0 0
        %3182 = vmatprep.subr.bf16.mxu0 0
        %3183 = vmatpush1.bf16.msra.mxu0 0
        %3184 = vmatprep.subr.bf16.mxu0 0
        %3185 = vmatpush1.bf16.msra.mxu0 0
        %3186 = vmatprep.mubr.bf16.mxu0 0
        %3187 = vmatmul.mubr.bf16.gmra.mrb[0].mxu0 %v3149
        %v3188 = vpop.f32.mrb[0].mxu0
        %v3189 = vadd.f32 0.0, %v3188
        %v3190 = vpop.f32.mrb[0].mxu0
        %v3191 = vpop.f32.mrb[0].mxu0
        %v3192 = vpop.f32.mrb[0].mxu0
        %3193 = vdwg.mxu0
        %v3195 = vsel %vm1431, %v3143, 0
        %v3198 = vsel %vm1629, %v3146, 0
        %3200 = vmatprep.subr.bf16.mxu0 0
        %3201 = vmatpush1.bf16.msra.mxu0 %v3198
        %3202 = vmatprep.subr.bf16.mxu0 0
        %3203 = vmatpush1.bf16.msra.mxu0 0
        %3204 = vmatprep.subr.bf16.mxu0 0
        %3205 = vmatpush1.bf16.msra.mxu0 0
        %3206 = vmatprep.subr.bf16.mxu0 0
        %3207 = vmatpush1.bf16.msra.mxu0 0
        %3208 = vmatprep.subr.bf16.mxu0 0
        %3209 = vmatpush1.bf16.msra.mxu0 0
        %3210 = vmatprep.subr.bf16.mxu0 0
        %3211 = vmatpush1.bf16.msra.mxu0 0
        %3212 = vmatprep.subr.bf16.mxu0 0
        %3213 = vmatpush1.bf16.msra.mxu0 0
        %3214 = vmatprep.subr.bf16.mxu0 0
        %3215 = vmatpush1.bf16.msra.mxu0 0
        %3216 = vmatprep.subr.bf16.mxu0 0
        %3217 = vmatpush1.bf16.msra.mxu0 0
        %3218 = vmatprep.subr.bf16.mxu0 0
        %3219 = vmatpush1.bf16.msra.mxu0 0
        %3220 = vmatprep.subr.bf16.mxu0 0
        %3221 = vmatpush1.bf16.msra.mxu0 0
        %3222 = vmatprep.subr.bf16.mxu0 0
        %3223 = vmatpush1.bf16.msra.mxu0 0
        %3224 = vmatprep.subr.bf16.mxu0 0
        %3225 = vmatpush1.bf16.msra.mxu0 0
        %3226 = vmatprep.subr.bf16.mxu0 0
        %3227 = vmatpush1.bf16.msra.mxu0 0
        %3228 = vmatprep.subr.bf16.mxu0 0
        %3229 = vmatpush1.bf16.msra.mxu0 0
        %3230 = vmatprep.subr.bf16.mxu0 0
        %3231 = vmatpush1.bf16.msra.mxu0 0
        %3232 = vmatprep.mubr.bf16.mxu0 0
        %3233 = vmatmul.mubr.bf16.gmra.mrb[0].mxu0 %v3195
        %v3234 = vpop.f32.mrb[0].mxu0
        %v3235 = vadd.f32 0.0, %v3234
        %v3236 = vpop.f32.mrb[0].mxu0
        %v3237 = vpop.f32.mrb[0].mxu0
        %v3238 = vpop.f32.mrb[0].mxu0
        %3239 = vdwg.mxu0
        %v3241 = vsel %vm1431, %v3144, 0
        %v3244 = vsel %vm1629, %v3147, 0
        %3246 = vmatprep.subr.bf16.mxu0 0
        %3247 = vmatpush1.bf16.msra.mxu0 %v3244
        %3248 = vmatprep.subr.bf16.mxu0 0
        %3249 = vmatpush1.bf16.msra.mxu0 0
        %3250 = vmatprep.subr.bf16.mxu0 0
        %3251 = vmatpush1.bf16.msra.mxu0 0
        %3252 = vmatprep.subr.bf16.mxu0 0
        %3253 = vmatpush1.bf16.msra.mxu0 0
        %3254 = vmatprep.subr.bf16.mxu0 0
        %3255 = vmatpush1.bf16.msra.mxu0 0
        %3256 = vmatprep.subr.bf16.mxu0 0
        %3257 = vmatpush1.bf16.msra.mxu0 0
        %3258 = vmatprep.subr.bf16.mxu0 0
        %3259 = vmatpush1.bf16.msra.mxu0 0
        %3260 = vmatprep.subr.bf16.mxu0 0
        %3261 = vmatpush1.bf16.msra.mxu0 0
        %3262 = vmatprep.subr.bf16.mxu0 0
        %3263 = vmatpush1.bf16.msra.mxu0 0
        %3264 = vmatprep.subr.bf16.mxu0 0
        %3265 = vmatpush1.bf16.msra.mxu0 0
        %3266 = vmatprep.subr.bf16.mxu0 0
        %3267 = vmatpush1.bf16.msra.mxu0 0
        %3268 = vmatprep.subr.bf16.mxu0 0
        %3269 = vmatpush1.bf16.msra.mxu0 0
        %3270 = vmatprep.subr.bf16.mxu0 0
        %3271 = vmatpush1.bf16.msra.mxu0 0
        %3272 = vmatprep.subr.bf16.mxu0 0
        %3273 = vmatpush1.bf16.msra.mxu0 0
        %3274 = vmatprep.subr.bf16.mxu0 0
        %3275 = vmatpush1.bf16.msra.mxu0 0
        %3276 = vmatprep.subr.bf16.mxu0 0
        %3277 = vmatpush1.bf16.msra.mxu0 0
        %3278 = vmatprep.mubr.bf16.mxu0 0
        %3279 = vmatmul.mubr.bf16.gmra.mrb[0].mxu0 %v3241
        %v3280 = vpop.f32.mrb[0].mxu0
        %v3281 = vadd.f32 0.0, %v3280
        %v3282 = vpop.f32.mrb[0].mxu0
        %v3283 = vpop.f32.mrb[0].mxu0
        %v3284 = vpop.f32.mrb[0].mxu0
        %3285 = vdwg.mxu0
        %v3286 = vpack.c.bf16 %v3235, %v3189
        %v3287 = vpack.c.bf16 %v3281, %v3281
        %s3288 = scalar_lea.vmem %s879, 8
        %v3289 = vld [vmem:[%s3288] sm:$0xf]
        %v3291 = vsel %vm1431, %v3286, 0
        %v3294 = vsel %vm1431, %v3287, 0
        %v3297 = vsel %vm1629, %v3289, 0
        %3299 = vmatprep.subr.bf16.mxu0 0
        %3300 = vmatpush1.bf16.msra.mxu0 %v3297
        %3301 = vmatprep.subr.bf16.mxu0 0
        %3302 = vmatpush1.bf16.msra.mxu0 0
        %3303 = vmatprep.subr.bf16.mxu0 0
        %3304 = vmatpush1.bf16.msra.mxu0 0
        %3305 = vmatprep.subr.bf16.mxu0 0
        %3306 = vmatpush1.bf16.msra.mxu0 0
        %3307 = vmatprep.subr.bf16.mxu0 0
        %3308 = vmatpush1.bf16.msra.mxu0 0
        %3309 = vmatprep.subr.bf16.mxu0 0
        %3310 = vmatpush1.bf16.msra.mxu0 0
        %3311 = vmatprep.subr.bf16.mxu0 0
        %3312 = vmatpush1.bf16.msra.mxu0 0
        %3313 = vmatprep.subr.bf16.mxu0 0
        %3314 = vmatpush1.bf16.msra.mxu0 0
        %3315 = vmatprep.subr.bf16.mxu0 0
        %3316 = vmatpush1.bf16.msra.mxu0 0
        %3317 = vmatprep.subr.bf16.mxu0 0
        %3318 = vmatpush1.bf16.msra.mxu0 0
        %3319 = vmatprep.subr.bf16.mxu0 0
        %3320 = vmatpush1.bf16.msra.mxu0 0
        %3321 = vmatprep.subr.bf16.mxu0 0
        %3322 = vmatpush1.bf16.msra.mxu0 0
        %3323 = vmatprep.subr.bf16.mxu0 0
        %3324 = vmatpush1.bf16.msra.mxu0 0
        %3325 = vmatprep.subr.bf16.mxu0 0
        %3326 = vmatpush1.bf16.msra.mxu0 0
        %3327 = vmatprep.subr.bf16.mxu0 0
        %3328 = vmatpush1.bf16.msra.mxu0 0
        %3329 = vmatprep.subr.bf16.mxu0 0
        %3330 = vmatpush1.bf16.msra.mxu0 0
        %3331 = vmatprep.mubr.bf16.mxu0 0
        %3332 = vmatmul.mubr.bf16.gmra.mrb[0].mxu0 %v3291
        %v3333 = vpop.f32.mrb[0].mxu0
        %v3334 = vadd.f32 0.0, %v3333
        %v3335 = vpop.f32.mrb[0].mxu0
        %v3336 = vpop.f32.mrb[0].mxu0
        %v3337 = vadd.f32 0.0, %v3336
        %v3338 = vpop.f32.mrb[0].mxu0
        %3339 = vmatprep.mubr.bf16.mxu0 0
        %3340 = vmatmul.mubr.bf16.gmra.mrb[0].mxu0 %v3294
        %v3341 = vpop.f32.mrb[0].mxu0
        %v3342 = vadd.f32 0.0, %v3341
        %v3343 = vpop.f32.mrb[0].mxu0
        %v3344 = vpop.f32.mrb[0].mxu0
        %v3345 = vpop.f32.mrb[0].mxu0
        %3346 = vdwg.mxu0
        %v3347 = vadd.f32 %v2573, %v3334
        %v3348 = vadd.f32 %v2576, %v3337
        %v3349 = vadd.f32 %v2581, %v3342
        %s3350 = scalar_lea.vmem %s852, 192
        %v3351 = vld [vmem:[%s3350] sm:$0xf]
        %v3352 = vld [vmem:[%s3350 + $0x4] sm:$0xf]
        %v3353 = vld [vmem:[%s3350 + $0x8] sm:$0xf]
        %v3354 = vld [vmem:[%s3350 + $0xc] sm:$0xf]
        %v3355 = vld [vmem:[%s3350 + $0x10] sm:$0xf]
        %v3356 = vld [vmem:[%s3350 + $0x14] sm:$0xf]
        %v3357 = vld [vmem:[%s3350 + $0x18] sm:$0xf]
        %v3358 = vld [vmem:[%s3350 + $0x1c] sm:$0xf]
        %v3359 = vld [vmem:[%s3350 + $0x20] sm:$0xf]
        %v3360 = vld [vmem:[%s3350 + $0x24] sm:$0xf]
        %v3361 = vld [vmem:[%s3350 + $0x28] sm:$0xf]
        %v3362 = vld [vmem:[%s3350 + $0x2c] sm:$0xf]
        %v3363 = vld [vmem:[%s3350 + $0x30] sm:$0xf]
        %v3364 = vld [vmem:[%s3350 + $0x34] sm:$0xf]
        %v3365 = vld [vmem:[%s3350 + $0x38] sm:$0xf]
        %v3366 = vld [vmem:[%s3350 + $0x3c] sm:$0xf]
        %s3367 = scalar_lea.vmem %s856, 3
        %v3368 = vld [vmem:[%s3367] sm:$0x1]
        %v3370 = vlaneseq
        %v3371 = vshrl.u32 %v3370, 7
        %v3372 = vsub.s32 0, %v3371
        %v3373 = vrot.slane %v3368, %v3372
        %v3391 = vunpack.c.l.b16 %v3351
        %v3392 = vunpack.c.l.b16 %v3352
        %v3393 = vunpack.c.l.b16 %v3353
        %v3394 = vunpack.c.l.b16 %v3354
        %v3395 = vunpack.c.l.b16 %v3355
        %v3396 = vunpack.c.l.b16 %v3356
        %v3397 = vunpack.c.l.b16 %v3357
        %v3398 = vunpack.c.l.b16 %v3358
        %v3399 = vunpack.c.l.b16 %v3359
        %v3400 = vunpack.c.l.b16 %v3360
        %v3401 = vunpack.c.l.b16 %v3361
        %v3402 = vunpack.c.l.b16 %v3362
        %v3403 = vunpack.c.l.b16 %v3363
        %v3404 = vunpack.c.l.b16 %v3364
        %v3405 = vunpack.c.l.b16 %v3365
        %v3406 = vunpack.c.l.b16 %v3366
        %v3407 = vpack.c.b16 %v3392, %v3391
        %v3408 = vpack.c.b16 %v3394, %v3393
        %v3409 = vpack.c.b16 %v3396, %v3395
        %v3410 = vpack.c.b16 %v3398, %v3397
        %v3411 = vpack.c.b16 %v3400, %v3399
        %v3412 = vpack.c.b16 %v3402, %v3401
        %v3413 = vpack.c.b16 %v3404, %v3403
        %v3414 = vpack.c.b16 %v3406, %v3405
        %3423 = vmatprep.subr.bf16.mxu0 0
        %3424 = vmatpush1.bf16.msra.mxu0 %v3407
        %3425 = vmatprep.subr.bf16.mxu0 0
        %3426 = vmatpush1.bf16.msra.mxu0 %v3408
        %3427 = vmatprep.subr.bf16.mxu0 0
        %3428 = vmatpush1.bf16.msra.mxu0 %v3409
        %3429 = vmatprep.subr.bf16.mxu0 0
        %3430 = vmatpush1.bf16.msra.mxu0 %v3410
        %3431 = vmatprep.subr.bf16.mxu0 0
        %3432 = vmatpush1.bf16.msra.mxu0 %v3411
        %3433 = vmatprep.subr.bf16.mxu0 0
        %3434 = vmatpush1.bf16.msra.mxu0 %v3412
        %3435 = vmatprep.subr.bf16.mxu0 0
        %3436 = vmatpush1.bf16.msra.mxu0 %v3413
        %3437 = vmatprep.subr.bf16.mxu0 0
        %3438 = vmatpush1.bf16.msra.mxu0 %v3414
        %3439 = vmatprep.subr.bf16.mxu0 0
        %3440 = vmatpush1.bf16.msra.mxu0 0
        %3441 = vmatprep.subr.bf16.mxu0 0
        %3442 = vmatpush1.bf16.msra.mxu0 0
        %3443 = vmatprep.subr.bf16.mxu0 0
        %3444 = vmatpush1.bf16.msra.mxu0 0
        %3445 = vmatprep.subr.bf16.mxu0 0
        %3446 = vmatpush1.bf16.msra.mxu0 0
        %3447 = vmatprep.subr.bf16.mxu0 0
        %3448 = vmatpush1.bf16.msra.mxu0 0
        %3449 = vmatprep.subr.bf16.mxu0 0
        %3450 = vmatpush1.bf16.msra.mxu0 0
        %3451 = vmatprep.subr.bf16.mxu0 0
        %3452 = vmatpush1.bf16.msra.mxu0 0
        %3453 = vmatprep.subr.bf16.mxu0 0
        %3454 = vmatpush1.bf16.msra.mxu0 0
        %3455 = vmatprep.mubr.bf16.mxu0 0
        %3456 = vmatmul.mubr.bf16.gmra.mrb[0].mxu0 %v1066
        %v3457 = vpop.f32.mrb[0].mxu0
        %v3458 = vadd.f32 %v3373, %v3457
        %v3459 = vpop.f32.mrb[0].mxu0
        %v3460 = vpop.f32.mrb[0].mxu0
        %v3461 = vadd.f32 %v3373, %v3460
        %v3462 = vpop.f32.mrb[0].mxu0
        %3463 = vmatprep.mubr.bf16.mxu0 0
        %3464 = vmatmul.mubr.bf16.gmra.mrb[0].mxu0 %v1067
        %v3465 = vpop.f32.mrb[0].mxu0
        %v3466 = vadd.f32 %v3373, %v3465
        %v3467 = vpop.f32.mrb[0].mxu0
        %v3468 = vpop.f32.mrb[0].mxu0
        %v3469 = vpop.f32.mrb[0].mxu0
        %3470 = vdwg.mxu0
        %s3471 = scalar_lea.vmem %s861, 192
        %v3472 = vld [vmem:[%s3471] sm:$0xf]
        %v3473 = vld [vmem:[%s3471 + $0x4] sm:$0xf]
        %v3474 = vld [vmem:[%s3471 + $0x8] sm:$0xf]
        %v3475 = vld [vmem:[%s3471 + $0xc] sm:$0xf]
        %v3476 = vld [vmem:[%s3471 + $0x10] sm:$0xf]
        %v3477 = vld [vmem:[%s3471 + $0x14] sm:$0xf]
        %v3478 = vld [vmem:[%s3471 + $0x18] sm:$0xf]
        %v3479 = vld [vmem:[%s3471 + $0x1c] sm:$0xf]
        %v3480 = vld [vmem:[%s3471 + $0x20] sm:$0xf]
        %v3481 = vld [vmem:[%s3471 + $0x24] sm:$0xf]
        %v3482 = vld [vmem:[%s3471 + $0x28] sm:$0xf]
        %v3483 = vld [vmem:[%s3471 + $0x2c] sm:$0xf]
        %v3484 = vld [vmem:[%s3471 + $0x30] sm:$0xf]
        %v3485 = vld [vmem:[%s3471 + $0x34] sm:$0xf]
        %v3486 = vld [vmem:[%s3471 + $0x38] sm:$0xf]
        %v3487 = vld [vmem:[%s3471 + $0x3c] sm:$0xf]
        %s3488 = scalar_lea.vmem %s865, 3
        %v3489 = vld [vmem:[%s3488] sm:$0x1]
        %v3491 = vlaneseq
        %v3492 = vshrl.u32 %v3491, 7
        %v3493 = vsub.s32 0, %v3492
        %v3494 = vrot.slane %v3489, %v3493
        %v3512 = vunpack.c.l.b16 %v3472
        %v3513 = vunpack.c.l.b16 %v3473
        %v3514 = vunpack.c.l.b16 %v3474
        %v3515 = vunpack.c.l.b16 %v3475
        %v3516 = vunpack.c.l.b16 %v3476
        %v3517 = vunpack.c.l.b16 %v3477
        %v3518 = vunpack.c.l.b16 %v3478
        %v3519 = vunpack.c.l.b16 %v3479
        %v3520 = vunpack.c.l.b16 %v3480
        %v3521 = vunpack.c.l.b16 %v3481
        %v3522 = vunpack.c.l.b16 %v3482
        %v3523 = vunpack.c.l.b16 %v3483
        %v3524 = vunpack.c.l.b16 %v3484
        %v3525 = vunpack.c.l.b16 %v3485
        %v3526 = vunpack.c.l.b16 %v3486
        %v3527 = vunpack.c.l.b16 %v3487
        %v3528 = vpack.c.b16 %v3513, %v3512
        %v3529 = vpack.c.b16 %v3515, %v3514
        %v3530 = vpack.c.b16 %v3517, %v3516
        %v3531 = vpack.c.b16 %v3519, %v3518
        %v3532 = vpack.c.b16 %v3521, %v3520
        %v3533 = vpack.c.b16 %v3523, %v3522
        %v3534 = vpack.c.b16 %v3525, %v3524
        %v3535 = vpack.c.b16 %v3527, %v3526
        %3544 = vmatprep.subr.bf16.mxu0 0
        %3545 = vmatpush1.bf16.msra.mxu0 %v3528
        %3546 = vmatprep.subr.bf16.mxu0 0
        %3547 = vmatpush1.bf16.msra.mxu0 %v3529
        %3548 = vmatprep.subr.bf16.mxu0 0
        %3549 = vmatpush1.bf16.msra.mxu0 %v3530
        %3550 = vmatprep.subr.bf16.mxu0 0
        %3551 = vmatpush1.bf16.msra.mxu0 %v3531
        %3552 = vmatprep.subr.bf16.mxu0 0
        %3553 = vmatpush1.bf16.msra.mxu0 %v3532
        %3554 = vmatprep.subr.bf16.mxu0 0
        %3555 = vmatpush1.bf16.msra.mxu0 %v3533
        %3556 = vmatprep.subr.bf16.mxu0 0
        %3557 = vmatpush1.bf16.msra.mxu0 %v3534
        %3558 = vmatprep.subr.bf16.mxu0 0
        %3559 = vmatpush1.bf16.msra.mxu0 %v3535
        %3560 = vmatprep.subr.bf16.mxu0 0
        %3561 = vmatpush1.bf16.msra.mxu0 0
        %3562 = vmatprep.subr.bf16.mxu0 0
        %3563 = vmatpush1.bf16.msra.mxu0 0
        %3564 = vmatprep.subr.bf16.mxu0 0
        %3565 = vmatpush1.bf16.msra.mxu0 0
        %3566 = vmatprep.subr.bf16.mxu0 0
        %3567 = vmatpush1.bf16.msra.mxu0 0
        %3568 = vmatprep.subr.bf16.mxu0 0
        %3569 = vmatpush1.bf16.msra.mxu0 0
        %3570 = vmatprep.subr.bf16.mxu0 0
        %3571 = vmatpush1.bf16.msra.mxu0 0
        %3572 = vmatprep.subr.bf16.mxu0 0
        %3573 = vmatpush1.bf16.msra.mxu0 0
        %3574 = vmatprep.subr.bf16.mxu0 0
        %3575 = vmatpush1.bf16.msra.mxu0 0
        %3576 = vmatprep.mubr.bf16.mxu0 0
        %3577 = vmatmul.mubr.bf16.gmra.mrb[0].mxu0 %v1066
        %v3578 = vpop.f32.mrb[0].mxu0
        %v3579 = vadd.f32 %v3494, %v3578
        %v3580 = vpop.f32.mrb[0].mxu0
        %v3581 = vpop.f32.mrb[0].mxu0
        %v3582 = vadd.f32 %v3494, %v3581
        %v3583 = vpop.f32.mrb[0].mxu0
        %3584 = vmatprep.mubr.bf16.mxu0 0
        %3585 = vmatmul.mubr.bf16.gmra.mrb[0].mxu0 %v1067
        %v3586 = vpop.f32.mrb[0].mxu0
        %v3587 = vadd.f32 %v3494, %v3586
        %v3588 = vpop.f32.mrb[0].mxu0
        %v3589 = vpop.f32.mrb[0].mxu0
        %v3590 = vpop.f32.mrb[0].mxu0
        %3591 = vdwg.mxu0
        %s3592 = scalar_lea.vmem %s870, 192
        %v3593 = vld [vmem:[%s3592] sm:$0xf]
        %v3594 = vld [vmem:[%s3592 + $0x4] sm:$0xf]
        %v3595 = vld [vmem:[%s3592 + $0x8] sm:$0xf]
        %v3596 = vld [vmem:[%s3592 + $0xc] sm:$0xf]
        %v3597 = vld [vmem:[%s3592 + $0x10] sm:$0xf]
        %v3598 = vld [vmem:[%s3592 + $0x14] sm:$0xf]
        %v3599 = vld [vmem:[%s3592 + $0x18] sm:$0xf]
        %v3600 = vld [vmem:[%s3592 + $0x1c] sm:$0xf]
        %v3601 = vld [vmem:[%s3592 + $0x20] sm:$0xf]
        %v3602 = vld [vmem:[%s3592 + $0x24] sm:$0xf]
        %v3603 = vld [vmem:[%s3592 + $0x28] sm:$0xf]
        %v3604 = vld [vmem:[%s3592 + $0x2c] sm:$0xf]
        %v3605 = vld [vmem:[%s3592 + $0x30] sm:$0xf]
        %v3606 = vld [vmem:[%s3592 + $0x34] sm:$0xf]
        %v3607 = vld [vmem:[%s3592 + $0x38] sm:$0xf]
        %v3608 = vld [vmem:[%s3592 + $0x3c] sm:$0xf]
        %s3609 = scalar_lea.vmem %s874, 3
        %v3610 = vld [vmem:[%s3609] sm:$0x1]
        %v3612 = vlaneseq
        %v3613 = vshrl.u32 %v3612, 7
        %v3614 = vsub.s32 0, %v3613
        %v3615 = vrot.slane %v3610, %v3614
        %v3633 = vunpack.c.l.b16 %v3593
        %v3634 = vunpack.c.l.b16 %v3594
        %v3635 = vunpack.c.l.b16 %v3595
        %v3636 = vunpack.c.l.b16 %v3596
        %v3637 = vunpack.c.l.b16 %v3597
        %v3638 = vunpack.c.l.b16 %v3598
        %v3639 = vunpack.c.l.b16 %v3599
        %v3640 = vunpack.c.l.b16 %v3600
        %v3641 = vunpack.c.l.b16 %v3601
        %v3642 = vunpack.c.l.b16 %v3602
        %v3643 = vunpack.c.l.b16 %v3603
        %v3644 = vunpack.c.l.b16 %v3604
        %v3645 = vunpack.c.l.b16 %v3605
        %v3646 = vunpack.c.l.b16 %v3606
        %v3647 = vunpack.c.l.b16 %v3607
        %v3648 = vunpack.c.l.b16 %v3608
        %v3649 = vpack.c.b16 %v3634, %v3633
        %v3650 = vpack.c.b16 %v3636, %v3635
        %v3651 = vpack.c.b16 %v3638, %v3637
        %v3652 = vpack.c.b16 %v3640, %v3639
        %v3653 = vpack.c.b16 %v3642, %v3641
        %v3654 = vpack.c.b16 %v3644, %v3643
        %v3655 = vpack.c.b16 %v3646, %v3645
        %v3656 = vpack.c.b16 %v3648, %v3647
        %3665 = vmatprep.subr.bf16.mxu0 0
        %3666 = vmatpush1.bf16.msra.mxu0 %v3649
        %3667 = vmatprep.subr.bf16.mxu0 0
        %3668 = vmatpush1.bf16.msra.mxu0 %v3650
        %3669 = vmatprep.subr.bf16.mxu0 0
        %3670 = vmatpush1.bf16.msra.mxu0 %v3651
        %3671 = vmatprep.subr.bf16.mxu0 0
        %3672 = vmatpush1.bf16.msra.mxu0 %v3652
        %3673 = vmatprep.subr.bf16.mxu0 0
        %3674 = vmatpush1.bf16.msra.mxu0 %v3653
        %3675 = vmatprep.subr.bf16.mxu0 0
        %3676 = vmatpush1.bf16.msra.mxu0 %v3654
        %3677 = vmatprep.subr.bf16.mxu0 0
        %3678 = vmatpush1.bf16.msra.mxu0 %v3655
        %3679 = vmatprep.subr.bf16.mxu0 0
        %3680 = vmatpush1.bf16.msra.mxu0 %v3656
        %3681 = vmatprep.subr.bf16.mxu0 0
        %3682 = vmatpush1.bf16.msra.mxu0 0
        %3683 = vmatprep.subr.bf16.mxu0 0
        %3684 = vmatpush1.bf16.msra.mxu0 0
        %3685 = vmatprep.subr.bf16.mxu0 0
        %3686 = vmatpush1.bf16.msra.mxu0 0
        %3687 = vmatprep.subr.bf16.mxu0 0
        %3688 = vmatpush1.bf16.msra.mxu0 0
        %3689 = vmatprep.subr.bf16.mxu0 0
        %3690 = vmatpush1.bf16.msra.mxu0 0
        %3691 = vmatprep.subr.bf16.mxu0 0
        %3692 = vmatpush1.bf16.msra.mxu0 0
        %3693 = vmatprep.subr.bf16.mxu0 0
        %3694 = vmatpush1.bf16.msra.mxu0 0
        %3695 = vmatprep.subr.bf16.mxu0 0
        %3696 = vmatpush1.bf16.msra.mxu0 0
        %3697 = vmatprep.mubr.bf16.mxu0 0
        %3698 = vmatmul.mubr.bf16.gmra.mrb[0].mxu0 %v1066
        %v3699 = vpop.f32.mrb[0].mxu0
        %v3700 = vadd.f32 %v3615, %v3699
        %v3701 = vpop.f32.mrb[0].mxu0
        %v3702 = vpop.f32.mrb[0].mxu0
        %v3703 = vadd.f32 %v3615, %v3702
        %v3704 = vpop.f32.mrb[0].mxu0
        %3705 = vmatprep.mubr.bf16.mxu0 0
        %3706 = vmatmul.mubr.bf16.gmra.mrb[0].mxu0 %v1067
        %v3707 = vpop.f32.mrb[0].mxu0
        %v3708 = vadd.f32 %v3615, %v3707
        %v3709 = vpop.f32.mrb[0].mxu0
        %v3710 = vpop.f32.mrb[0].mxu0
        %v3711 = vpop.f32.mrb[0].mxu0
        %3712 = vdwg.mxu0
        %v3713 = vpack.c.bf16 %v3458, %v3458
        %v3714 = vpack.c.bf16 %v3461, %v3461
        %v3715 = vpack.c.bf16 %v3466, %v3466
        %v3716 = vpack.c.bf16 %v3579, %v3579
        %v3717 = vpack.c.bf16 %v3582, %v3582
        %v3718 = vpack.c.bf16 %v3587, %v3587
        %v3720 = vsel %vm1431, %v3713, 0
        %v3723 = vsel %vm1431, %v3716, 0
        %3725 = vmatprep.subr.bf16.mxu0 0
        %3726 = vmatpush1.bf16.xpose.msra.mxu0 %v3723
        %3727 = vmatprep.subr.bf16.mxu0 0
        %3728 = vmatpush1.bf16.xpose.msra.mxu0 0
        %3729 = vmatprep.subr.bf16.mxu0 0
        %3730 = vmatpush1.bf16.xpose.msra.mxu0 0
        %3731 = vmatprep.subr.bf16.mxu0 0
        %3732 = vmatpush1.bf16.xpose.msra.mxu0 0
        %3733 = vmatprep.subr.bf16.mxu0 0
        %3734 = vmatpush1.bf16.xpose.msra.mxu0 0
        %3735 = vmatprep.subr.bf16.mxu0 0
        %3736 = vmatpush1.bf16.xpose.msra.mxu0 0
        %3737 = vmatprep.subr.bf16.mxu0 0
        %3738 = vmatpush1.bf16.xpose.msra.mxu0 0
        %3739 = vmatprep.subr.bf16.mxu0 0
        %3740 = vmatpush1.bf16.xpose.msra.mxu0 0
        %3741 = vmatprep.subr.bf16.mxu0 0
        %3742 = vmatpush1.bf16.xpose.msra.mxu0 0
        %3743 = vmatprep.subr.bf16.mxu0 0
        %3744 = vmatpush1.bf16.xpose.msra.mxu0 0
        %3745 = vmatprep.subr.bf16.mxu0 0
        %3746 = vmatpush1.bf16.xpose.msra.mxu0 0
        %3747 = vmatprep.subr.bf16.mxu0 0
        %3748 = vmatpush1.bf16.xpose.msra.mxu0 0
        %3749 = vmatprep.subr.bf16.mxu0 0
        %3750 = vmatpush1.bf16.xpose.msra.mxu0 0
        %3751 = vmatprep.subr.bf16.mxu0 0
        %3752 = vmatpush1.bf16.xpose.msra.mxu0 0
        %3753 = vmatprep.subr.bf16.mxu0 0
        %3754 = vmatpush1.bf16.xpose.msra.mxu0 0
        %3755 = vmatprep.subr.bf16.mxu0 0
        %3756 = vmatpush1.bf16.xpose.msra.mxu0 0
        %3757 = vmatprep.mubr.bf16.mxu0 0
        %3758 = vmatmul.mubr.bf16.gmra.mrb[0].mxu0 %v3720
        %v3759 = vpop.f32.mrb[0].mxu0
        %v3760 = vadd.f32 0.0, %v3759
        %v3761 = vpop.f32.mrb[0].mxu0
        %v3762 = vpop.f32.mrb[0].mxu0
        %v3763 = vpop.f32.mrb[0].mxu0
        %3764 = vdwg.mxu0
        %v3766 = vsel %vm1431, %v3714, 0
        %v3769 = vsel %vm1431, %v3717, 0
        %3771 = vmatprep.subr.bf16.mxu0 0
        %3772 = vmatpush1.bf16.xpose.msra.mxu0 %v3769
        %3773 = vmatprep.subr.bf16.mxu0 0
        %3774 = vmatpush1.bf16.xpose.msra.mxu0 0
        %3775 = vmatprep.subr.bf16.mxu0 0
        %3776 = vmatpush1.bf16.xpose.msra.mxu0 0
        %3777 = vmatprep.subr.bf16.mxu0 0
        %3778 = vmatpush1.bf16.xpose.msra.mxu0 0
        %3779 = vmatprep.subr.bf16.mxu0 0
        %3780 = vmatpush1.bf16.xpose.msra.mxu0 0
        %3781 = vmatprep.subr.bf16.mxu0 0
        %3782 = vmatpush1.bf16.xpose.msra.mxu0 0
        %3783 = vmatprep.subr.bf16.mxu0 0
        %3784 = vmatpush1.bf16.xpose.msra.mxu0 0
        %3785 = vmatprep.subr.bf16.mxu0 0
        %3786 = vmatpush1.bf16.xpose.msra.mxu0 0
        %3787 = vmatprep.subr.bf16.mxu0 0
        %3788 = vmatpush1.bf16.xpose.msra.mxu0 0
        %3789 = vmatprep.subr.bf16.mxu0 0
        %3790 = vmatpush1.bf16.xpose.msra.mxu0 0
        %3791 = vmatprep.subr.bf16.mxu0 0
        %3792 = vmatpush1.bf16.xpose.msra.mxu0 0
        %3793 = vmatprep.subr.bf16.mxu0 0
        %3794 = vmatpush1.bf16.xpose.msra.mxu0 0
        %3795 = vmatprep.subr.bf16.mxu0 0
        %3796 = vmatpush1.bf16.xpose.msra.mxu0 0
        %3797 = vmatprep.subr.bf16.mxu0 0
        %3798 = vmatpush1.bf16.xpose.msra.mxu0 0
        %3799 = vmatprep.subr.bf16.mxu0 0
        %3800 = vmatpush1.bf16.xpose.msra.mxu0 0
        %3801 = vmatprep.subr.bf16.mxu0 0
        %3802 = vmatpush1.bf16.xpose.msra.mxu0 0
        %3803 = vmatprep.mubr.bf16.mxu0 0
        %3804 = vmatmul.mubr.bf16.gmra.mrb[0].mxu0 %v3766
        %v3805 = vpop.f32.mrb[0].mxu0
        %v3806 = vadd.f32 0.0, %v3805
        %v3807 = vpop.f32.mrb[0].mxu0
        %v3808 = vpop.f32.mrb[0].mxu0
        %v3809 = vpop.f32.mrb[0].mxu0
        %3810 = vdwg.mxu0
        %v3812 = vsel %vm1431, %v3715, 0
        %v3815 = vsel %vm1431, %v3718, 0
        %3817 = vmatprep.subr.bf16.mxu0 0
        %3818 = vmatpush1.bf16.xpose.msra.mxu0 %v3815
        %3819 = vmatprep.subr.bf16.mxu0 0
        %3820 = vmatpush1.bf16.xpose.msra.mxu0 0
        %3821 = vmatprep.subr.bf16.mxu0 0
        %3822 = vmatpush1.bf16.xpose.msra.mxu0 0
        %3823 = vmatprep.subr.bf16.mxu0 0
        %3824 = vmatpush1.bf16.xpose.msra.mxu0 0
        %3825 = vmatprep.subr.bf16.mxu0 0
        %3826 = vmatpush1.bf16.xpose.msra.mxu0 0
        %3827 = vmatprep.subr.bf16.mxu0 0
        %3828 = vmatpush1.bf16.xpose.msra.mxu0 0
        %3829 = vmatprep.subr.bf16.mxu0 0
        %3830 = vmatpush1.bf16.xpose.msra.mxu0 0
        %3831 = vmatprep.subr.bf16.mxu0 0
        %3832 = vmatpush1.bf16.xpose.msra.mxu0 0
        %3833 = vmatprep.subr.bf16.mxu0 0
        %3834 = vmatpush1.bf16.xpose.msra.mxu0 0
        %3835 = vmatprep.subr.bf16.mxu0 0
        %3836 = vmatpush1.bf16.xpose.msra.mxu0 0
        %3837 = vmatprep.subr.bf16.mxu0 0
        %3838 = vmatpush1.bf16.xpose.msra.mxu0 0
        %3839 = vmatprep.subr.bf16.mxu0 0
        %3840 = vmatpush1.bf16.xpose.msra.mxu0 0
        %3841 = vmatprep.subr.bf16.mxu0 0
        %3842 = vmatpush1.bf16.xpose.msra.mxu0 0
        %3843 = vmatprep.subr.bf16.mxu0 0
        %3844 = vmatpush1.bf16.xpose.msra.mxu0 0
        %3845 = vmatprep.subr.bf16.mxu0 0
        %3846 = vmatpush1.bf16.xpose.msra.mxu0 0
        %3847 = vmatprep.subr.bf16.mxu0 0
        %3848 = vmatpush1.bf16.xpose.msra.mxu0 0
        %3849 = vmatprep.mubr.bf16.mxu0 0
        %3850 = vmatmul.mubr.bf16.gmra.mrb[0].mxu0 %v3812
        %v3851 = vpop.f32.mrb[0].mxu0
        %v3852 = vadd.f32 0.0, %v3851
        %v3853 = vpop.f32.mrb[0].mxu0
        %v3854 = vpop.f32.mrb[0].mxu0
        %v3855 = vpop.f32.mrb[0].mxu0
        %3856 = vdwg.mxu0
        %v3857 = vmul.f32 %v3760, 0.35355338
        %v3858 = vmul.f32 %v3806, 0.35355338
        %v3859 = vmul.f32 %v3852, 0.35355338
        %s3860 = scalar_lea.vmem [#allocation2], 72
        %v3861 = vld [vmem:[%s3860] sm:$0xff]
        %v3862 = vld [vmem:[%s3860 + $0x8] sm:$0xff]
        %v3863 = vld [vmem:[%s3860 + $0x10] sm:$0xff]
        %v3864 = vadd.f32 %v3857, %v3861
        %v3865 = vadd.f32 %v3858, %v3862
        %v3866 = vadd.f32 %v3859, %v3863
        // Predicated region
        $region117: #{tpu_custom_call.1} parent=99 // pred_check
          %p3867 = pneg %p1580
        $region118: #{tpu_custom_call.1} parent=99 // pred_check_branch
          %3869 = sbr.rel (%p3867) target = $region120
        $region119: #{tpu_custom_call.1} parent=99 // pred_region
          %3870 = vst.msk [vmem:[%s3860] sm:$0xff] %vm1431, %v3864
          %3871 = vst.msk [vmem:[%s3860 + $0x8] sm:$0xff] %vm1431, %v3865
          %3872 = vst.msk [vmem:[%s3860 + $0x10] sm:$0xff] %vm1431, %v3866
        $region120: #{tpu_custom_call.1} parent=99 // pred_fallthru
          _
        %v3873 = vsel %vm1431, %v3864, -inf
        %3874 = vmax.xlane.f32.xlu0 %v3873
        %v3875 = vpop.xlane.xlu0 %3874
        %v3876 = vsel %vm1431, %v3865, -inf
        %3877 = vmax.xlane.f32.xlu0 %v3876
        %v3878 = vpop.xlane.xlu0 %3877
        %v3879 = vsel %vm1431, %v3866, -inf
        %3880 = vmax.xlane.f32.xlu0 %v3879
        %v3881 = vpop.xlane.xlu0 %3880
        %v3882 = vsub.f32 %v3864, %v3875
        %v3883 = vsub.f32 %v3865, %v3878
        %v3884 = vsub.f32 %v3866, %v3881
        %v3885 = vmul.f32 %v3882, 1.442695
        %v3886 = vpow.pop %v3885
        %v3887 = vmul.f32 %v3883, 1.442695
        %v3888 = vpow.pop %v3887
        %v3889 = vmul.f32 %v3884, 1.442695
        %v3890 = vpow.pop %v3889
        %v3891 = vsel %vm1431, %v3886, 0.0
        %3892 = vadd.xlane.f32.xlu0 %v3891
        %v3893 = vpop.xlane.xlu0 %3892
        %v3894 = vsel %vm1431, %v3888, 0.0
        %3895 = vadd.xlane.f32.xlu0 %v3894
        %v3896 = vpop.xlane.xlu0 %3895
        %v3897 = vsel %vm1431, %v3890, 0.0
        %3898 = vadd.xlane.f32.xlu0 %v3897
        %v3899 = vpop.xlane.xlu0 %3898
        %v3900 = vrcp.pop %v3893
        %v3901 = vrcp.pop %v3896
        %v3902 = vrcp.pop %v3899
        %v3903 = vmul.f32 %v3886, %v3900
        %v3904 = vmul.f32 %v3888, %v3901
        %v3905 = vmul.f32 %v3890, %v3902
        %v3906 = vpack.c.bf16 %v3903, %v3903
        %v3907 = vpack.c.bf16 %v3904, %v3904
        %v3908 = vpack.c.bf16 %v3905, %v3905
        %v3909 = vpack.c.bf16 %v3700, %v3700
        %v3910 = vpack.c.bf16 %v3703, %v3703
        %v3911 = vpack.c.bf16 %v3708, %v3708
        %v3913 = vsel %vm1431, %v3906, 0
        %v3916 = vsel %vm1629, %v3909, 0
        %3918 = vmatprep.subr.bf16.mxu0 0
        %3919 = vmatpush1.bf16.msra.mxu0 %v3916
        %3920 = vmatprep.subr.bf16.mxu0 0
        %3921 = vmatpush1.bf16.msra.mxu0 0
        %3922 = vmatprep.subr.bf16.mxu0 0
        %3923 = vmatpush1.bf16.msra.mxu0 0
        %3924 = vmatprep.subr.bf16.mxu0 0
        %3925 = vmatpush1.bf16.msra.mxu0 0
        %3926 = vmatprep.subr.bf16.mxu0 0
        %3927 = vmatpush1.bf16.msra.mxu0 0
        %3928 = vmatprep.subr.bf16.mxu0 0
        %3929 = vmatpush1.bf16.msra.mxu0 0
        %3930 = vmatprep.subr.bf16.mxu0 0
        %3931 = vmatpush1.bf16.msra.mxu0 0
        %3932 = vmatprep.subr.bf16.mxu0 0
        %3933 = vmatpush1.bf16.msra.mxu0 0
        %3934 = vmatprep.subr.bf16.mxu0 0
        %3935 = vmatpush1.bf16.msra.mxu0 0
        %3936 = vmatprep.subr.bf16.mxu0 0
        %3937 = vmatpush1.bf16.msra.mxu0 0
        %3938 = vmatprep.subr.bf16.mxu0 0
        %3939 = vmatpush1.bf16.msra.mxu0 0
        %3940 = vmatprep.subr.bf16.mxu0 0
        %3941 = vmatpush1.bf16.msra.mxu0 0
        %3942 = vmatprep.subr.bf16.mxu0 0
        %3943 = vmatpush1.bf16.msra.mxu0 0
        %3944 = vmatprep.subr.bf16.mxu0 0
        %3945 = vmatpush1.bf16.msra.mxu0 0
        %3946 = vmatprep.subr.bf16.mxu0 0
        %3947 = vmatpush1.bf16.msra.mxu0 0
        %3948 = vmatprep.subr.bf16.mxu0 0
        %3949 = vmatpush1.bf16.msra.mxu0 0
        %3950 = vmatprep.mubr.bf16.mxu0 0
        %3951 = vmatmul.mubr.bf16.gmra.mrb[0].mxu0 %v3913
        %v3952 = vpop.f32.mrb[0].mxu0
        %v3953 = vadd.f32 0.0, %v3952
        %v3954 = vpop.f32.mrb[0].mxu0
        %v3955 = vpop.f32.mrb[0].mxu0
        %v3956 = vpop.f32.mrb[0].mxu0
        %3957 = vdwg.mxu0
        %v3959 = vsel %vm1431, %v3907, 0
        %v3962 = vsel %vm1629, %v3910, 0
        %3964 = vmatprep.subr.bf16.mxu0 0
        %3965 = vmatpush1.bf16.msra.mxu0 %v3962
        %3966 = vmatprep.subr.bf16.mxu0 0
        %3967 = vmatpush1.bf16.msra.mxu0 0
        %3968 = vmatprep.subr.bf16.mxu0 0
        %3969 = vmatpush1.bf16.msra.mxu0 0
        %3970 = vmatprep.subr.bf16.mxu0 0
        %3971 = vmatpush1.bf16.msra.mxu0 0
        %3972 = vmatprep.subr.bf16.mxu0 0
        %3973 = vmatpush1.bf16.msra.mxu0 0
        %3974 = vmatprep.subr.bf16.mxu0 0
        %3975 = vmatpush1.bf16.msra.mxu0 0
        %3976 = vmatprep.subr.bf16.mxu0 0
        %3977 = vmatpush1.bf16.msra.mxu0 0
        %3978 = vmatprep.subr.bf16.mxu0 0
        %3979 = vmatpush1.bf16.msra.mxu0 0
        %3980 = vmatprep.subr.bf16.mxu0 0
        %3981 = vmatpush1.bf16.msra.mxu0 0
        %3982 = vmatprep.subr.bf16.mxu0 0
        %3983 = vmatpush1.bf16.msra.mxu0 0
        %3984 = vmatprep.subr.bf16.mxu0 0
        %3985 = vmatpush1.bf16.msra.mxu0 0
        %3986 = vmatprep.subr.bf16.mxu0 0
        %3987 = vmatpush1.bf16.msra.mxu0 0
        %3988 = vmatprep.subr.bf16.mxu0 0
        %3989 = vmatpush1.bf16.msra.mxu0 0
        %3990 = vmatprep.subr.bf16.mxu0 0
        %3991 = vmatpush1.bf16.msra.mxu0 0
        %3992 = vmatprep.subr.bf16.mxu0 0
        %3993 = vmatpush1.bf16.msra.mxu0 0
        %3994 = vmatprep.subr.bf16.mxu0 0
        %3995 = vmatpush1.bf16.msra.mxu0 0
        %3996 = vmatprep.mubr.bf16.mxu0 0
        %3997 = vmatmul.mubr.bf16.gmra.mrb[0].mxu0 %v3959
        %v3998 = vpop.f32.mrb[0].mxu0
        %v3999 = vadd.f32 0.0, %v3998
        %v4000 = vpop.f32.mrb[0].mxu0
        %v4001 = vpop.f32.mrb[0].mxu0
        %v4002 = vpop.f32.mrb[0].mxu0
        %4003 = vdwg.mxu0
        %v4005 = vsel %vm1431, %v3908, 0
        %v4008 = vsel %vm1629, %v3911, 0
        %4010 = vmatprep.subr.bf16.mxu0 0
        %4011 = vmatpush1.bf16.msra.mxu0 %v4008
        %4012 = vmatprep.subr.bf16.mxu0 0
        %4013 = vmatpush1.bf16.msra.mxu0 0
        %4014 = vmatprep.subr.bf16.mxu0 0
        %4015 = vmatpush1.bf16.msra.mxu0 0
        %4016 = vmatprep.subr.bf16.mxu0 0
        %4017 = vmatpush1.bf16.msra.mxu0 0
        %4018 = vmatprep.subr.bf16.mxu0 0
        %4019 = vmatpush1.bf16.msra.mxu0 0
        %4020 = vmatprep.subr.bf16.mxu0 0
        %4021 = vmatpush1.bf16.msra.mxu0 0
        %4022 = vmatprep.subr.bf16.mxu0 0
        %4023 = vmatpush1.bf16.msra.mxu0 0
        %4024 = vmatprep.subr.bf16.mxu0 0
        %4025 = vmatpush1.bf16.msra.mxu0 0
        %4026 = vmatprep.subr.bf16.mxu0 0
        %4027 = vmatpush1.bf16.msra.mxu0 0
        %4028 = vmatprep.subr.bf16.mxu0 0
        %4029 = vmatpush1.bf16.msra.mxu0 0
        %4030 = vmatprep.subr.bf16.mxu0 0
        %4031 = vmatpush1.bf16.msra.mxu0 0
        %4032 = vmatprep.subr.bf16.mxu0 0
        %4033 = vmatpush1.bf16.msra.mxu0 0
        %4034 = vmatprep.subr.bf16.mxu0 0
        %4035 = vmatpush1.bf16.msra.mxu0 0
        %4036 = vmatprep.subr.bf16.mxu0 0
        %4037 = vmatpush1.bf16.msra.mxu0 0
        %4038 = vmatprep.subr.bf16.mxu0 0
        %4039 = vmatpush1.bf16.msra.mxu0 0
        %4040 = vmatprep.subr.bf16.mxu0 0
        %4041 = vmatpush1.bf16.msra.mxu0 0
        %4042 = vmatprep.mubr.bf16.mxu0 0
        %4043 = vmatmul.mubr.bf16.gmra.mrb[0].mxu0 %v4005
        %v4044 = vpop.f32.mrb[0].mxu0
        %v4045 = vadd.f32 0.0, %v4044
        %v4046 = vpop.f32.mrb[0].mxu0
        %v4047 = vpop.f32.mrb[0].mxu0
        %v4048 = vpop.f32.mrb[0].mxu0
        %4049 = vdwg.mxu0
        %v4050 = vpack.c.bf16 %v3999, %v3953
        %v4051 = vpack.c.bf16 %v4045, %v4045
        %s4052 = scalar_lea.vmem %s879, 12
        %v4053 = vld [vmem:[%s4052] sm:$0xf]
        %v4055 = vsel %vm1431, %v4050, 0
        %v4058 = vsel %vm1431, %v4051, 0
        %v4061 = vsel %vm1629, %v4053, 0
        %4063 = vmatprep.subr.bf16.mxu0 0
        %4064 = vmatpush1.bf16.msra.mxu0 %v4061
        %4065 = vmatprep.subr.bf16.mxu0 0
        %4066 = vmatpush1.bf16.msra.mxu0 0
        %4067 = vmatprep.subr.bf16.mxu0 0
        %4068 = vmatpush1.bf16.msra.mxu0 0
        %4069 = vmatprep.subr.bf16.mxu0 0
        %4070 = vmatpush1.bf16.msra.mxu0 0
        %4071 = vmatprep.subr.bf16.mxu0 0
        %4072 = vmatpush1.bf16.msra.mxu0 0
        %4073 = vmatprep.subr.bf16.mxu0 0
        %4074 = vmatpush1.bf16.msra.mxu0 0
        %4075 = vmatprep.subr.bf16.mxu0 0
        %4076 = vmatpush1.bf16.msra.mxu0 0
        %4077 = vmatprep.subr.bf16.mxu0 0
        %4078 = vmatpush1.bf16.msra.mxu0 0
        %4079 = vmatprep.subr.bf16.mxu0 0
        %4080 = vmatpush1.bf16.msra.mxu0 0
        %4081 = vmatprep.subr.bf16.mxu0 0
        %4082 = vmatpush1.bf16.msra.mxu0 0
        %4083 = vmatprep.subr.bf16.mxu0 0
        %4084 = vmatpush1.bf16.msra.mxu0 0
        %4085 = vmatprep.subr.bf16.mxu0 0
        %4086 = vmatpush1.bf16.msra.mxu0 0
        %4087 = vmatprep.subr.bf16.mxu0 0
        %4088 = vmatpush1.bf16.msra.mxu0 0
        %4089 = vmatprep.subr.bf16.mxu0 0
        %4090 = vmatpush1.bf16.msra.mxu0 0
        %4091 = vmatprep.subr.bf16.mxu0 0
        %4092 = vmatpush1.bf16.msra.mxu0 0
        %4093 = vmatprep.subr.bf16.mxu0 0
        %4094 = vmatpush1.bf16.msra.mxu0 0
        %4095 = vmatprep.mubr.bf16.mxu0 0
        %4096 = vmatmul.mubr.bf16.gmra.mrb[0].mxu0 %v4055
        %v4097 = vpop.f32.mrb[0].mxu0
        %v4098 = vadd.f32 0.0, %v4097
        %v4099 = vpop.f32.mrb[0].mxu0
        %v4100 = vpop.f32.mrb[0].mxu0
        %v4101 = vadd.f32 0.0, %v4100
        %v4102 = vpop.f32.mrb[0].mxu0
        %4103 = vmatprep.mubr.bf16.mxu0 0
        %4104 = vmatmul.mubr.bf16.gmra.mrb[0].mxu0 %v4058
        %v4105 = vpop.f32.mrb[0].mxu0
        %v4106 = vadd.f32 0.0, %v4105
        %v4107 = vpop.f32.mrb[0].mxu0
        %v4108 = vpop.f32.mrb[0].mxu0
        %v4109 = vpop.f32.mrb[0].mxu0
        %4110 = vdwg.mxu0
        %v4111 = vadd.f32 %v3347, %v4098
        %v4112 = vadd.f32 %v3348, %v4101
        %v4113 = vadd.f32 %v3349, %v4106
        %v4114 = vld [vmem:[%s882] sm:$0x1]
        %v4116 = vlaneseq
        %v4117 = vshrl.u32 %v4116, 7
        %v4118 = vsub.s32 0, %v4117
        %v4119 = vrot.slane %v4114, %v4118
        %v4121 = vadd.f32 %v4111, %v4119
        %v4122 = vadd.f32 %v4112, %v4119
        %v4123 = vadd.f32 %v4113, %v4119
        %v4124 = vld [vmem:[%s885] sm:$0x1]
        %v4125 = vld [vmem:[%s888] sm:$0x1]
        %4126 = vadd.xlane.f32.xlu0 %v4121
        %v4127 = vpop.xlane.xlu0 %4126
        %4128 = vadd.xlane.f32.xlu0 %v4122
        %v4129 = vpop.xlane.xlu0 %4128
        %4130 = vadd.xlane.f32.xlu0 %v4123
        %v4131 = vpop.xlane.xlu0 %4130
        %v4132 = vmul.f32 %v4127, 0.03125
        %v4133 = vmul.f32 %v4129, 0.03125
        %v4134 = vmul.f32 %v4131, 0.03125
        %v4135 = vmul.f32 %v4121, %v4121
        %v4136 = vmul.f32 %v4122, %v4122
        %v4137 = vmul.f32 %v4123, %v4123
        %4138 = vadd.xlane.f32.xlu0 %v4135
        %v4139 = vpop.xlane.xlu0 %4138
        %4140 = vadd.xlane.f32.xlu0 %v4136
        %v4141 = vpop.xlane.xlu0 %4140
        %4142 = vadd.xlane.f32.xlu0 %v4137
        %v4143 = vpop.xlane.xlu0 %4142
        %v4144 = vmul.f32 %v4139, 0.03125
        %v4145 = vmul.f32 %v4141, 0.03125
        %v4146 = vmul.f32 %v4143, 0.03125
        %v4147 = vmul.f32 %v4132, %v4132
        %v4148 = vmul.f32 %v4133, %v4133
        %v4149 = vmul.f32 %v4134, %v4134
        %v4150 = vsub.f32 %v4144, %v4147
        %v4151 = vsub.f32 %v4145, %v4148
        %v4152 = vsub.f32 %v4146, %v4149
        %v4153 = vsub.f32 %v4121, %v4132
        %v4154 = vsub.f32 %v4122, %v4133
        %v4155 = vsub.f32 %v4123, %v4134
        %v4156 = vadd.f32 %v4150, 1e-05
        %v4157 = vadd.f32 %v4151, 1e-05
        %v4158 = vadd.f32 %v4152, 1e-05
        %v4159 = vrsqrt.pop %v4156
        %v4160 = vrsqrt.pop %v4157
        %v4161 = vrsqrt.pop %v4158
        %v4162 = vmul.f32 %v4153, %v4159
        %v4163 = vmul.f32 %v4154, %v4160
        %v4164 = vmul.f32 %v4155, %v4161
        %v4166 = vlaneseq
        %v4167 = vshrl.u32 %v4166, 7
        %v4168 = vsub.s32 0, %v4167
        %v4169 = vrot.slane %v4124, %v4168
        %v4171 = vmul.f32 %v4162, %v4169
        %v4172 = vmul.f32 %v4163, %v4169
        %v4173 = vmul.f32 %v4164, %v4169
        %v4175 = vlaneseq
        %v4176 = vshrl.u32 %v4175, 7
        %v4177 = vsub.s32 0, %v4176
        %v4178 = vrot.slane %v4125, %v4177
        %v4180 = vadd.f32 %v4171, %v4178
        %v4181 = vadd.f32 %v4172, %v4178
        %v4182 = vadd.f32 %v4173, %v4178
        %v4183 = vpack.c.bf16 %v4181, %v4180
        %v4184 = vpack.c.bf16 %v4182, %v4182
        %v4185 = vld [vmem:[%s893] sm:$0xf]
        %v4186 = vld [vmem:[%s893 + $0x4] sm:$0xf]
        %v4187 = vld [vmem:[%s893 + $0x8] sm:$0xf]
        %v4188 = vld [vmem:[%s893 + $0xc] sm:$0xf]
        %v4189 = vld [vmem:[%s893 + $0x10] sm:$0xf]
        %v4190 = vld [vmem:[%s893 + $0x14] sm:$0xf]
        %v4191 = vld [vmem:[%s893 + $0x18] sm:$0xf]
        %v4192 = vld [vmem:[%s893 + $0x1c] sm:$0xf]
        %v4193 = vld [vmem:[%s893 + $0x20] sm:$0xf]
        %v4194 = vld [vmem:[%s893 + $0x24] sm:$0xf]
        %v4195 = vld [vmem:[%s893 + $0x28] sm:$0xf]
        %v4196 = vld [vmem:[%s893 + $0x2c] sm:$0xf]
        %v4197 = vld [vmem:[%s893 + $0x30] sm:$0xf]
        %v4198 = vld [vmem:[%s893 + $0x34] sm:$0xf]
        %v4199 = vld [vmem:[%s893 + $0x38] sm:$0xf]
        %v4200 = vld [vmem:[%s893 + $0x3c] sm:$0xf]
        %v4201 = vld [vmem:[%s896] sm:$0x1]
        %v4203 = vlaneseq
        %v4204 = vshrl.u32 %v4203, 7
        %v4205 = vsub.s32 0, %v4204
        %v4206 = vrot.slane %v4201, %v4205
        %v4224 = vunpack.c.l.b16 %v4185
        %v4225 = vunpack.c.l.b16 %v4186
        %v4226 = vunpack.c.l.b16 %v4187
        %v4227 = vunpack.c.l.b16 %v4188
        %v4228 = vunpack.c.l.b16 %v4189
        %v4229 = vunpack.c.l.b16 %v4190
        %v4230 = vunpack.c.l.b16 %v4191
        %v4231 = vunpack.c.l.b16 %v4192
        %v4232 = vunpack.c.l.b16 %v4193
        %v4233 = vunpack.c.l.b16 %v4194
        %v4234 = vunpack.c.l.b16 %v4195
        %v4235 = vunpack.c.l.b16 %v4196
        %v4236 = vunpack.c.l.b16 %v4197
        %v4237 = vunpack.c.l.b16 %v4198
        %v4238 = vunpack.c.l.b16 %v4199
        %v4239 = vunpack.c.l.b16 %v4200
        %v4240 = vpack.c.b16 %v4225, %v4224
        %v4241 = vpack.c.b16 %v4227, %v4226
        %v4242 = vpack.c.b16 %v4229, %v4228
        %v4243 = vpack.c.b16 %v4231, %v4230
        %v4244 = vpack.c.b16 %v4233, %v4232
        %v4245 = vpack.c.b16 %v4235, %v4234
        %v4246 = vpack.c.b16 %v4237, %v4236
        %v4247 = vpack.c.b16 %v4239, %v4238
        %4256 = vmatprep.subr.bf16.mxu0 0
        %4257 = vmatpush1.bf16.msra.mxu0 %v4240
        %4258 = vmatprep.subr.bf16.mxu0 0
        %4259 = vmatpush1.bf16.msra.mxu0 %v4241
        %4260 = vmatprep.subr.bf16.mxu0 0
        %4261 = vmatpush1.bf16.msra.mxu0 %v4242
        %4262 = vmatprep.subr.bf16.mxu0 0
        %4263 = vmatpush1.bf16.msra.mxu0 %v4243
        %4264 = vmatprep.subr.bf16.mxu0 0
        %4265 = vmatpush1.bf16.msra.mxu0 %v4244
        %4266 = vmatprep.subr.bf16.mxu0 0
        %4267 = vmatpush1.bf16.msra.mxu0 %v4245
        %4268 = vmatprep.subr.bf16.mxu0 0
        %4269 = vmatpush1.bf16.msra.mxu0 %v4246
        %4270 = vmatprep.subr.bf16.mxu0 0
        %4271 = vmatpush1.bf16.msra.mxu0 %v4247
        %4272 = vmatprep.subr.bf16.mxu0 0
        %4273 = vmatpush1.bf16.msra.mxu0 0
        %4274 = vmatprep.subr.bf16.mxu0 0
        %4275 = vmatpush1.bf16.msra.mxu0 0
        %4276 = vmatprep.subr.bf16.mxu0 0
        %4277 = vmatpush1.bf16.msra.mxu0 0
        %4278 = vmatprep.subr.bf16.mxu0 0
        %4279 = vmatpush1.bf16.msra.mxu0 0
        %4280 = vmatprep.subr.bf16.mxu0 0
        %4281 = vmatpush1.bf16.msra.mxu0 0
        %4282 = vmatprep.subr.bf16.mxu0 0
        %4283 = vmatpush1.bf16.msra.mxu0 0
        %4284 = vmatprep.subr.bf16.mxu0 0
        %4285 = vmatpush1.bf16.msra.mxu0 0
        %4286 = vmatprep.subr.bf16.mxu0 0
        %4287 = vmatpush1.bf16.msra.mxu0 0
        %4288 = vmatprep.mubr.bf16.mxu0 0
        %4289 = vmatmul.mubr.bf16.gmra.mrb[0].mxu0 %v4183
        %v4290 = vpop.f32.mrb[0].mxu0
        %v4291 = vadd.f32 %v4206, %v4290
        %v4292 = vpop.f32.mrb[0].mxu0
        %v4293 = vpop.f32.mrb[0].mxu0
        %v4294 = vadd.f32 %v4206, %v4293
        %v4295 = vpop.f32.mrb[0].mxu0
        %4296 = vmatprep.mubr.bf16.mxu0 0
        %4297 = vmatmul.mubr.bf16.gmra.mrb[0].mxu0 %v4184
        %v4298 = vpop.f32.mrb[0].mxu0
        %v4299 = vadd.f32 %v4206, %v4298
        %v4300 = vpop.f32.mrb[0].mxu0
        %v4301 = vpop.f32.mrb[0].mxu0
        %v4302 = vpop.f32.mrb[0].mxu0
        %4303 = vdwg.mxu0
        %v4304 = vmul.f32 %v4291, 0.5
        %v4305 = vmul.f32 %v4294, 0.5
        %v4306 = vmul.f32 %v4299, 0.5
        %v4307 = vmul.f32 %v4291, 0.044715
        %v4308 = vmul.f32 %v4294, 0.044715
        %v4309 = vmul.f32 %v4299, 0.044715
        %v4310 = vmul.f32 %v4307, %v4291
        %v4311 = vmul.f32 %v4308, %v4294
        %v4312 = vmul.f32 %v4309, %v4299
        %v4313 = vmul.f32 %v4310, %v4291
        %v4314 = vmul.f32 %v4311, %v4294
        %v4315 = vmul.f32 %v4312, %v4299
        %v4316 = vadd.f32 %v4291, %v4313
        %v4317 = vadd.f32 %v4294, %v4314
        %v4318 = vadd.f32 %v4299, %v4315
        %v4319 = vmul.f32 %v4316, 0.7978846
        %v4320 = vmul.f32 %v4317, 0.7978846
        %v4321 = vmul.f32 %v4318, 0.7978846
        %v4322 = vtanh.pop %v4319
        %v4323 = vtanh.pop %v4320
        %v4324 = vtanh.pop %v4321
        %v4325 = vadd.f32 %v4322, 1.0
        %v4326 = vadd.f32 %v4323, 1.0
        %v4327 = vadd.f32 %v4324, 1.0
        %v4328 = vmul.f32 %v4304, %v4325
        %v4329 = vmul.f32 %v4305, %v4326
        %v4330 = vmul.f32 %v4306, %v4327
        %v4331 = vpack.c.bf16 %v4329, %v4328
        %v4332 = vpack.c.bf16 %v4330, %v4330
        %v4333 = vld [vmem:[%s901] sm:$0xf]
        %v4334 = vld [vmem:[%s901 + $0x4] sm:$0xf]
        %v4335 = vld [vmem:[%s901 + $0x8] sm:$0xf]
        %v4336 = vld [vmem:[%s901 + $0xc] sm:$0xf]
        %v4337 = vld [vmem:[%s901 + $0x10] sm:$0xf]
        %v4338 = vld [vmem:[%s901 + $0x14] sm:$0xf]
        %v4339 = vld [vmem:[%s901 + $0x18] sm:$0xf]
        %v4340 = vld [vmem:[%s901 + $0x1c] sm:$0xf]
        %v4341 = vld [vmem:[%s901 + $0x20] sm:$0xf]
        %v4342 = vld [vmem:[%s901 + $0x24] sm:$0xf]
        %v4343 = vld [vmem:[%s901 + $0x28] sm:$0xf]
        %v4344 = vld [vmem:[%s901 + $0x2c] sm:$0xf]
        %v4345 = vld [vmem:[%s901 + $0x30] sm:$0xf]
        %v4346 = vld [vmem:[%s901 + $0x34] sm:$0xf]
        %v4347 = vld [vmem:[%s901 + $0x38] sm:$0xf]
        %v4348 = vld [vmem:[%s901 + $0x3c] sm:$0xf]
        %v4349 = vld [vmem:[%s904] sm:$0x1]
        %v4351 = vlaneseq
        %v4352 = vshrl.u32 %v4351, 7
        %v4353 = vsub.s32 0, %v4352
        %v4354 = vrot.slane %v4349, %v4353
        %v4372 = vunpack.c.l.b16 %v4333
        %v4373 = vunpack.c.l.b16 %v4334
        %v4374 = vunpack.c.l.b16 %v4335
        %v4375 = vunpack.c.l.b16 %v4336
        %v4376 = vunpack.c.l.b16 %v4337
        %v4377 = vunpack.c.l.b16 %v4338
        %v4378 = vunpack.c.l.b16 %v4339
        %v4379 = vunpack.c.l.b16 %v4340
        %v4380 = vunpack.c.l.b16 %v4341
        %v4381 = vunpack.c.l.b16 %v4342
        %v4382 = vunpack.c.l.b16 %v4343
        %v4383 = vunpack.c.l.b16 %v4344
        %v4384 = vunpack.c.l.b16 %v4345
        %v4385 = vunpack.c.l.b16 %v4346
        %v4386 = vunpack.c.l.b16 %v4347
        %v4387 = vunpack.c.l.b16 %v4348
        %v4388 = vpack.c.b16 %v4373, %v4372
        %v4389 = vpack.c.b16 %v4375, %v4374
        %v4390 = vpack.c.b16 %v4377, %v4376
        %v4391 = vpack.c.b16 %v4379, %v4378
        %v4392 = vpack.c.b16 %v4381, %v4380
        %v4393 = vpack.c.b16 %v4383, %v4382
        %v4394 = vpack.c.b16 %v4385, %v4384
        %v4395 = vpack.c.b16 %v4387, %v4386
        %4404 = vmatprep.subr.bf16.mxu0 0
        %4405 = vmatpush1.bf16.msra.mxu0 %v4388
        %4406 = vmatprep.subr.bf16.mxu0 0
        %4407 = vmatpush1.bf16.msra.mxu0 %v4389
        %4408 = vmatprep.subr.bf16.mxu0 0
        %4409 = vmatpush1.bf16.msra.mxu0 %v4390
        %4410 = vmatprep.subr.bf16.mxu0 0
        %4411 = vmatpush1.bf16.msra.mxu0 %v4391
        %4412 = vmatprep.subr.bf16.mxu0 0
        %4413 = vmatpush1.bf16.msra.mxu0 %v4392
        %4414 = vmatprep.subr.bf16.mxu0 0
        %4415 = vmatpush1.bf16.msra.mxu0 %v4393
        %4416 = vmatprep.subr.bf16.mxu0 0
        %4417 = vmatpush1.bf16.msra.mxu0 %v4394
        %4418 = vmatprep.subr.bf16.mxu0 0
        %4419 = vmatpush1.bf16.msra.mxu0 %v4395
        %4420 = vmatprep.subr.bf16.mxu0 0
        %4421 = vmatpush1.bf16.msra.mxu0 0
        %4422 = vmatprep.subr.bf16.mxu0 0
        %4423 = vmatpush1.bf16.msra.mxu0 0
        %4424 = vmatprep.subr.bf16.mxu0 0
        %4425 = vmatpush1.bf16.msra.mxu0 0
        %4426 = vmatprep.subr.bf16.mxu0 0
        %4427 = vmatpush1.bf16.msra.mxu0 0
        %4428 = vmatprep.subr.bf16.mxu0 0
        %4429 = vmatpush1.bf16.msra.mxu0 0
        %4430 = vmatprep.subr.bf16.mxu0 0
        %4431 = vmatpush1.bf16.msra.mxu0 0
        %4432 = vmatprep.subr.bf16.mxu0 0
        %4433 = vmatpush1.bf16.msra.mxu0 0
        %4434 = vmatprep.subr.bf16.mxu0 0
        %4435 = vmatpush1.bf16.msra.mxu0 0
        %4436 = vmatprep.mubr.bf16.mxu0 0
        %4437 = vmatmul.mubr.bf16.gmra.mrb[0].mxu0 %v4331
        %v4438 = vpop.f32.mrb[0].mxu0
        %v4439 = vadd.f32 %v4354, %v4438
        %v4440 = vpop.f32.mrb[0].mxu0
        %v4441 = vpop.f32.mrb[0].mxu0
        %v4442 = vadd.f32 %v4354, %v4441
        %v4443 = vpop.f32.mrb[0].mxu0
        %4444 = vmatprep.mubr.bf16.mxu0 0
        %4445 = vmatmul.mubr.bf16.gmra.mrb[0].mxu0 %v4332
        %v4446 = vpop.f32.mrb[0].mxu0
        %v4447 = vadd.f32 %v4354, %v4446
        %v4448 = vpop.f32.mrb[0].mxu0
        %v4449 = vpop.f32.mrb[0].mxu0
        %v4450 = vpop.f32.mrb[0].mxu0
        %4451 = vdwg.mxu0
        %v4452 = vadd.f32 %v4180, %v4439
        %v4453 = vadd.f32 %v4181, %v4442
        %v4454 = vadd.f32 %v4182, %v4447
        %v4455 = vld [vmem:[%s907] sm:$0x1]
        %v4456 = vld [vmem:[%s910] sm:$0x1]
        %4457 = vadd.xlane.f32.xlu0 %v4452
        %v4458 = vpop.xlane.xlu0 %4457
        %4459 = vadd.xlane.f32.xlu0 %v4453
        %v4460 = vpop.xlane.xlu0 %4459
        %4461 = vadd.xlane.f32.xlu0 %v4454
        %v4462 = vpop.xlane.xlu0 %4461
        %v4463 = vmul.f32 %v4458, 0.03125
        %v4464 = vmul.f32 %v4460, 0.03125
        %v4465 = vmul.f32 %v4462, 0.03125
        %v4466 = vmul.f32 %v4452, %v4452
        %v4467 = vmul.f32 %v4453, %v4453
        %v4468 = vmul.f32 %v4454, %v4454
        %4469 = vadd.xlane.f32.xlu0 %v4466
        %v4470 = vpop.xlane.xlu0 %4469
        %4471 = vadd.xlane.f32.xlu0 %v4467
        %v4472 = vpop.xlane.xlu0 %4471
        %4473 = vadd.xlane.f32.xlu0 %v4468
        %v4474 = vpop.xlane.xlu0 %4473
        %v4475 = vmul.f32 %v4470, 0.03125
        %v4476 = vmul.f32 %v4472, 0.03125
        %v4477 = vmul.f32 %v4474, 0.03125
        %v4478 = vmul.f32 %v4463, %v4463
        %v4479 = vmul.f32 %v4464, %v4464
        %v4480 = vmul.f32 %v4465, %v4465
        %v4481 = vsub.f32 %v4475, %v4478
        %v4482 = vsub.f32 %v4476, %v4479
        %v4483 = vsub.f32 %v4477, %v4480
        %v4484 = vsub.f32 %v4452, %v4463
        %v4485 = vsub.f32 %v4453, %v4464
        %v4486 = vsub.f32 %v4454, %v4465
        %v4487 = vadd.f32 %v4481, 1e-05
        %v4488 = vadd.f32 %v4482, 1e-05
        %v4489 = vadd.f32 %v4483, 1e-05
        %v4490 = vrsqrt.pop %v4487
        %v4491 = vrsqrt.pop %v4488
        %v4492 = vrsqrt.pop %v4489
        %v4493 = vmul.f32 %v4484, %v4490
        %v4494 = vmul.f32 %v4485, %v4491
        %v4495 = vmul.f32 %v4486, %v4492
        %v4497 = vlaneseq
        %v4498 = vshrl.u32 %v4497, 7
        %v4499 = vsub.s32 0, %v4498
        %v4500 = vrot.slane %v4455, %v4499
        %v4502 = vmul.f32 %v4493, %v4500
        %v4503 = vmul.f32 %v4494, %v4500
        %v4504 = vmul.f32 %v4495, %v4500
        %v4506 = vlaneseq
        %v4507 = vshrl.u32 %v4506, 7
        %v4508 = vsub.s32 0, %v4507
        %v4509 = vrot.slane %v4456, %v4508
        %v4511 = vadd.f32 %v4502, %v4509
        %v4512 = vadd.f32 %v4503, %v4509
        %v4513 = vadd.f32 %v4504, %v4509
        %4514 = vst [vmem:[%s841] sm:$0xff] %v4511
        %4515 = vst [vmem:[%s841 + $0x8] sm:$0xff] %v4512
        %4516 = vst [vmem:[%s841 + $0x10] sm:$0xff] %v4513
        %s4517 = sand.u32 %s559, 1
        %s4518 = scalar_lea.sflag [#allocation4], %s4517
        %s4519 = sand.u32 %s559, 1
        %s4520 = smul.addr %s4519, 24
        %s4521 = scalar_lea.vmem [#allocation3], %s4520
        // Predicated region
        $region121: #{tpu_custom_call.1} parent=99 // pred_check
          %p4522 = pneg %p569
        $region122: #{tpu_custom_call.1} parent=99 // pred_check_branch
          %4524 = sbr.rel (%p4522) target = $region124
        $region123: #{tpu_custom_call.1} parent=99 // pred_region
          %s4525 = smul.u32 3, %s38
          %s4527 = ssub.s32 384, 384
          %4528 = vsyncadd %s4518, %s4527
          %s4529 = smul.addr %s4525, 128
          %s4530 = scalar_lea.hbm %s20, %s4529
          %s4531 = sshll.u32 %s4521, 4
          %s4532 = int_to_ptr.vmem [resolvable:$true] %s4531
          %4537 = dma.vmem_to_hbm [thread:$0]  %s4532, 384, %s4530, %s4518, 128, 128, 8
        $region124: #{tpu_custom_call.1} parent=99 // pred_fallthru
          _
      $region100: #{tpu_custom_call.1} parent=5 // pred_fallthru
        _
      %p4538 = scmp.le.s32.totalorder 2, %s29
      // Predicated region
      $region125: #{tpu_custom_call.1} parent=5 // pred_check
        %p4539 = pneg %p4538
      $region126: #{tpu_custom_call.1} parent=5 // pred_check_branch
        %4541 = sbr.rel (%p4539) target = $region128
      $region127: #{tpu_custom_call.1} parent=5 // pred_region
        %s4542 = ssub.s32 %s29, 2
        // Predicated region
        $region129: #{tpu_custom_call.1} parent=127 // pred_check
          %p4543 = pneg %p575
        $region130: #{tpu_custom_call.1} parent=127 // pred_check_branch
          %4545 = sbr.rel (%p4543) target = $region132
        $region131: #{tpu_custom_call.1} parent=127 // pred_region
          %s4546 = sand.u32 %s560, 1
          %s4547 = scalar_lea.sflag [#allocation4], %s4546
          %s4548 = sand.u32 %s560, 1
          %s4549 = smul.addr %s4548, 24
          %s4550 = scalar_lea.vmem [#allocation3], %s4549
          %4551 = dma.done %s4547, 384
        $region132: #{tpu_custom_call.1} parent=127 // pred_fallthru
          _
      $region128: #{tpu_custom_call.1} parent=5 // pred_fallthru
        _
    $region6: #{tpu_custom_call.1} parent=1 // loop_footer
      %s33 = sadd.s32 1, %s29
    $region7: #{tpu_custom_call.1} parent=1 // loop_footer_branch
      %28 = sbr.rel target = $region3
    $region8: #{tpu_custom_call.1} parent=1 // loop_exit
      _
    %4552 = vsyncpa [#allocation4], 1
    %s4553 = scalar_lea.sflag [#allocation4], 1
    %4554 = vsyncpa %s4553, 1

</llo_original>
